<compile_context>
chip_gen: v7x
topology: tpu7x:2x2x1
jax: 0.10.0
libtpu: 0.0.40
codegen_flags: <defaults>
</compile_context>

<pallas_src>
import math

import jax
import jax.numpy as jnp
from jax.experimental import pallas as pl
from jax.experimental.pallas import tpu as pltpu

# ----------------------------------------------------------------------------
# Small, deterministic synthetic configuration (channel sizes scaled down from
# the usual PN2DenseParams defaults, structure identical).
# ----------------------------------------------------------------------------
B = 2          # batch elements
N0 = 16        # points per batch element
HIST = 8       # history_embed_dim
IN_CH = 0      # in_channels (data.x is None)
OUT_CH = 3     # out_channels

SA1 = dict(ratio=0.5, r=0.6, K=8, dims=(3 + IN_CH, 16, 16, 32))      # sa1_outdim = 32
SA2 = dict(ratio=0.5, r=1.2, K=8, dims=(3 + 32, 32, 32, 64))         # sa2_outdim = 64
GSA = dict(dims=(3 + 64, 64, 128))                                   # gsa_outdim = 128
FP3 = dict(k=1, dims=(128 + 64, 64))
FP2 = dict(k=3, dims=(64 + 32, 32))
FP1 = dict(k=3, dims=(32 + IN_CH, 32, 32))                           # fp1_outdim = 32
LIN_DIMS = (32, 32, 32, OUT_CH)                                      # lin1, lin2, lin3

LANE = 128          # lane width for the lane-dense head store
ROW_ALIGN = 16      # bf16 vregs pack 16 sublanes
SMALL_CIN = 4       # Cin <= this -> VPU FMA chain instead of an MXU matmul
NEG_BIG = -1e30

# TODO(synk): the reference MLP uses BatchNorm; at default init in eval mode
# (running stats 0/1, identity affine) it is the identity and is folded out.


# ----------------------------------------------------------------------------
# Kernel helpers
# ----------------------------------------------------------------------------
def _round_up(x, m):
    return ((x + m - 1) // m) * m


def _act(h, act):
    if act == "relu":
        return jnp.maximum(h, 0.0)
    if act == "leaky_relu":
        return jnp.where(h >= 0.0, h, jnp.float32(0.01) * h)
    if act == "none":
        return h
    raise ValueError(act)


def _matmul(h, w_ref):
    """h @ W for a 2-D f32 activation block.

    Small-Cin weights (e.g. SA1's (3,16) first layer) use a VPU FMA chain to
    avoid a mostly-padding MXU contraction; all other weights are pre-cast to
    bf16 in prepare_params(), so only the activations are cast per layer and
    accumulation stays f32.
    """
    w = w_ref[...]
    cin = int(w.shape[0])
    if cin <= SMALL_CIN:
        wf = w.astype(jnp.float32)
        acc = None
        for c in range(cin):
            t = h[:, c:c + 1] * wf[c:c + 1, :]
            acc = t if acc is None else acc + t
        return acc
    lhs = h.astype(w.dtype) if w.dtype != h.dtype else h
    return jax.lax.dot_general(lhs, w, (((1,), (0,)), ((), ())),
                               preferred_element_type=jnp.float32)


# ----------------------------------------------------------------------------
# Pallas kernels
# ----------------------------------------------------------------------------
def pallas_mlp(xs, layers, acts, *, scales=None, out_pad=None):
    """Fused dense MLP over a stack of rows, single grid step.

    xs:      list of (M, Cin_i) f32 inputs.  The first layer's weight (whose
             input dim is sum_i Cin_i) is split per input in the wrapper, so
             no HBM concatenation of [interp, skip] tensors is needed.
    layers:  [(W, b), ...] with W (Cin, Cout) (bf16 or f32) and b (Cout,) f32.
    acts:    activation per layer ("relu" | "leaky_relu" | "none").
    scales:  {layer_idx: (G, C)} per-batch row scales multiplied into the
             activations ENTERING layer `layer_idx` (len(layers) -> output).
             Rows are grouped contiguously by batch: M == G * rows_per_group.
    out_pad: zero-pad last-layer columns to this lane count (lane-dense,
             unmasked store); the wrapper slices back to the natural width.
    """
    scales = dict(scales) if scales else {}
    n_layers = len(layers)
    assert len(acts) == n_layers
    assert all(1 <= k <= n_layers for k in scales)
    M = int(xs[0].shape[0])
    cins = [int(x.shape[1]) for x in xs]
    Cout = int(layers[-1][0].shape[1])

    # Lane-dense output store: zero-pad the last layer's columns.
    layers = list(layers)
    Cout_store = Cout
    if out_pad is not None and out_pad > Cout:
        Wl, bl = layers[-1]
        layers[-1] = (jnp.pad(Wl, ((0, 0), (0, out_pad - Cout))),
                      jnp.pad(bl, ((0, out_pad - Cout),)))
        if n_layers in scales:
            scales[n_layers] = jnp.pad(scales[n_layers],
                                       ((0, 0), (0, out_pad - Cout)),
                                       constant_values=1.0)
        Cout_store = out_pad

    # Row padding: per-batch-group when scales are present (keeps the in-kernel
    # per-group broadcast aligned with padded rows), plain tail padding else.
    if scales:
        G = int(next(iter(scales.values())).shape[0])
        assert all(int(s.shape[0]) == G for s in scales.values())
        assert M % G == 0
        rpg = M // G
        rpg_pad = _round_up(rpg, ROW_ALIGN // math.gcd(G, ROW_ALIGN))
        Mp = G * rpg_pad

        def pad_rows(x):
            if Mp == M:
                return x
            x3 = x.reshape(G, rpg, x.shape[-1])
            x3 = jnp.pad(x3, ((0, 0), (0, rpg_pad - rpg), (0, 0)))
            return x3.reshape(Mp, x.shape[-1])
    else:
        G, rpg, rpg_pad = 1, M, _round_up(M, ROW_ALIGN)
        Mp = rpg_pad

        def pad_rows(x):
            return x if Mp == M else jnp.pad(x, ((0, Mp - M), (0, 0)))

    # Split the first layer's weight along its input dim (one piece per input).
    W0, b0 = layers[0]
    assert int(W0.shape[0]) == sum(cins)
    if len(xs) == 1:
        w0_parts = [W0]
    else:
        w0_parts, off = [], 0
        for c in cins:
            w0_parts.append(W0[off:off + c])
            off += c

    scale_items = sorted(scales.items())
    scale_keys = [k for k, _ in scale_items]
    n_in, n_sc = len(xs), len(scale_items)

    inputs, in_specs = [], []
    for x in xs:
        xp = pad_rows(x)
        inputs.append(xp)
        in_specs.append(pl.BlockSpec(xp.shape, lambda i: (0, 0)))
    for _, s in scale_items:
        inputs.append(s)
        in_specs.append(pl.BlockSpec(s.shape, lambda i: (0, 0)))
    flat_params = list(w0_parts) + [b0.reshape(1, -1)]
    for W, b in layers[1:]:
        flat_params += [W, b.reshape(1, -1)]
    for p in flat_params:
        inputs.append(p)
        in_specs.append(pl.BlockSpec(p.shape, lambda i: (0, 0)))

    def kernel(*refs):
        x_refs = refs[:n_in]
        sc_refs = dict(zip(scale_keys, refs[n_in:n_in + n_sc]))
        prm = refs[n_in + n_sc:-1]
        out_ref = refs[-1]

        def bcast(s):  # (G, C) per-batch scale -> (Mp, C) row scale (tiny)
            s = jnp.broadcast_to(s[:, None, :], (G, rpg_pad, s.shape[-1]))
            return s.reshape(Mp, s.shape[-1])

        # Layer 0: sum of per-input matmuls (split weight, no HBM concat).
        h = None
        for xr, wr in zip(x_refs, prm[:n_in]):
            t = _matmul(xr[...], wr)
            h = t if h is None else h + t
        h = _act(h + prm[n_in][...], acts[0])

        rest = prm[n_in + 1:]
        for li in range(1, n_layers):
            if li in sc_refs:
                h = h * bcast(sc_refs[li][...])
            h = _act(_matmul(h, rest[2 * (li - 1)]) + rest[2 * (li - 1) + 1][...],
                     acts[li])
        if n_layers in sc_refs:
            h = h * bcast(sc_refs[n_layers][...])
        out_ref[...] = h

    flops = 2 * Mp * sum(int(W.shape[0]) * int(W.shape[1]) for W, _ in layers)
    w_bytes = sum(int(W.size) * W.dtype.itemsize + 4 * int(b.size)
                  for W, b in layers)
    bytes_accessed = int(4 * Mp * (sum(cins) + Cout_store) + w_bytes)

    out = pl.pallas_call(
        kernel,
        out_shape=jax.ShapeDtypeStruct((Mp, Cout_store), jnp.float32),
        # Single tile at these shapes (M <= 32); split the row axis across
        # cores (grid >= 2, "parallel") only if B*N grows past one full tile.
        grid=(1,),
        in_specs=in_specs,
        out_specs=pl.BlockSpec((Mp, Cout_store), lambda i: (0, 0)),
        compiler_params=pltpu.CompilerParams(dimension_semantics=("arbitrary",)),
        cost_estimate=pl.CostEstimate(flops=flops, transcendentals=0,
                                      bytes_accessed=bytes_accessed),
    )(*inputs)

    if Mp != M:
        if scales:
            out = out.reshape(G, rpg_pad, Cout_store)[:, :rpg].reshape(M, Cout_store)
        else:
            out = out[:M]
    if Cout_store != Cout:
        out = out[:, :Cout]
    return out


def pallas_mlp_maxpool(feats, mask, layers, acts, *, post_scale=None):
    """Shared MLP over gathered neighbors + masked max over the neighbor axis.

    feats: (M, K, Cin) gathered neighbor features; mask: (M, K) bool validity.
    post_scale: optional (M, Cout) per-row scale applied to the pooled output
                (used to fuse `global_linear(latents) * x3` into the GSA call).
    Returns (M, C_out) = max_k MLP(feats[:, k, :]) over valid k (0 if none).
    """
    M, K, Cin = (int(s) for s in feats.shape)
    Cout = int(layers[-1][0].shape[1])
    n_layers = len(layers)
    assert len(acts) == n_layers

    Mp = _round_up(max(M, 8), 8)
    Kp = _round_up(K, 8)
    R = Mp * Kp                                   # flattened matmul rows (mult of 64)

    # Wrapper-side (HBM) flatten -> the kernel's matmuls stay 2-D and only one
    # (Mp, Kp, Cout) view remains, for the pooled max.
    fpad = jnp.pad(feats, ((0, Mp - M), (0, Kp - K), (0, 0))).reshape(R, Cin)
    # Additive mask: 0 for valid neighbor slots, -1e30 for invalid / padding.
    mbias = jnp.where(mask, 0.0, jnp.float32(NEG_BIG)).astype(jnp.float32)
    mbias = jnp.pad(mbias, ((0, Mp - M), (0, Kp - K)), constant_values=NEG_BIG)

    inputs = [fpad, mbias]
    in_specs = [pl.BlockSpec((R, Cin), lambda i: (0, 0)),
                pl.BlockSpec((Mp, Kp), lambda i: (0, 0))]
    has_ps = post_scale is not None
    if has_ps:
        ps = jnp.pad(post_scale, ((0, Mp - int(post_scale.shape[0])), (0, 0)),
                     constant_values=1.0)
        inputs.append(ps)
        in_specs.append(pl.BlockSpec((Mp, Cout), lambda i: (0, 0)))
    for W, b in layers:
        b2 = b.reshape(1, -1)
        inputs += [W, b2]
        in_specs += [pl.BlockSpec(W.shape, lambda i: (0, 0)),
                     pl.BlockSpec(b2.shape, lambda i: (0, 0))]

    def kernel(*refs):
        f_ref, m_ref = refs[0], refs[1]
        idx = 3 if has_ps else 2
        ps_ref = refs[2] if has_ps else None
        prm = refs[idx:-1]
        out_ref = refs[-1]

        h = f_ref[...]                                        # (R, Cin)
        for li in range(n_layers):
            h = _act(_matmul(h, prm[2 * li]) + prm[2 * li + 1][...], acts[li])
        h = h.reshape(Mp, Kp, Cout) + m_ref[...][:, :, None]  # additive mask
        pooled = jnp.max(h, axis=1)
        any_valid = jnp.max(m_ref[...], axis=1, keepdims=True) > -0.5
        pooled = jnp.where(any_valid, pooled, 0.0)            # empty-hood guard
        if has_ps:
            pooled = pooled * ps_ref[...]                     # fused latent scale
        out_ref[...] = pooled

    flops = 2 * R * sum(int(W.shape[0]) * int(W.shape[1]) for W, _ in layers)
    w_bytes = sum(int(W.size) * W.dtype.itemsize + 4 * int(b.size)
                  for W, b in layers)
    bytes_accessed = int(4 * (R * Cin + Mp * Kp + Mp * Cout) + w_bytes)

    out = pl.pallas_call(
        kernel,
        out_shape=jax.ShapeDtypeStruct((Mp, Cout), jnp.float32),
        grid=(1,),
        in_specs=in_specs,
        out_specs=pl.BlockSpec((Mp, Cout), lambda i: (0, 0)),
        compiler_params=pltpu.CompilerParams(dimension_semantics=("arbitrary",)),
        cost_estimate=pl.CostEstimate(flops=flops, transcendentals=0,
                                      bytes_accessed=bytes_accessed),
    )(*inputs)
    return out[:M]


# ----------------------------------------------------------------------------
# Graph-construction glue (plain JAX, data-dependent indexing)
# ----------------------------------------------------------------------------
def _fps(pos, n_sel):
    """Farthest point sampling on one batch element. pos: (n, 3)."""
    # TODO(synk): PyG fps uses a random start point; we start from index 0.
    n = pos.shape[0]
    sel0 = jnp.zeros((n_sel,), jnp.int32)
    d0 = jnp.full((n,), jnp.inf, jnp.float32)

    def body(i, state):
        sel, dists = state
        last = pos[sel[i - 1]]
        d = jnp.sum((pos - last[None, :]) ** 2, axis=-1)
        dists = jnp.minimum(dists, d)
        sel = sel.at[i].set(jnp.argmax(dists).astype(jnp.int32))
        return sel, dists

    sel, _ = jax.lax.fori_loop(1, n_sel, body, (sel0, d0))
    return sel


def _radius_neighbors(pos_src, pos_q, r, K):
    """First-K-by-index sources within radius r of each query (torch_cluster
    CPU semantics). pos_src: (B, ns, 3), pos_q: (B, nq, 3)."""
    ns = pos_src.shape[1]
    d2 = jnp.sum((pos_q[:, :, None, :] - pos_src[:, None, :, :]) ** 2, axis=-1)
    within = d2 <= r * r
    order = jnp.where(within,
                      jnp.arange(ns, dtype=jnp.int32)[None, None, :],
                      jnp.int32(ns))
    idx = jnp.argsort(order, axis=-1)[:, :, :K].astype(jnp.int32)
    cnt = jnp.minimum(jnp.sum(within, axis=-1), K)
    valid = jnp.arange(K)[None, None, :] < cnt[:, :, None]
    idx = jnp.where(valid, idx, 0)
    return idx, valid


def _knn_interpolate(x_c, pos_c, pos_f, k):
    """PyG knn_interpolate with per-batch-element dense layout.
    x_c: (B, nc, C), pos_c: (B, nc, 3), pos_f: (B, nf, 3) -> (B, nf, C)."""
    def per_batch(xc, pc, pf):
        d2 = jnp.sum((pf[:, None, :] - pc[None, :, :]) ** 2, axis=-1)   # (nf, nc)
        neg_d2, idx = jax.lax.top_k(-d2, k)                              # (nf, k)
        w = 1.0 / jnp.maximum(-neg_d2, 1e-16)
        xk = xc[idx]                                                     # (nf, k, C)
        return jnp.sum(w[:, :, None] * xk, axis=1) / jnp.sum(w, axis=1, keepdims=True)
    return jax.vmap(per_batch)(x_c, pos_c, pos_f)


# ----------------------------------------------------------------------------
# Modules
# ----------------------------------------------------------------------------
def _sa_module(x, pos, cfg, layers):
    """SAModule: FPS -> radius graph -> PointConv (shared MLP + masked max)."""
    B_, n, _ = pos.shape
    n_sel = int(math.ceil(cfg["ratio"] * n))
    sel = jax.vmap(lambda p: _fps(p, n_sel))(pos)                     # (B, n_sel)
    pos_sel = jax.vmap(lambda p, i: p[i])(pos, sel)                   # (B, n_sel, 3)
    nbr_idx, nbr_valid = _radius_neighbors(pos, pos_sel, cfg["r"], cfg["K"])
    pos_j = jax.vmap(lambda p, i: p[i])(pos, nbr_idx)                 # (B, n_sel, K, 3)
    rel = pos_j - pos_sel[:, :, None, :]
    if x is None:
        feats = rel                                                   # msg = pos_j - pos_i
    else:
        x_j = jax.vmap(lambda a, i: a[i])(x, nbr_idx)                 # (B, n_sel, K, C)
        feats = jnp.concatenate([x_j, rel], axis=-1)                  # msg = [x_j, rel]
    M, K = B_ * n_sel, cfg["K"]
    acts = ("relu",) * (len(cfg["dims"]) - 1)
    out = pallas_mlp_maxpool(feats.reshape(M, K, feats.shape[-1]),
                             nbr_valid.reshape(M, K), layers, acts)
    return out.reshape(B_, n_sel, -1), pos_sel


def model_apply(params, pos, latents):
    """Forward pass of PN2DenseLatentEncodingEverywhere.

    pos: (B, N0, 3); latents: (B, HIST). data.x is None (in_channels=0).
    Returns (B*N0, OUT_CH), matching PyG's flattened per-point output.
    """
    B_, N0_, _ = pos.shape

    # --- fused latent linears: one (B,8)x(8,256) matmul, lane-dense store ----
    lat_all = pallas_mlp([latents], [params["lat_fused"]], ("none",))  # (B, 256)
    c0 = GSA["dims"][-1]
    c1 = c0 + FP3["dims"][-1]
    c2 = c1 + FP2["dims"][-1]
    glat = lat_all[:, :c0]                                             # (B, 128)
    lat3 = lat_all[:, c0:c1]                                           # (B, 64)
    lat2 = lat_all[:, c1:c2]                                           # (B, 32)
    lat1 = lat_all[:, c2:]                                             # (B, 32)

    # --- encoder --------------------------------------------------------------
    x1, pos1 = _sa_module(None, pos, SA1, params["sa1"])               # (B, 8, 32)
    x2, pos2 = _sa_module(x1, pos1, SA2, params["sa2"])                # (B, 4, 64)
    n2, n1 = pos2.shape[1], pos1.shape[1]

    # GlobalSAModule: MLP([x, pos]) + per-batch max pool; the
    # `global_linear(latents) * x3` modulation is fused in-kernel (post_scale).
    gfeat = jnp.concatenate([x2, pos2], axis=-1)                       # (B, n2, 67)
    gmask = jnp.ones(gfeat.shape[:2], bool)
    x3 = pallas_mlp_maxpool(gfeat, gmask, params["gsa"],
                            ("relu",) * (len(GSA["dims"]) - 1),
                            post_scale=glat)                            # (B, 128)
    pos3 = jnp.zeros((B_, 1, 3), jnp.float32)                          # pos.new_zeros
    x3 = x3[:, None, :]                                                # (B, 1, 128)

    # --- FP3 (FPModule: knn_interpolate -> concat skip -> MLP), lat3 fused ---
    # Skip concat is replaced by a split-weight first layer (no HBM concat).
    xi = _knn_interpolate(x3, pos3, pos2, FP3["k"])                    # (B, n2, 128)
    x_fp3 = pallas_mlp([xi.reshape(B_ * n2, -1), x2.reshape(B_ * n2, -1)],
                       params["fp3"], ("relu",) * (len(FP3["dims"]) - 1),
                       scales={len(params["fp3"]): lat3})
    x_fp3 = x_fp3.reshape(B_, n2, -1)                                  # (B, n2, 64)

    # --- FP2, lat2 fused ------------------------------------------------------
    xi = _knn_interpolate(x_fp3, pos2, pos1, FP2["k"])                 # (B, n1, 64)
    x_fp2 = pallas_mlp([xi.reshape(B_ * n1, -1), x1.reshape(B_ * n1, -1)],
                       params["fp2"], ("relu",) * (len(FP2["dims"]) - 1),
                       scales={len(params["fp2"]): lat2})
    x_fp2 = x_fp2.reshape(B_, n1, -1)                                  # (B, n1, 32)

    # --- FP1 + head fused into ONE kernel -------------------------------------
    # FP1 (x_skip = data.x = None -> no concat), then lat1 * (.), then
    # leaky(lin1), leaky(lin2), lin3.  lin3 is zero-padded to 128 output lanes
    # for an unmasked lane-dense store; wrapper slices back to OUT_CH.
    xi = _knn_interpolate(x_fp2, pos1, pos, FP1["k"])                  # (B, N0, 32)
    head_layers = list(params["fp1"]) + [params["lin1"], params["lin2"],
                                         params["lin3"]]
    head_acts = ("relu",) * (len(FP1["dims"]) - 1) + ("leaky_relu",
                                                      "leaky_relu", "none")
    out = pallas_mlp([xi.reshape(B_ * N0_, -1)], head_layers, head_acts,
                     scales={len(params["fp1"]): lat1}, out_pad=LANE)
    # out_act == 'none'
    return out                                                         # (B*N0, 3)


# ----------------------------------------------------------------------------
# Deterministic parameter initialization + one-time wrapper-side prep
# ----------------------------------------------------------------------------
def _linear_init(key, cin, cout):
    kw, kb = jax.random.split(key)
    bound = 1.0 / math.sqrt(cin)
    W = jax.random.uniform(kw, (cin, cout), jnp.float32, -bound, bound)
    b = jax.random.uniform(kb, (cout,), jnp.float32, -bound, bound)
    return W, b


def _mlp_init(key, dims):
    keys = jax.random.split(key, len(dims) - 1)
    return [_linear_init(k, dims[i], dims[i + 1]) for i, k in enumerate(keys)]


def init_params(key):
    ks = jax.random.split(key, 13)
    return {
        "sa1": _mlp_init(ks[0], SA1["dims"]),
        "sa2": _mlp_init(ks[1], SA2["dims"]),
        "gsa": _mlp_init(ks[2], GSA["dims"]),
        "fp3": _mlp_init(ks[3], FP3["dims"]),
        "fp2": _mlp_init(ks[4], FP2["dims"]),
        "fp1": _mlp_init(ks[5], FP1["dims"]),
        "global_linear": _linear_init(ks[6], HIST, GSA["dims"][-1]),
        "fp3_lin": _linear_init(ks[7], HIST, FP3["dims"][-1]),
        "fp2_lin": _linear_init(ks[8], HIST, FP2["dims"][-1]),
        "fp1_lin": _linear_init(ks[9], HIST, FP1["dims"][-1]),
        "lin1": _linear_init(ks[10], LIN_DIMS[0], LIN_DIMS[1]),
        "lin2": _linear_init(ks[11], LIN_DIMS[1], LIN_DIMS[2]),
        "lin3": _linear_init(ks[12], LIN_DIMS[2], LIN_DIMS[3]),
    }


def prepare_params(params):
    """One-time prep: pre-cast MXU weights to bf16 (biases / accumulation stay
    f32) and fuse the four latent Linears into one (HIST, 256) weight."""
    def cast(layer):
        W, b = layer
        if W.shape[0] > SMALL_CIN:       # small-Cin layers stay f32 (VPU path)
            W = W.astype(jnp.bfloat16)
        return (W, b)

    out = {name: [cast(l) for l in params[name]]
           for name in ("sa1", "sa2", "gsa", "fp3", "fp2", "fp1")}
    for name in ("lin1", "lin2", "lin3"):
        out[name] = cast(params[name])
    W_lat = jnp.concatenate([params["global_linear"][0], params["fp3_lin"][0],
                             params["fp2_lin"][0], params["fp1_lin"][0]], axis=1)
    b_lat = jnp.concatenate([params["global_linear"][1], params["fp3_lin"][1],
                             params["fp2_lin"][1], params["fp1_lin"][1]], axis=0)
    out["lat_fused"] = (W_lat.astype(jnp.bfloat16), b_lat)
    return out


# ----------------------------------------------------------------------------
if __name__ == "__main__":
    key = jax.random.PRNGKey(0)
    k_pos, k_lat, k_par = jax.random.split(key, 3)

    pos = jax.random.uniform(k_pos, (B, N0, 3), jnp.float32)      # data.pos (dense)
    latents = jax.random.normal(k_lat, (B, HIST), jnp.float32)    # per-batch latents
    params = prepare_params(init_params(k_par))

    fwd = jax.jit(model_apply)
    out = jax.block_until_ready(fwd(params, pos, latents))

    assert out.shape == (B * N0, OUT_CH), out.shape
    assert bool(jnp.all(jnp.isfinite(out)))
    print("KERNEL_OK")
</pallas_src>

<mosaic_0001>
module attributes {stable_mosaic.version = 11 : i64} {
  func.func @kernel(%arg0: i32, %arg1: memref<128x3xf32, #tpu.memory_space<vmem>>, %arg2: memref<16x8xf32, #tpu.memory_space<vmem>>, %arg3: memref<3x16xf32, #tpu.memory_space<vmem>>, %arg4: memref<1x16xf32, #tpu.memory_space<vmem>>, %arg5: memref<16x16xbf16, #tpu.memory_space<vmem>>, %arg6: memref<1x16xf32, #tpu.memory_space<vmem>>, %arg7: memref<16x32xbf16, #tpu.memory_space<vmem>>, %arg8: memref<1x32xf32, #tpu.memory_space<vmem>>, %arg9: memref<16x32xf32, #tpu.memory_space<vmem>>) attributes {dimension_semantics = [#tpu.dimension_semantics<arbitrary>], iteration_bounds = array<i64: 1>, scalar_prefetch = 0 : i64, scratch_operands = 0 : i64, tpu.core_type = #tpu.core_type<tc>, window_params = [{pipeline_mode = #tpu.pipeline_mode<synchronous>, transform_indices = @transform_0, window_bounds = array<i64: 128, 3>}, {pipeline_mode = #tpu.pipeline_mode<synchronous>, transform_indices = @transform_1, window_bounds = array<i64: 16, 8>}, {pipeline_mode = #tpu.pipeline_mode<synchronous>, transform_indices = @transform_2, window_bounds = array<i64: 3, 16>}, {pipeline_mode = #tpu.pipeline_mode<synchronous>, transform_indices = @transform_3, window_bounds = array<i64: 1, 16>}, {pipeline_mode = #tpu.pipeline_mode<synchronous>, transform_indices = @transform_4, window_bounds = array<i64: 16, 16>}, {pipeline_mode = #tpu.pipeline_mode<synchronous>, transform_indices = @transform_5, window_bounds = array<i64: 1, 16>}, {pipeline_mode = #tpu.pipeline_mode<synchronous>, transform_indices = @transform_6, window_bounds = array<i64: 16, 32>}, {pipeline_mode = #tpu.pipeline_mode<synchronous>, transform_indices = @transform_7, window_bounds = array<i64: 1, 32>}, {pipeline_mode = #tpu.pipeline_mode<synchronous>, transform_indices = @transform_8, window_bounds = array<i64: 16, 32>}]} {
    %c0 = arith.constant 0 : index
    %c0_0 = arith.constant 0 : index
    %0 = vector.load %arg1[%c0, %c0_0] : memref<128x3xf32, #tpu.memory_space<vmem>>, vector<128x3xf32>
    %c0_1 = arith.constant 0 : index
    %c0_2 = arith.constant 0 : index
    %1 = vector.load %arg3[%c0_1, %c0_2] : memref<3x16xf32, #tpu.memory_space<vmem>>, vector<3x16xf32>
    %2 = vector.extract_strided_slice %0 {offsets = [0, 0], sizes = [128, 1], strides = [1, 1]} : vector<128x3xf32> to vector<128x1xf32>
    %3 = vector.extract_strided_slice %1 {offsets = [0, 0], sizes = [1, 16], strides = [1, 1]} : vector<3x16xf32> to vector<1x16xf32>
    %4 = vector.broadcast %2 : vector<128x1xf32> to vector<128x16xf32>
    %5 = vector.broadcast %3 : vector<1x16xf32> to vector<128x16xf32>
    %6 = arith.mulf %4, %5 : vector<128x16xf32>
    %7 = vector.extract_strided_slice %0 {offsets = [0, 1], sizes = [128, 1], strides = [1, 1]} : vector<128x3xf32> to vector<128x1xf32>
    %8 = vector.extract_strided_slice %1 {offsets = [1, 0], sizes = [1, 16], strides = [1, 1]} : vector<3x16xf32> to vector<1x16xf32>
    %9 = vector.broadcast %7 : vector<128x1xf32> to vector<128x16xf32>
    %10 = vector.broadcast %8 : vector<1x16xf32> to vector<128x16xf32>
    %11 = arith.mulf %9, %10 : vector<128x16xf32>
    %12 = arith.addf %6, %11 : vector<128x16xf32>
    %13 = vector.extract_strided_slice %0 {offsets = [0, 2], sizes = [128, 1], strides = [1, 1]} : vector<128x3xf32> to vector<128x1xf32>
    %14 = vector.extract_strided_slice %1 {offsets = [2, 0], sizes = [1, 16], strides = [1, 1]} : vector<3x16xf32> to vector<1x16xf32>
    %15 = vector.broadcast %13 : vector<128x1xf32> to vector<128x16xf32>
    %16 = vector.broadcast %14 : vector<1x16xf32> to vector<128x16xf32>
    %17 = arith.mulf %15, %16 : vector<128x16xf32>
    %18 = arith.addf %12, %17 : vector<128x16xf32>
    %c0_3 = arith.constant 0 : index
    %c0_4 = arith.constant 0 : index
    %19 = vector.load %arg4[%c0_3, %c0_4] : memref<1x16xf32, #tpu.memory_space<vmem>>, vector<1x16xf32>
    %20 = vector.broadcast %19 : vector<1x16xf32> to vector<128x16xf32>
    %21 = arith.addf %18, %20 : vector<128x16xf32>
    %cst = arith.constant 0.000000e+00 : f32
    %22 = vector.broadcast %cst : f32 to vector<128x16xf32>
    %23 = arith.maximumf %21, %22 : vector<128x16xf32>
    %c0_5 = arith.constant 0 : index
    %c0_6 = arith.constant 0 : index
    %24 = vector.load %arg5[%c0_5, %c0_6] : memref<16x16xbf16, #tpu.memory_space<vmem>>, vector<16x16xbf16>
    %25 = arith.truncf %23 : vector<128x16xf32> to vector<128x16xbf16>
    %cst_7 = arith.constant dense<0.000000e+00> : vector<128x16xf32>
    %26 = tpu.matmul %25, %24, %cst_7 {dimension_numbers = #tpu.dot_dimension_numbers<[1], [0], [0], [1], [0, 0, 1, 1], [], []>} : vector<128x16xbf16>, vector<16x16xbf16>, vector<128x16xf32> -> vector<128x16xf32>
    %c0_8 = arith.constant 0 : index
    %c0_9 = arith.constant 0 : index
    %27 = vector.load %arg6[%c0_8, %c0_9] : memref<1x16xf32, #tpu.memory_space<vmem>>, vector<1x16xf32>
    %28 = vector.broadcast %27 : vector<1x16xf32> to vector<128x16xf32>
    %29 = arith.addf %26, %28 : vector<128x16xf32>
    %cst_10 = arith.constant 0.000000e+00 : f32
    %30 = vector.broadcast %cst_10 : f32 to vector<128x16xf32>
    %31 = arith.maximumf %29, %30 : vector<128x16xf32>
    %c0_11 = arith.constant 0 : index
    %c0_12 = arith.constant 0 : index
    %32 = vector.load %arg7[%c0_11, %c0_12] : memref<16x32xbf16, #tpu.memory_space<vmem>>, vector<16x32xbf16>
    %33 = arith.truncf %31 : vector<128x16xf32> to vector<128x16xbf16>
    %cst_13 = arith.constant dense<0.000000e+00> : vector<128x32xf32>
    %34 = tpu.matmul %33, %32, %cst_13 {dimension_numbers = #tpu.dot_dimension_numbers<[1], [0], [0], [1], [0, 0, 1, 1], [], []>} : vector<128x16xbf16>, vector<16x32xbf16>, vector<128x32xf32> -> vector<128x32xf32>
    %c0_14 = arith.constant 0 : index
    %c0_15 = arith.constant 0 : index
    %35 = vector.load %arg8[%c0_14, %c0_15] : memref<1x32xf32, #tpu.memory_space<vmem>>, vector<1x32xf32>
    %36 = vector.broadcast %35 : vector<1x32xf32> to vector<128x32xf32>
    %37 = arith.addf %34, %36 : vector<128x32xf32>
    %cst_16 = arith.constant 0.000000e+00 : f32
    %38 = vector.broadcast %cst_16 : f32 to vector<128x32xf32>
    %39 = arith.maximumf %37, %38 : vector<128x32xf32>
    %40 = vector.shape_cast %39 : vector<128x32xf32> to vector<16x8x32xf32>
    %c0_17 = arith.constant 0 : index
    %c0_18 = arith.constant 0 : index
    %41 = vector.load %arg2[%c0_17, %c0_18] : memref<16x8xf32, #tpu.memory_space<vmem>>, vector<16x8xf32>
    %42 = vector.shape_cast %41 : vector<16x8xf32> to vector<16x8x1xf32>
    %43 = vector.broadcast %42 : vector<16x8x1xf32> to vector<16x8x32xf32>
    %44 = arith.addf %40, %43 : vector<16x8x32xf32>
    %cst_19 = arith.constant dense<0xFF800000> : vector<16x32xf32>
    %45 = vector.multi_reduction <maximumf>, %44, %cst_19 [1] : vector<16x8x32xf32> to vector<16x32xf32>
    %c0_20 = arith.constant 0 : index
    %c0_21 = arith.constant 0 : index
    %46 = vector.load %arg2[%c0_20, %c0_21] : memref<16x8xf32, #tpu.memory_space<vmem>>, vector<16x8xf32>
    %cst_22 = arith.constant dense<0xFF800000> : vector<16xf32>
    %47 = vector.multi_reduction <maximumf>, %46, %cst_22 [1] : vector<16x8xf32> to vector<16xf32>
    %48 = vector.shape_cast %47 : vector<16xf32> to vector<16x1xf32>
    %cst_23 = arith.constant -5.000000e-01 : f32
    %49 = vector.broadcast %cst_23 : f32 to vector<16x1xf32>
    %50 = arith.cmpf ogt, %48, %49 : vector<16x1xf32>
    %cst_24 = arith.constant 0.000000e+00 : f32
    %51 = vector.shape_cast %50 : vector<16x1xi1> to vector<16x1xi1>
    %52 = vector.broadcast %51 : vector<16x1xi1> to vector<16x32xi1>
    %53 = vector.broadcast %cst_24 : f32 to vector<16x32xf32>
    %54 = arith.select %52, %45, %53 : vector<16x32xi1>, vector<16x32xf32>
    %c0_25 = arith.constant 0 : index
    %c0_26 = arith.constant 0 : index
    %55 = vector.load %arg9[%c0_25, %c0_26] : memref<16x32xf32, #tpu.memory_space<vmem>>, vector<16x32xf32>
    tpu.vector_store %arg9[%c0_25, %c0_26], %54 {strides = array<i32>} : memref<16x32xf32, #tpu.memory_space<vmem>>, vector<16x32xf32>,
    return
  }
  func.func @transform_0(%arg0: i32) -> (i32, i32) {
    %c0_i32 = arith.constant 0 : i32
    %c0_i32_0 = arith.constant 0 : i32
    %c0_i32_1 = arith.constant 0 : i32
    return %c0_i32, %c0_i32_0 : i32, i32
  }
  func.func @transform_1(%arg0: i32) -> (i32, i32) {
    %c0_i32 = arith.constant 0 : i32
    %c0_i32_0 = arith.constant 0 : i32
    %c0_i32_1 = arith.constant 0 : i32
    return %c0_i32, %c0_i32_0 : i32, i32
  }
  func.func @transform_2(%arg0: i32) -> (i32, i32) {
    %c0_i32 = arith.constant 0 : i32
    %c0_i32_0 = arith.constant 0 : i32
    %c0_i32_1 = arith.constant 0 : i32
    return %c0_i32, %c0_i32_0 : i32, i32
  }
  func.func @transform_3(%arg0: i32) -> (i32, i32) {
    %c0_i32 = arith.constant 0 : i32
    %c0_i32_0 = arith.constant 0 : i32
    %c0_i32_1 = arith.constant 0 : i32
    return %c0_i32, %c0_i32_0 : i32, i32
  }
  func.func @transform_4(%arg0: i32) -> (i32, i32) {
    %c0_i32 = arith.constant 0 : i32
    %c0_i32_0 = arith.constant 0 : i32
    %c0_i32_1 = arith.constant 0 : i32
    return %c0_i32, %c0_i32_0 : i32, i32
  }
  func.func @transform_5(%arg0: i32) -> (i32, i32) {
    %c0_i32 = arith.constant 0 : i32
    %c0_i32_0 = arith.constant 0 : i32
    %c0_i32_1 = arith.constant 0 : i32
    return %c0_i32, %c0_i32_0 : i32, i32
  }
  func.func @transform_6(%arg0: i32) -> (i32, i32) {
    %c0_i32 = arith.constant 0 : i32
    %c0_i32_0 = arith.constant 0 : i32
    %c0_i32_1 = arith.constant 0 : i32
    return %c0_i32, %c0_i32_0 : i32, i32
  }
  func.func @transform_7(%arg0: i32) -> (i32, i32) {
    %c0_i32 = arith.constant 0 : i32
    %c0_i32_0 = arith.constant 0 : i32
    %c0_i32_1 = arith.constant 0 : i32
    return %c0_i32, %c0_i32_0 : i32, i32
  }
  func.func @transform_8(%arg0: i32) -> (i32, i32) {
    %c0_i32 = arith.constant 0 : i32
    %c0_i32_0 = arith.constant 0 : i32
    %c0_i32_1 = arith.constant 0 : i32
    return %c0_i32, %c0_i32_0 : i32, i32
  }
}

module attributes {stable_mosaic.version = 11 : i64} {
  func.func @kernel(%arg0: i32, %arg1: memref<64x35xf32, #tpu.memory_space<vmem>>, %arg2: memref<8x8xf32, #tpu.memory_space<vmem>>, %arg3: memref<35x32xbf16, #tpu.memory_space<vmem>>, %arg4: memref<1x32xf32, #tpu.memory_space<vmem>>, %arg5: memref<32x32xbf16, #tpu.memory_space<vmem>>, %arg6: memref<1x32xf32, #tpu.memory_space<vmem>>, %arg7: memref<32x64xbf16, #tpu.memory_space<vmem>>, %arg8: memref<1x64xf32, #tpu.memory_space<vmem>>, %arg9: memref<8x64xf32, #tpu.memory_space<vmem>>) attributes {dimension_semantics = [#tpu.dimension_semantics<arbitrary>], iteration_bounds = array<i64: 1>, scalar_prefetch = 0 : i64, scratch_operands = 0 : i64, tpu.core_type = #tpu.core_type<tc>, window_params = [{pipeline_mode = #tpu.pipeline_mode<synchronous>, transform_indices = @transform_0, window_bounds = array<i64: 64, 35>}, {pipeline_mode = #tpu.pipeline_mode<synchronous>, transform_indices = @transform_1, window_bounds = array<i64: 8, 8>}, {pipeline_mode = #tpu.pipeline_mode<synchronous>, transform_indices = @transform_2, window_bounds = array<i64: 35, 32>}, {pipeline_mode = #tpu.pipeline_mode<synchronous>, transform_indices = @transform_3, window_bounds = array<i64: 1, 32>}, {pipeline_mode = #tpu.pipeline_mode<synchronous>, transform_indices = @transform_4, window_bounds = array<i64: 32, 32>}, {pipeline_mode = #tpu.pipeline_mode<synchronous>, transform_indices = @transform_5, window_bounds = array<i64: 1, 32>}, {pipeline_mode = #tpu.pipeline_mode<synchronous>, transform_indices = @transform_6, window_bounds = array<i64: 32, 64>}, {pipeline_mode = #tpu.pipeline_mode<synchronous>, transform_indices = @transform_7, window_bounds = array<i64: 1, 64>}, {pipeline_mode = #tpu.pipeline_mode<synchronous>, transform_indices = @transform_8, window_bounds = array<i64: 8, 64>}]} {
    %c0 = arith.constant 0 : index
    %c0_0 = arith.constant 0 : index
    %0 = vector.load %arg1[%c0, %c0_0] : memref<64x35xf32, #tpu.memory_space<vmem>>, vector<64x35xf32>
    %c0_1 = arith.constant 0 : index
    %c0_2 = arith.constant 0 : index
    %1 = vector.load %arg3[%c0_1, %c0_2] : memref<35x32xbf16, #tpu.memory_space<vmem>>, vector<35x32xbf16>
    %2 = arith.truncf %0 : vector<64x35xf32> to vector<64x35xbf16>
    %cst = arith.constant dense<0.000000e+00> : vector<64x32xf32>
    %3 = tpu.matmul %2, %1, %cst {dimension_numbers = #tpu.dot_dimension_numbers<[1], [0], [0], [1], [0, 0, 1, 1], [], []>} : vector<64x35xbf16>, vector<35x32xbf16>, vector<64x32xf32> -> vector<64x32xf32>
    %c0_3 = arith.constant 0 : index
    %c0_4 = arith.constant 0 : index
    %4 = vector.load %arg4[%c0_3, %c0_4] : memref<1x32xf32, #tpu.memory_space<vmem>>, vector<1x32xf32>
    %5 = vector.broadcast %4 : vector<1x32xf32> to vector<64x32xf32>
    %6 = arith.addf %3, %5 : vector<64x32xf32>
    %cst_5 = arith.constant 0.000000e+00 : f32
    %7 = vector.broadcast %cst_5 : f32 to vector<64x32xf32>
    %8 = arith.maximumf %6, %7 : vector<64x32xf32>
    %c0_6 = arith.constant 0 : index
    %c0_7 = arith.constant 0 : index
    %9 = vector.load %arg5[%c0_6, %c0_7] : memref<32x32xbf16, #tpu.memory_space<vmem>>, vector<32x32xbf16>
    %10 = arith.truncf %8 : vector<64x32xf32> to vector<64x32xbf16>
    %cst_8 = arith.constant dense<0.000000e+00> : vector<64x32xf32>
    %11 = tpu.matmul %10, %9, %cst_8 {dimension_numbers = #tpu.dot_dimension_numbers<[1], [0], [0], [1], [0, 0, 1, 1], [], []>} : vector<64x32xbf16>, vector<32x32xbf16>, vector<64x32xf32> -> vector<64x32xf32>
    %c0_9 = arith.constant 0 : index
    %c0_10 = arith.constant 0 : index
    %12 = vector.load %arg6[%c0_9, %c0_10] : memref<1x32xf32, #tpu.memory_space<vmem>>, vector<1x32xf32>
    %13 = vector.broadcast %12 : vector<1x32xf32> to vector<64x32xf32>
    %14 = arith.addf %11, %13 : vector<64x32xf32>
    %cst_11 = arith.constant 0.000000e+00 : f32
    %15 = vector.broadcast %cst_11 : f32 to vector<64x32xf32>
    %16 = arith.maximumf %14, %15 : vector<64x32xf32>
    %c0_12 = arith.constant 0 : index
    %c0_13 = arith.constant 0 : index
    %17 = vector.load %arg7[%c0_12, %c0_13] : memref<32x64xbf16, #tpu.memory_space<vmem>>, vector<32x64xbf16>
    %18 = arith.truncf %16 : vector<64x32xf32> to vector<64x32xbf16>
    %cst_14 = arith.constant dense<0.000000e+00> : vector<64x64xf32>
    %19 = tpu.matmul %18, %17, %cst_14 {dimension_numbers = #tpu.dot_dimension_numbers<[1], [0], [0], [1], [0, 0, 1, 1], [], []>} : vector<64x32xbf16>, vector<32x64xbf16>, vector<64x64xf32> -> vector<64x64xf32>
    %c0_15 = arith.constant 0 : index
    %c0_16 = arith.constant 0 : index
    %20 = vector.load %arg8[%c0_15, %c0_16] : memref<1x64xf32, #tpu.memory_space<vmem>>, vector<1x64xf32>
    %21 = vector.broadcast %20 : vector<1x64xf32> to vector<64x64xf32>
    %22 = arith.addf %19, %21 : vector<64x64xf32>
    %cst_17 = arith.constant 0.000000e+00 : f32
    %23 = vector.broadcast %cst_17 : f32 to vector<64x64xf32>
    %24 = arith.maximumf %22, %23 : vector<64x64xf32>
    %25 = vector.shape_cast %24 : vector<64x64xf32> to vector<8x8x64xf32>
    %c0_18 = arith.constant 0 : index
    %c0_19 = arith.constant 0 : index
    %26 = vector.load %arg2[%c0_18, %c0_19] : memref<8x8xf32, #tpu.memory_space<vmem>>, vector<8x8xf32>
    %27 = vector.shape_cast %26 : vector<8x8xf32> to vector<8x8x1xf32>
    %28 = vector.broadcast %27 : vector<8x8x1xf32> to vector<8x8x64xf32>
    %29 = arith.addf %25, %28 : vector<8x8x64xf32>
    %cst_20 = arith.constant dense<0xFF800000> : vector<8x64xf32>
    %30 = vector.multi_reduction <maximumf>, %29, %cst_20 [1] : vector<8x8x64xf32> to vector<8x64xf32>
    %c0_21 = arith.constant 0 : index
    %c0_22 = arith.constant 0 : index
    %31 = vector.load %arg2[%c0_21, %c0_22] : memref<8x8xf32, #tpu.memory_space<vmem>>, vector<8x8xf32>
    %cst_23 = arith.constant dense<0xFF800000> : vector<8xf32>
    %32 = vector.multi_reduction <maximumf>, %31, %cst_23 [1] : vector<8x8xf32> to vector<8xf32>
    %33 = vector.shape_cast %32 : vector<8xf32> to vector<8x1xf32>
    %cst_24 = arith.constant -5.000000e-01 : f32
    %34 = vector.broadcast %cst_24 : f32 to vector<8x1xf32>
    %35 = arith.cmpf ogt, %33, %34 : vector<8x1xf32>
    %cst_25 = arith.constant 0.000000e+00 : f32
    %36 = vector.shape_cast %35 : vector<8x1xi1> to vector<8x1xi1>
    %37 = vector.broadcast %36 : vector<8x1xi1> to vector<8x64xi1>
    %38 = vector.broadcast %cst_25 : f32 to vector<8x64xf32>
    %39 = arith.select %37, %30, %38 : vector<8x64xi1>, vector<8x64xf32>
    %c0_26 = arith.constant 0 : index
    %c0_27 = arith.constant 0 : index
    %40 = vector.load %arg9[%c0_26, %c0_27] : memref<8x64xf32, #tpu.memory_space<vmem>>, vector<8x64xf32>
    tpu.vector_store %arg9[%c0_26, %c0_27], %39 {strides = array<i32>} : memref<8x64xf32, #tpu.memory_space<vmem>>, vector<8x64xf32>,
    return
  }
  func.func @transform_0(%arg0: i32) -> (i32, i32) {
    %c0_i32 = arith.constant 0 : i32
    %c0_i32_0 = arith.constant 0 : i32
    %c0_i32_1 = arith.constant 0 : i32
    return %c0_i32, %c0_i32_0 : i32, i32
  }
  func.func @transform_1(%arg0: i32) -> (i32, i32) {
    %c0_i32 = arith.constant 0 : i32
    %c0_i32_0 = arith.constant 0 : i32
    %c0_i32_1 = arith.constant 0 : i32
    return %c0_i32, %c0_i32_0 : i32, i32
  }
  func.func @transform_2(%arg0: i32) -> (i32, i32) {
    %c0_i32 = arith.constant 0 : i32
    %c0_i32_0 = arith.constant 0 : i32
    %c0_i32_1 = arith.constant 0 : i32
    return %c0_i32, %c0_i32_0 : i32, i32
  }
  func.func @transform_3(%arg0: i32) -> (i32, i32) {
    %c0_i32 = arith.constant 0 : i32
    %c0_i32_0 = arith.constant 0 : i32
    %c0_i32_1 = arith.constant 0 : i32
    return %c0_i32, %c0_i32_0 : i32, i32
  }
  func.func @transform_4(%arg0: i32) -> (i32, i32) {
    %c0_i32 = arith.constant 0 : i32
    %c0_i32_0 = arith.constant 0 : i32
    %c0_i32_1 = arith.constant 0 : i32
    return %c0_i32, %c0_i32_0 : i32, i32
  }
  func.func @transform_5(%arg0: i32) -> (i32, i32) {
    %c0_i32 = arith.constant 0 : i32
    %c0_i32_0 = arith.constant 0 : i32
    %c0_i32_1 = arith.constant 0 : i32
    return %c0_i32, %c0_i32_0 : i32, i32
  }
  func.func @transform_6(%arg0: i32) -> (i32, i32) {
    %c0_i32 = arith.constant 0 : i32
    %c0_i32_0 = arith.constant 0 : i32
    %c0_i32_1 = arith.constant 0 : i32
    return %c0_i32, %c0_i32_0 : i32, i32
  }
  func.func @transform_7(%arg0: i32) -> (i32, i32) {
    %c0_i32 = arith.constant 0 : i32
    %c0_i32_0 = arith.constant 0 : i32
    %c0_i32_1 = arith.constant 0 : i32
    return %c0_i32, %c0_i32_0 : i32, i32
  }
  func.func @transform_8(%arg0: i32) -> (i32, i32) {
    %c0_i32 = arith.constant 0 : i32
    %c0_i32_0 = arith.constant 0 : i32
    %c0_i32_1 = arith.constant 0 : i32
    return %c0_i32, %c0_i32_0 : i32, i32
  }
}

module attributes {stable_mosaic.version = 11 : i64} {
  func.func @kernel(%arg0: i32, %arg1: memref<16x8xf32, #tpu.memory_space<vmem>>, %arg2: memref<8x256xbf16, #tpu.memory_space<vmem>>, %arg3: memref<1x256xf32, #tpu.memory_space<vmem>>, %arg4: memref<16x256xf32, #tpu.memory_space<vmem>>) attributes {dimension_semantics = [#tpu.dimension_semantics<arbitrary>], iteration_bounds = array<i64: 1>, scalar_prefetch = 0 : i64, scratch_operands = 0 : i64, tpu.core_type = #tpu.core_type<tc>, window_params = [{pipeline_mode = #tpu.pipeline_mode<synchronous>, transform_indices = @transform_0, window_bounds = array<i64: 16, 8>}, {pipeline_mode = #tpu.pipeline_mode<synchronous>, transform_indices = @transform_1, window_bounds = array<i64: 8, 256>}, {pipeline_mode = #tpu.pipeline_mode<synchronous>, transform_indices = @transform_2, window_bounds = array<i64: 1, 256>}, {pipeline_mode = #tpu.pipeline_mode<synchronous>, transform_indices = @transform_3, window_bounds = array<i64: 16, 256>}]} {
    %c0 = arith.constant 0 : index
    %c0_0 = arith.constant 0 : index
    %0 = vector.load %arg1[%c0, %c0_0] : memref<16x8xf32, #tpu.memory_space<vmem>>, vector<16x8xf32>
    %c0_1 = arith.constant 0 : index
    %c0_2 = arith.constant 0 : index
    %1 = vector.load %arg2[%c0_1, %c0_2] : memref<8x256xbf16, #tpu.memory_space<vmem>>, vector<8x256xbf16>
    %2 = arith.truncf %0 : vector<16x8xf32> to vector<16x8xbf16>
    %cst = arith.constant dense<0.000000e+00> : vector<16x256xf32>
    %3 = tpu.matmul %2, %1, %cst {dimension_numbers = #tpu.dot_dimension_numbers<[1], [0], [0], [1], [0, 0, 1, 1], [], []>} : vector<16x8xbf16>, vector<8x256xbf16>, vector<16x256xf32> -> vector<16x256xf32>
    %c0_3 = arith.constant 0 : index
    %c0_4 = arith.constant 0 : index
    %4 = vector.load %arg3[%c0_3, %c0_4] : memref<1x256xf32, #tpu.memory_space<vmem>>, vector<1x256xf32>
    %5 = vector.broadcast %4 : vector<1x256xf32> to vector<16x256xf32>
    %6 = arith.addf %3, %5 : vector<16x256xf32>
    %c0_5 = arith.constant 0 : index
    %c0_6 = arith.constant 0 : index
    %7 = vector.load %arg4[%c0_5, %c0_6] : memref<16x256xf32, #tpu.memory_space<vmem>>, vector<16x256xf32>
    tpu.vector_store %arg4[%c0_5, %c0_6], %6 {strides = array<i32>} : memref<16x256xf32, #tpu.memory_space<vmem>>, vector<16x256xf32>,
    return
  }
  func.func @transform_0(%arg0: i32) -> (i32, i32) {
    %c0_i32 = arith.constant 0 : i32
    %c0_i32_0 = arith.constant 0 : i32
    %c0_i32_1 = arith.constant 0 : i32
    return %c0_i32, %c0_i32_0 : i32, i32
  }
  func.func @transform_1(%arg0: i32) -> (i32, i32) {
    %c0_i32 = arith.constant 0 : i32
    %c0_i32_0 = arith.constant 0 : i32
    %c0_i32_1 = arith.constant 0 : i32
    return %c0_i32, %c0_i32_0 : i32, i32
  }
  func.func @transform_2(%arg0: i32) -> (i32, i32) {
    %c0_i32 = arith.constant 0 : i32
    %c0_i32_0 = arith.constant 0 : i32
    %c0_i32_1 = arith.constant 0 : i32
    return %c0_i32, %c0_i32_0 : i32, i32
  }
  func.func @transform_3(%arg0: i32) -> (i32, i32) {
    %c0_i32 = arith.constant 0 : i32
    %c0_i32_0 = arith.constant 0 : i32
    %c0_i32_1 = arith.constant 0 : i32
    return %c0_i32, %c0_i32_0 : i32, i32
  }
}

module attributes {stable_mosaic.version = 11 : i64} {
  func.func @kernel(%arg0: i32, %arg1: memref<64x67xf32, #tpu.memory_space<vmem>>, %arg2: memref<8x8xf32, #tpu.memory_space<vmem>>, %arg3: memref<8x128xf32, #tpu.memory_space<vmem>>, %arg4: memref<67x64xbf16, #tpu.memory_space<vmem>>, %arg5: memref<1x64xf32, #tpu.memory_space<vmem>>, %arg6: memref<64x128xbf16, #tpu.memory_space<vmem>>, %arg7: memref<1x128xf32, #tpu.memory_space<vmem>>, %arg8: memref<8x128xf32, #tpu.memory_space<vmem>>) attributes {dimension_semantics = [#tpu.dimension_semantics<arbitrary>], iteration_bounds = array<i64: 1>, scalar_prefetch = 0 : i64, scratch_operands = 0 : i64, tpu.core_type = #tpu.core_type<tc>, window_params = [{pipeline_mode = #tpu.pipeline_mode<synchronous>, transform_indices = @transform_0, window_bounds = array<i64: 64, 67>}, {pipeline_mode = #tpu.pipeline_mode<synchronous>, transform_indices = @transform_1, window_bounds = array<i64: 8, 8>}, {pipeline_mode = #tpu.pipeline_mode<synchronous>, transform_indices = @transform_2, window_bounds = array<i64: 8, 128>}, {pipeline_mode = #tpu.pipeline_mode<synchronous>, transform_indices = @transform_3, window_bounds = array<i64: 67, 64>}, {pipeline_mode = #tpu.pipeline_mode<synchronous>, transform_indices = @transform_4, window_bounds = array<i64: 1, 64>}, {pipeline_mode = #tpu.pipeline_mode<synchronous>, transform_indices = @transform_5, window_bounds = array<i64: 64, 128>}, {pipeline_mode = #tpu.pipeline_mode<synchronous>, transform_indices = @transform_6, window_bounds = array<i64: 1, 128>}, {pipeline_mode = #tpu.pipeline_mode<synchronous>, transform_indices = @transform_7, window_bounds = array<i64: 8, 128>}]} {
    %c0 = arith.constant 0 : index
    %c0_0 = arith.constant 0 : index
    %0 = vector.load %arg1[%c0, %c0_0] : memref<64x67xf32, #tpu.memory_space<vmem>>, vector<64x67xf32>
    %c0_1 = arith.constant 0 : index
    %c0_2 = arith.constant 0 : index
    %1 = vector.load %arg4[%c0_1, %c0_2] : memref<67x64xbf16, #tpu.memory_space<vmem>>, vector<67x64xbf16>
    %2 = arith.truncf %0 : vector<64x67xf32> to vector<64x67xbf16>
    %cst = arith.constant dense<0.000000e+00> : vector<64x64xf32>
    %3 = tpu.matmul %2, %1, %cst {dimension_numbers = #tpu.dot_dimension_numbers<[1], [0], [0], [1], [0, 0, 1, 1], [], []>} : vector<64x67xbf16>, vector<67x64xbf16>, vector<64x64xf32> -> vector<64x64xf32>
    %c0_3 = arith.constant 0 : index
    %c0_4 = arith.constant 0 : index
    %4 = vector.load %arg5[%c0_3, %c0_4] : memref<1x64xf32, #tpu.memory_space<vmem>>, vector<1x64xf32>
    %5 = vector.broadcast %4 : vector<1x64xf32> to vector<64x64xf32>
    %6 = arith.addf %3, %5 : vector<64x64xf32>
    %cst_5 = arith.constant 0.000000e+00 : f32
    %7 = vector.broadcast %cst_5 : f32 to vector<64x64xf32>
    %8 = arith.maximumf %6, %7 : vector<64x64xf32>
    %c0_6 = arith.constant 0 : index
    %c0_7 = arith.constant 0 : index
    %9 = vector.load %arg6[%c0_6, %c0_7] : memref<64x128xbf16, #tpu.memory_space<vmem>>, vector<64x128xbf16>
    %10 = arith.truncf %8 : vector<64x64xf32> to vector<64x64xbf16>
    %cst_8 = arith.constant dense<0.000000e+00> : vector<64x128xf32>
    %11 = tpu.matmul %10, %9, %cst_8 {dimension_numbers = #tpu.dot_dimension_numbers<[1], [0], [0], [1], [0, 0, 1, 1], [], []>} : vector<64x64xbf16>, vector<64x128xbf16>, vector<64x128xf32> -> vector<64x128xf32>
    %c0_9 = arith.constant 0 : index
    %c0_10 = arith.constant 0 : index
    %12 = vector.load %arg7[%c0_9, %c0_10] : memref<1x128xf32, #tpu.memory_space<vmem>>, vector<1x128xf32>
    %13 = vector.broadcast %12 : vector<1x128xf32> to vector<64x128xf32>
    %14 = arith.addf %11, %13 : vector<64x128xf32>
    %cst_11 = arith.constant 0.000000e+00 : f32
    %15 = vector.broadcast %cst_11 : f32 to vector<64x128xf32>
    %16 = arith.maximumf %14, %15 : vector<64x128xf32>
    %17 = vector.shape_cast %16 : vector<64x128xf32> to vector<8x8x128xf32>
    %c0_12 = arith.constant 0 : index
    %c0_13 = arith.constant 0 : index
    %18 = vector.load %arg2[%c0_12, %c0_13] : memref<8x8xf32, #tpu.memory_space<vmem>>, vector<8x8xf32>
    %19 = vector.shape_cast %18 : vector<8x8xf32> to vector<8x8x1xf32>
    %20 = vector.broadcast %19 : vector<8x8x1xf32> to vector<8x8x128xf32>
    %21 = arith.addf %17, %20 : vector<8x8x128xf32>
    %cst_14 = arith.constant dense<0xFF800000> : vector<8x128xf32>
    %22 = vector.multi_reduction <maximumf>, %21, %cst_14 [1] : vector<8x8x128xf32> to vector<8x128xf32>
    %c0_15 = arith.constant 0 : index
    %c0_16 = arith.constant 0 : index
    %23 = vector.load %arg2[%c0_15, %c0_16] : memref<8x8xf32, #tpu.memory_space<vmem>>, vector<8x8xf32>
    %cst_17 = arith.constant dense<0xFF800000> : vector<8xf32>
    %24 = vector.multi_reduction <maximumf>, %23, %cst_17 [1] : vector<8x8xf32> to vector<8xf32>
    %25 = vector.shape_cast %24 : vector<8xf32> to vector<8x1xf32>
    %cst_18 = arith.constant -5.000000e-01 : f32
    %26 = vector.broadcast %cst_18 : f32 to vector<8x1xf32>
    %27 = arith.cmpf ogt, %25, %26 : vector<8x1xf32>
    %cst_19 = arith.constant 0.000000e+00 : f32
    %28 = vector.shape_cast %27 : vector<8x1xi1> to vector<8x1xi1>
    %29 = vector.broadcast %28 : vector<8x1xi1> to vector<8x128xi1>
    %30 = vector.broadcast %cst_19 : f32 to vector<8x128xf32>
    %31 = arith.select %29, %22, %30 : vector<8x128xi1>, vector<8x128xf32>
    %c0_20 = arith.constant 0 : index
    %c0_21 = arith.constant 0 : index
    %32 = vector.load %arg3[%c0_20, %c0_21] : memref<8x128xf32, #tpu.memory_space<vmem>>, vector<8x128xf32>
    %33 = arith.mulf %31, %32 : vector<8x128xf32>
    %c0_22 = arith.constant 0 : index
    %c0_23 = arith.constant 0 : index
    %34 = vector.load %arg8[%c0_22, %c0_23] : memref<8x128xf32, #tpu.memory_space<vmem>>, vector<8x128xf32>
    tpu.vector_store %arg8[%c0_22, %c0_23], %33 {strides = array<i32>} : memref<8x128xf32, #tpu.memory_space<vmem>>, vector<8x128xf32>,
    return
  }
  func.func @transform_0(%arg0: i32) -> (i32, i32) {
    %c0_i32 = arith.constant 0 : i32
    %c0_i32_0 = arith.constant 0 : i32
    %c0_i32_1 = arith.constant 0 : i32
    return %c0_i32, %c0_i32_0 : i32, i32
  }
  func.func @transform_1(%arg0: i32) -> (i32, i32) {
    %c0_i32 = arith.constant 0 : i32
    %c0_i32_0 = arith.constant 0 : i32
    %c0_i32_1 = arith.constant 0 : i32
    return %c0_i32, %c0_i32_0 : i32, i32
  }
  func.func @transform_2(%arg0: i32) -> (i32, i32) {
    %c0_i32 = arith.constant 0 : i32
    %c0_i32_0 = arith.constant 0 : i32
    %c0_i32_1 = arith.constant 0 : i32
    return %c0_i32, %c0_i32_0 : i32, i32
  }
  func.func @transform_3(%arg0: i32) -> (i32, i32) {
    %c0_i32 = arith.constant 0 : i32
    %c0_i32_0 = arith.constant 0 : i32
    %c0_i32_1 = arith.constant 0 : i32
    return %c0_i32, %c0_i32_0 : i32, i32
  }
  func.func @transform_4(%arg0: i32) -> (i32, i32) {
    %c0_i32 = arith.constant 0 : i32
    %c0_i32_0 = arith.constant 0 : i32
    %c0_i32_1 = arith.constant 0 : i32
    return %c0_i32, %c0_i32_0 : i32, i32
  }
  func.func @transform_5(%arg0: i32) -> (i32, i32) {
    %c0_i32 = arith.constant 0 : i32
    %c0_i32_0 = arith.constant 0 : i32
    %c0_i32_1 = arith.constant 0 : i32
    return %c0_i32, %c0_i32_0 : i32, i32
  }
  func.func @transform_6(%arg0: i32) -> (i32, i32) {
    %c0_i32 = arith.constant 0 : i32
    %c0_i32_0 = arith.constant 0 : i32
    %c0_i32_1 = arith.constant 0 : i32
    return %c0_i32, %c0_i32_0 : i32, i32
  }
  func.func @transform_7(%arg0: i32) -> (i32, i32) {
    %c0_i32 = arith.constant 0 : i32
    %c0_i32_0 = arith.constant 0 : i32
    %c0_i32_1 = arith.constant 0 : i32
    return %c0_i32, %c0_i32_0 : i32, i32
  }
}

module attributes {stable_mosaic.version = 11 : i64} {
  func.func @kernel(%arg0: i32, %arg1: memref<16x128xf32, #tpu.memory_space<vmem>>, %arg2: memref<16x64xf32, #tpu.memory_space<vmem>>, %arg3: memref<2x64xf32, #tpu.memory_space<vmem>>, %arg4: memref<128x64xbf16, #tpu.memory_space<vmem>>, %arg5: memref<64x64xbf16, #tpu.memory_space<vmem>>, %arg6: memref<1x64xf32, #tpu.memory_space<vmem>>, %arg7: memref<16x64xf32, #tpu.memory_space<vmem>>) attributes {dimension_semantics = [#tpu.dimension_semantics<arbitrary>], iteration_bounds = array<i64: 1>, scalar_prefetch = 0 : i64, scratch_operands = 0 : i64, tpu.core_type = #tpu.core_type<tc>, window_params = [{pipeline_mode = #tpu.pipeline_mode<synchronous>, transform_indices = @transform_0, window_bounds = array<i64: 16, 128>}, {pipeline_mode = #tpu.pipeline_mode<synchronous>, transform_indices = @transform_1, window_bounds = array<i64: 16, 64>}, {pipeline_mode = #tpu.pipeline_mode<synchronous>, transform_indices = @transform_2, window_bounds = array<i64: 2, 64>}, {pipeline_mode = #tpu.pipeline_mode<synchronous>, transform_indices = @transform_3, window_bounds = array<i64: 128, 64>}, {pipeline_mode = #tpu.pipeline_mode<synchronous>, transform_indices = @transform_4, window_bounds = array<i64: 64, 64>}, {pipeline_mode = #tpu.pipeline_mode<synchronous>, transform_indices = @transform_5, window_bounds = array<i64: 1, 64>}, {pipeline_mode = #tpu.pipeline_mode<synchronous>, transform_indices = @transform_6, window_bounds = array<i64: 16, 64>}]} {
    %c0 = arith.constant 0 : index
    %c0_0 = arith.constant 0 : index
    %0 = vector.load %arg1[%c0, %c0_0] : memref<16x128xf32, #tpu.memory_space<vmem>>, vector<16x128xf32>
    %c0_1 = arith.constant 0 : index
    %c0_2 = arith.constant 0 : index
    %1 = vector.load %arg4[%c0_1, %c0_2] : memref<128x64xbf16, #tpu.memory_space<vmem>>, vector<128x64xbf16>
    %2 = arith.truncf %0 : vector<16x128xf32> to vector<16x128xbf16>
    %cst = arith.constant dense<0.000000e+00> : vector<16x64xf32>
    %3 = tpu.matmul %2, %1, %cst {dimension_numbers = #tpu.dot_dimension_numbers<[1], [0], [0], [1], [0, 0, 1, 1], [], []>} : vector<16x128xbf16>, vector<128x64xbf16>, vector<16x64xf32> -> vector<16x64xf32>
    %c0_3 = arith.constant 0 : index
    %c0_4 = arith.constant 0 : index
    %4 = vector.load %arg2[%c0_3, %c0_4] : memref<16x64xf32, #tpu.memory_space<vmem>>, vector<16x64xf32>
    %c0_5 = arith.constant 0 : index
    %c0_6 = arith.constant 0 : index
    %5 = vector.load %arg5[%c0_5, %c0_6] : memref<64x64xbf16, #tpu.memory_space<vmem>>, vector<64x64xbf16>
    %6 = arith.truncf %4 : vector<16x64xf32> to vector<16x64xbf16>
    %cst_7 = arith.constant dense<0.000000e+00> : vector<16x64xf32>
    %7 = tpu.matmul %6, %5, %cst_7 {dimension_numbers = #tpu.dot_dimension_numbers<[1], [0], [0], [1], [0, 0, 1, 1], [], []>} : vector<16x64xbf16>, vector<64x64xbf16>, vector<16x64xf32> -> vector<16x64xf32>
    %8 = arith.addf %3, %7 : vector<16x64xf32>
    %c0_8 = arith.constant 0 : index
    %c0_9 = arith.constant 0 : index
    %9 = vector.load %arg6[%c0_8, %c0_9] : memref<1x64xf32, #tpu.memory_space<vmem>>, vector<1x64xf32>
    %10 = vector.broadcast %9 : vector<1x64xf32> to vector<16x64xf32>
    %11 = arith.addf %8, %10 : vector<16x64xf32>
    %cst_10 = arith.constant 0.000000e+00 : f32
    %12 = vector.broadcast %cst_10 : f32 to vector<16x64xf32>
    %13 = arith.maximumf %11, %12 : vector<16x64xf32>
    %c0_11 = arith.constant 0 : index
    %c0_12 = arith.constant 0 : index
    %14 = vector.load %arg3[%c0_11, %c0_12] : memref<2x64xf32, #tpu.memory_space<vmem>>, vector<2x64xf32>
    %15 = vector.shape_cast %14 : vector<2x64xf32> to vector<2x1x64xf32>
    %16 = vector.shape_cast %15 : vector<2x1x64xf32> to vector<2x1x64xf32>
    %17 = vector.broadcast %16 : vector<2x1x64xf32> to vector<2x8x64xf32>
    %18 = vector.shape_cast %17 : vector<2x8x64xf32> to vector<16x64xf32>
    %19 = arith.mulf %13, %18 : vector<16x64xf32>
    %c0_13 = arith.constant 0 : index
    %c0_14 = arith.constant 0 : index
    %20 = vector.load %arg7[%c0_13, %c0_14] : memref<16x64xf32, #tpu.memory_space<vmem>>, vector<16x64xf32>
    tpu.vector_store %arg7[%c0_13, %c0_14], %19 {strides = array<i32>} : memref<16x64xf32, #tpu.memory_space<vmem>>, vector<16x64xf32>,
    return
  }
  func.func @transform_0(%arg0: i32) -> (i32, i32) {
    %c0_i32 = arith.constant 0 : i32
    %c0_i32_0 = arith.constant 0 : i32
    %c0_i32_1 = arith.constant 0 : i32
    return %c0_i32, %c0_i32_0 : i32, i32
  }
  func.func @transform_1(%arg0: i32) -> (i32, i32) {
    %c0_i32 = arith.constant 0 : i32
    %c0_i32_0 = arith.constant 0 : i32
    %c0_i32_1 = arith.constant 0 : i32
    return %c0_i32, %c0_i32_0 : i32, i32
  }
  func.func @transform_2(%arg0: i32) -> (i32, i32) {
    %c0_i32 = arith.constant 0 : i32
    %c0_i32_0 = arith.constant 0 : i32
    %c0_i32_1 = arith.constant 0 : i32
    return %c0_i32, %c0_i32_0 : i32, i32
  }
  func.func @transform_3(%arg0: i32) -> (i32, i32) {
    %c0_i32 = arith.constant 0 : i32
    %c0_i32_0 = arith.constant 0 : i32
    %c0_i32_1 = arith.constant 0 : i32
    return %c0_i32, %c0_i32_0 : i32, i32
  }
  func.func @transform_4(%arg0: i32) -> (i32, i32) {
    %c0_i32 = arith.constant 0 : i32
    %c0_i32_0 = arith.constant 0 : i32
    %c0_i32_1 = arith.constant 0 : i32
    return %c0_i32, %c0_i32_0 : i32, i32
  }
  func.func @transform_5(%arg0: i32) -> (i32, i32) {
    %c0_i32 = arith.constant 0 : i32
    %c0_i32_0 = arith.constant 0 : i32
    %c0_i32_1 = arith.constant 0 : i32
    return %c0_i32, %c0_i32_0 : i32, i32
  }
  func.func @transform_6(%arg0: i32) -> (i32, i32) {
    %c0_i32 = arith.constant 0 : i32
    %c0_i32_0 = arith.constant 0 : i32
    %c0_i32_1 = arith.constant 0 : i32
    return %c0_i32, %c0_i32_0 : i32, i32
  }
}

module attributes {stable_mosaic.version = 11 : i64} {
  func.func @kernel(%arg0: i32, %arg1: memref<16x64xf32, #tpu.memory_space<vmem>>, %arg2: memref<16x32xf32, #tpu.memory_space<vmem>>, %arg3: memref<2x32xf32, #tpu.memory_space<vmem>>, %arg4: memref<64x32xbf16, #tpu.memory_space<vmem>>, %arg5: memref<32x32xbf16, #tpu.memory_space<vmem>>, %arg6: memref<1x32xf32, #tpu.memory_space<vmem>>, %arg7: memref<16x32xf32, #tpu.memory_space<vmem>>) attributes {dimension_semantics = [#tpu.dimension_semantics<arbitrary>], iteration_bounds = array<i64: 1>, scalar_prefetch = 0 : i64, scratch_operands = 0 : i64, tpu.core_type = #tpu.core_type<tc>, window_params = [{pipeline_mode = #tpu.pipeline_mode<synchronous>, transform_indices = @transform_0, window_bounds = array<i64: 16, 64>}, {pipeline_mode = #tpu.pipeline_mode<synchronous>, transform_indices = @transform_1, window_bounds = array<i64: 16, 32>}, {pipeline_mode = #tpu.pipeline_mode<synchronous>, transform_indices = @transform_2, window_bounds = array<i64: 2, 32>}, {pipeline_mode = #tpu.pipeline_mode<synchronous>, transform_indices = @transform_3, window_bounds = array<i64: 64, 32>}, {pipeline_mode = #tpu.pipeline_mode<synchronous>, transform_indices = @transform_4, window_bounds = array<i64: 32, 32>}, {pipeline_mode = #tpu.pipeline_mode<synchronous>, transform_indices = @transform_5, window_bounds = array<i64: 1, 32>}, {pipeline_mode = #tpu.pipeline_mode<synchronous>, transform_indices = @transform_6, window_bounds = array<i64: 16, 32>}]} {
    %c0 = arith.constant 0 : index
    %c0_0 = arith.constant 0 : index
    %0 = vector.load %arg1[%c0, %c0_0] : memref<16x64xf32, #tpu.memory_space<vmem>>, vector<16x64xf32>
    %c0_1 = arith.constant 0 : index
    %c0_2 = arith.constant 0 : index
    %1 = vector.load %arg4[%c0_1, %c0_2] : memref<64x32xbf16, #tpu.memory_space<vmem>>, vector<64x32xbf16>
    %2 = arith.truncf %0 : vector<16x64xf32> to vector<16x64xbf16>
    %cst = arith.constant dense<0.000000e+00> : vector<16x32xf32>
    %3 = tpu.matmul %2, %1, %cst {dimension_numbers = #tpu.dot_dimension_numbers<[1], [0], [0], [1], [0, 0, 1, 1], [], []>} : vector<16x64xbf16>, vector<64x32xbf16>, vector<16x32xf32> -> vector<16x32xf32>
    %c0_3 = arith.constant 0 : index
    %c0_4 = arith.constant 0 : index
    %4 = vector.load %arg2[%c0_3, %c0_4] : memref<16x32xf32, #tpu.memory_space<vmem>>, vector<16x32xf32>
    %c0_5 = arith.constant 0 : index
    %c0_6 = arith.constant 0 : index
    %5 = vector.load %arg5[%c0_5, %c0_6] : memref<32x32xbf16, #tpu.memory_space<vmem>>, vector<32x32xbf16>
    %6 = arith.truncf %4 : vector<16x32xf32> to vector<16x32xbf16>
    %cst_7 = arith.constant dense<0.000000e+00> : vector<16x32xf32>
    %7 = tpu.matmul %6, %5, %cst_7 {dimension_numbers = #tpu.dot_dimension_numbers<[1], [0], [0], [1], [0, 0, 1, 1], [], []>} : vector<16x32xbf16>, vector<32x32xbf16>, vector<16x32xf32> -> vector<16x32xf32>
    %8 = arith.addf %3, %7 : vector<16x32xf32>
    %c0_8 = arith.constant 0 : index
    %c0_9 = arith.constant 0 : index
    %9 = vector.load %arg6[%c0_8, %c0_9] : memref<1x32xf32, #tpu.memory_space<vmem>>, vector<1x32xf32>
    %10 = vector.broadcast %9 : vector<1x32xf32> to vector<16x32xf32>
    %11 = arith.addf %8, %10 : vector<16x32xf32>
    %cst_10 = arith.constant 0.000000e+00 : f32
    %12 = vector.broadcast %cst_10 : f32 to vector<16x32xf32>
    %13 = arith.maximumf %11, %12 : vector<16x32xf32>
    %c0_11 = arith.constant 0 : index
    %c0_12 = arith.constant 0 : index
    %14 = vector.load %arg3[%c0_11, %c0_12] : memref<2x32xf32, #tpu.memory_space<vmem>>, vector<2x32xf32>
    %15 = vector.shape_cast %14 : vector<2x32xf32> to vector<2x1x32xf32>
    %16 = vector.shape_cast %15 : vector<2x1x32xf32> to vector<2x1x32xf32>
    %17 = vector.broadcast %16 : vector<2x1x32xf32> to vector<2x8x32xf32>
    %18 = vector.shape_cast %17 : vector<2x8x32xf32> to vector<16x32xf32>
    %19 = arith.mulf %13, %18 : vector<16x32xf32>
    %c0_13 = arith.constant 0 : index
    %c0_14 = arith.constant 0 : index
    %20 = vector.load %arg7[%c0_13, %c0_14] : memref<16x32xf32, #tpu.memory_space<vmem>>, vector<16x32xf32>
    tpu.vector_store %arg7[%c0_13, %c0_14], %19 {strides = array<i32>} : memref<16x32xf32, #tpu.memory_space<vmem>>, vector<16x32xf32>,
    return
  }
  func.func @transform_0(%arg0: i32) -> (i32, i32) {
    %c0_i32 = arith.constant 0 : i32
    %c0_i32_0 = arith.constant 0 : i32
    %c0_i32_1 = arith.constant 0 : i32
    return %c0_i32, %c0_i32_0 : i32, i32
  }
  func.func @transform_1(%arg0: i32) -> (i32, i32) {
    %c0_i32 = arith.constant 0 : i32
    %c0_i32_0 = arith.constant 0 : i32
    %c0_i32_1 = arith.constant 0 : i32
    return %c0_i32, %c0_i32_0 : i32, i32
  }
  func.func @transform_2(%arg0: i32) -> (i32, i32) {
    %c0_i32 = arith.constant 0 : i32
    %c0_i32_0 = arith.constant 0 : i32
    %c0_i32_1 = arith.constant 0 : i32
    return %c0_i32, %c0_i32_0 : i32, i32
  }
  func.func @transform_3(%arg0: i32) -> (i32, i32) {
    %c0_i32 = arith.constant 0 : i32
    %c0_i32_0 = arith.constant 0 : i32
    %c0_i32_1 = arith.constant 0 : i32
    return %c0_i32, %c0_i32_0 : i32, i32
  }
  func.func @transform_4(%arg0: i32) -> (i32, i32) {
    %c0_i32 = arith.constant 0 : i32
    %c0_i32_0 = arith.constant 0 : i32
    %c0_i32_1 = arith.constant 0 : i32
    return %c0_i32, %c0_i32_0 : i32, i32
  }
  func.func @transform_5(%arg0: i32) -> (i32, i32) {
    %c0_i32 = arith.constant 0 : i32
    %c0_i32_0 = arith.constant 0 : i32
    %c0_i32_1 = arith.constant 0 : i32
    return %c0_i32, %c0_i32_0 : i32, i32
  }
  func.func @transform_6(%arg0: i32) -> (i32, i32) {
    %c0_i32 = arith.constant 0 : i32
    %c0_i32_0 = arith.constant 0 : i32
    %c0_i32_1 = arith.constant 0 : i32
    return %c0_i32, %c0_i32_0 : i32, i32
  }
}

module attributes {stable_mosaic.version = 11 : i64} {
  func.func @kernel(%arg0: i32, %arg1: memref<32x32xf32, #tpu.memory_space<vmem>>, %arg2: memref<2x32xf32, #tpu.memory_space<vmem>>, %arg3: memref<32x32xbf16, #tpu.memory_space<vmem>>, %arg4: memref<1x32xf32, #tpu.memory_space<vmem>>, %arg5: memref<32x32xbf16, #tpu.memory_space<vmem>>, %arg6: memref<1x32xf32, #tpu.memory_space<vmem>>, %arg7: memref<32x32xbf16, #tpu.memory_space<vmem>>, %arg8: memref<1x32xf32, #tpu.memory_space<vmem>>, %arg9: memref<32x32xbf16, #tpu.memory_space<vmem>>, %arg10: memref<1x32xf32, #tpu.memory_space<vmem>>, %arg11: memref<32x128xbf16, #tpu.memory_space<vmem>>, %arg12: memref<1x128xf32, #tpu.memory_space<vmem>>, %arg13: memref<32x128xf32, #tpu.memory_space<vmem>>) attributes {dimension_semantics = [#tpu.dimension_semantics<arbitrary>], iteration_bounds = array<i64: 1>, scalar_prefetch = 0 : i64, scratch_operands = 0 : i64, tpu.core_type = #tpu.core_type<tc>, window_params = [{pipeline_mode = #tpu.pipeline_mode<synchronous>, transform_indices = @transform_0, window_bounds = array<i64: 32, 32>}, {pipeline_mode = #tpu.pipeline_mode<synchronous>, transform_indices = @transform_1, window_bounds = array<i64: 2, 32>}, {pipeline_mode = #tpu.pipeline_mode<synchronous>, transform_indices = @transform_2, window_bounds = array<i64: 32, 32>}, {pipeline_mode = #tpu.pipeline_mode<synchronous>, transform_indices = @transform_3, window_bounds = array<i64: 1, 32>}, {pipeline_mode = #tpu.pipeline_mode<synchronous>, transform_indices = @transform_4, window_bounds = array<i64: 32, 32>}, {pipeline_mode = #tpu.pipeline_mode<synchronous>, transform_indices = @transform_5, window_bounds = array<i64: 1, 32>}, {pipeline_mode = #tpu.pipeline_mode<synchronous>, transform_indices = @transform_6, window_bounds = array<i64: 32, 32>}, {pipeline_mode = #tpu.pipeline_mode<synchronous>, transform_indices = @transform_7, window_bounds = array<i64: 1, 32>}, {pipeline_mode = #tpu.pipeline_mode<synchronous>, transform_indices = @transform_8, window_bounds = array<i64: 32, 32>}, {pipeline_mode = #tpu.pipeline_mode<synchronous>, transform_indices = @transform_9, window_bounds = array<i64: 1, 32>}, {pipeline_mode = #tpu.pipeline_mode<synchronous>, transform_indices = @transform_10, window_bounds = array<i64: 32, 128>}, {pipeline_mode = #tpu.pipeline_mode<synchronous>, transform_indices = @transform_11, window_bounds = array<i64: 1, 128>}, {pipeline_mode = #tpu.pipeline_mode<synchronous>, transform_indices = @transform_12, window_bounds = array<i64: 32, 128>}]} {
    %c0 = arith.constant 0 : index
    %c0_0 = arith.constant 0 : index
    %0 = vector.load %arg1[%c0, %c0_0] : memref<32x32xf32, #tpu.memory_space<vmem>>, vector<32x32xf32>
    %c0_1 = arith.constant 0 : index
    %c0_2 = arith.constant 0 : index
    %1 = vector.load %arg3[%c0_1, %c0_2] : memref<32x32xbf16, #tpu.memory_space<vmem>>, vector<32x32xbf16>
    %2 = arith.truncf %0 : vector<32x32xf32> to vector<32x32xbf16>
    %cst = arith.constant dense<0.000000e+00> : vector<32x32xf32>
    %3 = tpu.matmul %2, %1, %cst {dimension_numbers = #tpu.dot_dimension_numbers<[1], [0], [0], [1], [0, 0, 1, 1], [], []>} : vector<32x32xbf16>, vector<32x32xbf16>, vector<32x32xf32> -> vector<32x32xf32>
    %c0_3 = arith.constant 0 : index
    %c0_4 = arith.constant 0 : index
    %4 = vector.load %arg4[%c0_3, %c0_4] : memref<1x32xf32, #tpu.memory_space<vmem>>, vector<1x32xf32>
    %5 = vector.broadcast %4 : vector<1x32xf32> to vector<32x32xf32>
    %6 = arith.addf %3, %5 : vector<32x32xf32>
    %cst_5 = arith.constant 0.000000e+00 : f32
    %7 = vector.broadcast %cst_5 : f32 to vector<32x32xf32>
    %8 = arith.maximumf %6, %7 : vector<32x32xf32>
    %c0_6 = arith.constant 0 : index
    %c0_7 = arith.constant 0 : index
    %9 = vector.load %arg5[%c0_6, %c0_7] : memref<32x32xbf16, #tpu.memory_space<vmem>>, vector<32x32xbf16>
    %10 = arith.truncf %8 : vector<32x32xf32> to vector<32x32xbf16>
    %cst_8 = arith.constant dense<0.000000e+00> : vector<32x32xf32>
    %11 = tpu.matmul %10, %9, %cst_8 {dimension_numbers = #tpu.dot_dimension_numbers<[1], [0], [0], [1], [0, 0, 1, 1], [], []>} : vector<32x32xbf16>, vector<32x32xbf16>, vector<32x32xf32> -> vector<32x32xf32>
    %c0_9 = arith.constant 0 : index
    %c0_10 = arith.constant 0 : index
    %12 = vector.load %arg6[%c0_9, %c0_10] : memref<1x32xf32, #tpu.memory_space<vmem>>, vector<1x32xf32>
    %13 = vector.broadcast %12 : vector<1x32xf32> to vector<32x32xf32>
    %14 = arith.addf %11, %13 : vector<32x32xf32>
    %cst_11 = arith.constant 0.000000e+00 : f32
    %15 = vector.broadcast %cst_11 : f32 to vector<32x32xf32>
    %16 = arith.maximumf %14, %15 : vector<32x32xf32>
    %c0_12 = arith.constant 0 : index
    %c0_13 = arith.constant 0 : index
    %17 = vector.load %arg2[%c0_12, %c0_13] : memref<2x32xf32, #tpu.memory_space<vmem>>, vector<2x32xf32>
    %18 = vector.shape_cast %17 : vector<2x32xf32> to vector<2x1x32xf32>
    %19 = vector.shape_cast %18 : vector<2x1x32xf32> to vector<2x1x32xf32>
    %20 = vector.broadcast %19 : vector<2x1x32xf32> to vector<2x16x32xf32>
    %21 = vector.shape_cast %20 : vector<2x16x32xf32> to vector<32x32xf32>
    %22 = arith.mulf %16, %21 : vector<32x32xf32>
    %c0_14 = arith.constant 0 : index
    %c0_15 = arith.constant 0 : index
    %23 = vector.load %arg7[%c0_14, %c0_15] : memref<32x32xbf16, #tpu.memory_space<vmem>>, vector<32x32xbf16>
    %24 = arith.truncf %22 : vector<32x32xf32> to vector<32x32xbf16>
    %cst_16 = arith.constant dense<0.000000e+00> : vector<32x32xf32>
    %25 = tpu.matmul %24, %23, %cst_16 {dimension_numbers = #tpu.dot_dimension_numbers<[1], [0], [0], [1], [0, 0, 1, 1], [], []>} : vector<32x32xbf16>, vector<32x32xbf16>, vector<32x32xf32> -> vector<32x32xf32>
    %c0_17 = arith.constant 0 : index
    %c0_18 = arith.constant 0 : index
    %26 = vector.load %arg8[%c0_17, %c0_18] : memref<1x32xf32, #tpu.memory_space<vmem>>, vector<1x32xf32>
    %27 = vector.broadcast %26 : vector<1x32xf32> to vector<32x32xf32>
    %28 = arith.addf %25, %27 : vector<32x32xf32>
    %cst_19 = arith.constant 0.000000e+00 : f32
    %29 = vector.broadcast %cst_19 : f32 to vector<32x32xf32>
    %30 = arith.cmpf oge, %28, %29 : vector<32x32xf32>
    %cst_20 = arith.constant 0.00999999977 : f32
    %31 = vector.broadcast %cst_20 : f32 to vector<32x32xf32>
    %32 = arith.mulf %31, %28 : vector<32x32xf32>
    %33 = arith.select %30, %28, %32 : vector<32x32xi1>, vector<32x32xf32>
    %c0_21 = arith.constant 0 : index
    %c0_22 = arith.constant 0 : index
    %34 = vector.load %arg9[%c0_21, %c0_22] : memref<32x32xbf16, #tpu.memory_space<vmem>>, vector<32x32xbf16>
    %35 = arith.truncf %33 : vector<32x32xf32> to vector<32x32xbf16>
    %cst_23 = arith.constant dense<0.000000e+00> : vector<32x32xf32>
    %36 = tpu.matmul %35, %34, %cst_23 {dimension_numbers = #tpu.dot_dimension_numbers<[1], [0], [0], [1], [0, 0, 1, 1], [], []>} : vector<32x32xbf16>, vector<32x32xbf16>, vector<32x32xf32> -> vector<32x32xf32>
    %c0_24 = arith.constant 0 : index
    %c0_25 = arith.constant 0 : index
    %37 = vector.load %arg10[%c0_24, %c0_25] : memref<1x32xf32, #tpu.memory_space<vmem>>, vector<1x32xf32>
    %38 = vector.broadcast %37 : vector<1x32xf32> to vector<32x32xf32>
    %39 = arith.addf %36, %38 : vector<32x32xf32>
    %cst_26 = arith.constant 0.000000e+00 : f32
    %40 = vector.broadcast %cst_26 : f32 to vector<32x32xf32>
    %41 = arith.cmpf oge, %39, %40 : vector<32x32xf32>
    %cst_27 = arith.constant 0.00999999977 : f32
    %42 = vector.broadcast %cst_27 : f32 to vector<32x32xf32>
    %43 = arith.mulf %42, %39 : vector<32x32xf32>
    %44 = arith.select %41, %39, %43 : vector<32x32xi1>, vector<32x32xf32>
    %c0_28 = arith.constant 0 : index
    %c0_29 = arith.constant 0 : index
    %45 = vector.load %arg11[%c0_28, %c0_29] : memref<32x128xbf16, #tpu.memory_space<vmem>>, vector<32x128xbf16>
    %46 = arith.truncf %44 : vector<32x32xf32> to vector<32x32xbf16>
    %cst_30 = arith.constant dense<0.000000e+00> : vector<32x128xf32>
    %47 = tpu.matmul %46, %45, %cst_30 {dimension_numbers = #tpu.dot_dimension_numbers<[1], [0], [0], [1], [0, 0, 1, 1], [], []>} : vector<32x32xbf16>, vector<32x128xbf16>, vector<32x128xf32> -> vector<32x128xf32>
    %c0_31 = arith.constant 0 : index
    %c0_32 = arith.constant 0 : index
    %48 = vector.load %arg12[%c0_31, %c0_32] : memref<1x128xf32, #tpu.memory_space<vmem>>, vector<1x128xf32>
    %49 = vector.broadcast %48 : vector<1x128xf32> to vector<32x128xf32>
    %50 = arith.addf %47, %49 : vector<32x128xf32>
    %c0_33 = arith.constant 0 : index
    %c0_34 = arith.constant 0 : index
    %51 = vector.load %arg13[%c0_33, %c0_34] : memref<32x128xf32, #tpu.memory_space<vmem>>, vector<32x128xf32>
    tpu.vector_store %arg13[%c0_33, %c0_34], %50 {strides = array<i32>} : memref<32x128xf32, #tpu.memory_space<vmem>>, vector<32x128xf32>,
    return
  }
  func.func @transform_0(%arg0: i32) -> (i32, i32) {
    %c0_i32 = arith.constant 0 : i32
    %c0_i32_0 = arith.constant 0 : i32
    %c0_i32_1 = arith.constant 0 : i32
    return %c0_i32, %c0_i32_0 : i32, i32
  }
  func.func @transform_1(%arg0: i32) -> (i32, i32) {
    %c0_i32 = arith.constant 0 : i32
    %c0_i32_0 = arith.constant 0 : i32
    %c0_i32_1 = arith.constant 0 : i32
    return %c0_i32, %c0_i32_0 : i32, i32
  }
  func.func @transform_2(%arg0: i32) -> (i32, i32) {
    %c0_i32 = arith.constant 0 : i32
    %c0_i32_0 = arith.constant 0 : i32
    %c0_i32_1 = arith.constant 0 : i32
    return %c0_i32, %c0_i32_0 : i32, i32
  }
  func.func @transform_3(%arg0: i32) -> (i32, i32) {
    %c0_i32 = arith.constant 0 : i32
    %c0_i32_0 = arith.constant 0 : i32
    %c0_i32_1 = arith.constant 0 : i32
    return %c0_i32, %c0_i32_0 : i32, i32
  }
  func.func @transform_4(%arg0: i32) -> (i32, i32) {
    %c0_i32 = arith.constant 0 : i32
    %c0_i32_0 = arith.constant 0 : i32
    %c0_i32_1 = arith.constant 0 : i32
    return %c0_i32, %c0_i32_0 : i32, i32
  }
  func.func @transform_5(%arg0: i32) -> (i32, i32) {
    %c0_i32 = arith.constant 0 : i32
    %c0_i32_0 = arith.constant 0 : i32
    %c0_i32_1 = arith.constant 0 : i32
    return %c0_i32, %c0_i32_0 : i32, i32
  }
  func.func @transform_6(%arg0: i32) -> (i32, i32) {
    %c0_i32 = arith.constant 0 : i32
    %c0_i32_0 = arith.constant 0 : i32
    %c0_i32_1 = arith.constant 0 : i32
    return %c0_i32, %c0_i32_0 : i32, i32
  }
  func.func @transform_7(%arg0: i32) -> (i32, i32) {
    %c0_i32 = arith.constant 0 : i32
    %c0_i32_0 = arith.constant 0 : i32
    %c0_i32_1 = arith.constant 0 : i32
    return %c0_i32, %c0_i32_0 : i32, i32
  }
  func.func @transform_8(%arg0: i32) -> (i32, i32) {
    %c0_i32 = arith.constant 0 : i32
    %c0_i32_0 = arith.constant 0 : i32
    %c0_i32_1 = arith.constant 0 : i32
    return %c0_i32, %c0_i32_0 : i32, i32
  }
  func.func @transform_9(%arg0: i32) -> (i32, i32) {
    %c0_i32 = arith.constant 0 : i32
    %c0_i32_0 = arith.constant 0 : i32
    %c0_i32_1 = arith.constant 0 : i32
    return %c0_i32, %c0_i32_0 : i32, i32
  }
  func.func @transform_10(%arg0: i32) -> (i32, i32) {
    %c0_i32 = arith.constant 0 : i32
    %c0_i32_0 = arith.constant 0 : i32
    %c0_i32_1 = arith.constant 0 : i32
    return %c0_i32, %c0_i32_0 : i32, i32
  }
  func.func @transform_11(%arg0: i32) -> (i32, i32) {
    %c0_i32 = arith.constant 0 : i32
    %c0_i32_0 = arith.constant 0 : i32
    %c0_i32_1 = arith.constant 0 : i32
    return %c0_i32, %c0_i32_0 : i32, i32
  }
  func.func @transform_12(%arg0: i32) -> (i32, i32) {
    %c0_i32 = arith.constant 0 : i32
    %c0_i32_0 = arith.constant 0 : i32
    %c0_i32_1 = arith.constant 0 : i32
    return %c0_i32, %c0_i32_0 : i32, i32
  }
}

</mosaic_0001>

<llo_original>
// kernel: custom-call.20
$region0: #{custom-call.20}
  %s0 = inlined_call_operand.vmem [shape: f32[2,16], index: 0, kind: output, shape index: {}]

// kernel: custom-call.21
$region0: #{custom-call.21}
  %s0 = inlined_call_operand.vmem [shape: f32[2,8], index: 0, kind: output, shape index: {}]

// kernel: model_apply.8
$region0: #{model_apply.8}
  #allocation0 [shape = 'u32[]', space=smem, size = 0x4, offset = 0x4, fixed_abs, tag = 'smem constant byte address 0x4 - core index']
  #allocation1 [shape = 'u32[144,128]{1,0:T(1,128)}', space=vmem, size = 0x12000, scoped, tag = 'internal scratch']
  %s0 = inlined_call_operand.vmem [shape: f32[128,3], index: 0, kind: input, shape index: {}]
  %s1 = inlined_call_operand.vmem [shape: f32[16,8], index: 1, kind: input, shape index: {}]
  %s2 = inlined_call_operand.vmem [shape: f32[3,16], index: 2, kind: input, shape index: {}]
  %s3 = inlined_call_operand.vmem [shape: f32[1,16], index: 3, kind: input, shape index: {}]
  %s4 = inlined_call_operand.vmem [shape: bf16[16,16], index: 4, kind: input, shape index: {}]
  %s5 = inlined_call_operand.vmem [shape: f32[1,16], index: 5, kind: input, shape index: {}]
  %s6 = inlined_call_operand.vmem [shape: bf16[16,32], index: 6, kind: input, shape index: {}]
  %s7 = inlined_call_operand.vmem [shape: f32[1,32], index: 7, kind: input, shape index: {}]
  %s8 = inlined_call_operand.vmem [shape: f32[16,32], index: 8, kind: output, shape index: {}]
  %s9 = sld [smem:[#allocation0]]
  $region42: #{model_apply.8} parent=0
    _
  %s11 = ssub.s32 1, %s9
  %s12 = scalar_select 0, %s11, %s9
  // Predicated region
  $region2: #{model_apply.8} parent=0 // pred_check
    _
  $region3: #{model_apply.8} parent=0 // pred_check_branch
    %14 = sbr.rel (0) target = $region5
  $region4: #{model_apply.8} parent=0 // pred_region
    _
  $region5: #{model_apply.8} parent=0 // pred_fallthru
    _
  // Predicated region
  $region6: #{model_apply.8} parent=0 // pred_check
    _
  $region7: #{model_apply.8} parent=0 // pred_check_branch
    %16 = sbr.rel (0) target = $region9
  $region8: #{model_apply.8} parent=0 // pred_region
    _
  $region9: #{model_apply.8} parent=0 // pred_fallthru
    _
  // Predicated region
  $region10: #{model_apply.8} parent=0 // pred_check
    _
  $region11: #{model_apply.8} parent=0 // pred_check_branch
    %18 = sbr.rel (0) target = $region13
  $region12: #{model_apply.8} parent=0 // pred_region
    _
  $region13: #{model_apply.8} parent=0 // pred_fallthru
    _
  // Predicated region
  $region14: #{model_apply.8} parent=0 // pred_check
    _
  $region15: #{model_apply.8} parent=0 // pred_check_branch
    %20 = sbr.rel (0) target = $region17
  $region16: #{model_apply.8} parent=0 // pred_region
    _
  $region17: #{model_apply.8} parent=0 // pred_fallthru
    _
  // Predicated region
  $region18: #{model_apply.8} parent=0 // pred_check
    _
  $region19: #{model_apply.8} parent=0 // pred_check_branch
    %22 = sbr.rel (0) target = $region21
  $region20: #{model_apply.8} parent=0 // pred_region
    _
  $region21: #{model_apply.8} parent=0 // pred_fallthru
    _
  // Predicated region
  $region22: #{model_apply.8} parent=0 // pred_check
    _
  $region23: #{model_apply.8} parent=0 // pred_check_branch
    %24 = sbr.rel (0) target = $region25
  $region24: #{model_apply.8} parent=0 // pred_region
    _
  $region25: #{model_apply.8} parent=0 // pred_fallthru
    _
  // Predicated region
  $region26: #{model_apply.8} parent=0 // pred_check
    _
  $region27: #{model_apply.8} parent=0 // pred_check_branch
    %26 = sbr.rel (0) target = $region29
  $region28: #{model_apply.8} parent=0 // pred_region
    _
  $region29: #{model_apply.8} parent=0 // pred_fallthru
    _
  // Predicated region
  $region30: #{model_apply.8} parent=0 // pred_check
    _
  $region31: #{model_apply.8} parent=0 // pred_check_branch
    %28 = sbr.rel (0) target = $region33
  $region32: #{model_apply.8} parent=0 // pred_region
    _
  $region33: #{model_apply.8} parent=0 // pred_fallthru
    _
  %v30 = vld [vmem:[%s0] sm:$0xff]
  %v31 = vld [vmem:[%s0 + $0x8] sm:$0xff]
  %v32 = vld [vmem:[%s0 + $0x10] sm:$0xff]
  %v33 = vld [vmem:[%s0 + $0x18] sm:$0xff]
  %v34 = vld [vmem:[%s0 + $0x20] sm:$0xff]
  %v35 = vld [vmem:[%s0 + $0x28] sm:$0xff]
  %v36 = vld [vmem:[%s0 + $0x30] sm:$0xff]
  %v37 = vld [vmem:[%s0 + $0x38] sm:$0xff]
  %v38 = vld [vmem:[%s0 + $0x40] sm:$0xff]
  %v39 = vld [vmem:[%s0 + $0x48] sm:$0xff]
  %v40 = vld [vmem:[%s0 + $0x50] sm:$0xff]
  %v41 = vld [vmem:[%s0 + $0x58] sm:$0xff]
  %v42 = vld [vmem:[%s0 + $0x60] sm:$0xff]
  %v43 = vld [vmem:[%s0 + $0x68] sm:$0xff]
  %v44 = vld [vmem:[%s0 + $0x70] sm:$0xff]
  %v45 = vld [vmem:[%s0 + $0x78] sm:$0xff]
  %v46 = vld [vmem:[%s2] sm:$0x7]
  %48 = vset.pattern.permute.xlu0 0
  %49 = vperm.xlu0 %48, %v30
  %v50 = vpop.permute.xlu0 %49
  %53 = vset.pattern.permute.xlu0 0
  %54 = vperm.xlu0 %53, %v31
  %v55 = vpop.permute.xlu0 %54
  %58 = vset.pattern.permute.xlu0 0
  %59 = vperm.xlu0 %58, %v32
  %v60 = vpop.permute.xlu0 %59
  %63 = vset.pattern.permute.xlu0 0
  %64 = vperm.xlu0 %63, %v33
  %v65 = vpop.permute.xlu0 %64
  %68 = vset.pattern.permute.xlu0 0
  %69 = vperm.xlu0 %68, %v34
  %v70 = vpop.permute.xlu0 %69
  %73 = vset.pattern.permute.xlu0 0
  %74 = vperm.xlu0 %73, %v35
  %v75 = vpop.permute.xlu0 %74
  %78 = vset.pattern.permute.xlu0 0
  %79 = vperm.xlu0 %78, %v36
  %v80 = vpop.permute.xlu0 %79
  %83 = vset.pattern.permute.xlu0 0
  %84 = vperm.xlu0 %83, %v37
  %v85 = vpop.permute.xlu0 %84
  %88 = vset.pattern.permute.xlu0 0
  %89 = vperm.xlu0 %88, %v38
  %v90 = vpop.permute.xlu0 %89
  %93 = vset.pattern.permute.xlu0 0
  %94 = vperm.xlu0 %93, %v39
  %v95 = vpop.permute.xlu0 %94
  %98 = vset.pattern.permute.xlu0 0
  %99 = vperm.xlu0 %98, %v40
  %v100 = vpop.permute.xlu0 %99
  %103 = vset.pattern.permute.xlu0 0
  %104 = vperm.xlu0 %103, %v41
  %v105 = vpop.permute.xlu0 %104
  %108 = vset.pattern.permute.xlu0 0
  %109 = vperm.xlu0 %108, %v42
  %v110 = vpop.permute.xlu0 %109
  %113 = vset.pattern.permute.xlu0 0
  %114 = vperm.xlu0 %113, %v43
  %v115 = vpop.permute.xlu0 %114
  %118 = vset.pattern.permute.xlu0 0
  %119 = vperm.xlu0 %118, %v44
  %v120 = vpop.permute.xlu0 %119
  %123 = vset.pattern.permute.xlu0 0
  %124 = vperm.xlu0 %123, %v45
  %v125 = vpop.permute.xlu0 %124
  %v127 = vlaneseq
  %v128 = vshrl.u32 %v127, 7
  %v129 = vsub.s32 0, %v128
  %v130 = vrot.slane %v46, %v129
  %v131 = vmul.f32 %v50, %v130
  %v132 = vmul.f32 %v55, %v130
  %v133 = vmul.f32 %v60, %v130
  %v134 = vmul.f32 %v65, %v130
  %v135 = vmul.f32 %v70, %v130
  %v136 = vmul.f32 %v75, %v130
  %v137 = vmul.f32 %v80, %v130
  %v138 = vmul.f32 %v85, %v130
  %v139 = vmul.f32 %v90, %v130
  %v140 = vmul.f32 %v95, %v130
  %v141 = vmul.f32 %v100, %v130
  %v142 = vmul.f32 %v105, %v130
  %v143 = vmul.f32 %v110, %v130
  %v144 = vmul.f32 %v115, %v130
  %v145 = vmul.f32 %v120, %v130
  %v146 = vmul.f32 %v125, %v130
  %147 = vset.pattern.permute.xlu0 1
  %148 = vperm.xlu0 %147, %v30
  %v149 = vpop.permute.xlu0 %148
  %151 = vset.pattern.permute.xlu0 1
  %152 = vperm.xlu0 %151, %v31
  %v153 = vpop.permute.xlu0 %152
  %155 = vset.pattern.permute.xlu0 1
  %156 = vperm.xlu0 %155, %v32
  %v157 = vpop.permute.xlu0 %156
  %159 = vset.pattern.permute.xlu0 1
  %160 = vperm.xlu0 %159, %v33
  %v161 = vpop.permute.xlu0 %160
  %163 = vset.pattern.permute.xlu0 1
  %164 = vperm.xlu0 %163, %v34
  %v165 = vpop.permute.xlu0 %164
  %167 = vset.pattern.permute.xlu0 1
  %168 = vperm.xlu0 %167, %v35
  %v169 = vpop.permute.xlu0 %168
  %171 = vset.pattern.permute.xlu0 1
  %172 = vperm.xlu0 %171, %v36
  %v173 = vpop.permute.xlu0 %172
  %175 = vset.pattern.permute.xlu0 1
  %176 = vperm.xlu0 %175, %v37
  %v177 = vpop.permute.xlu0 %176
  %179 = vset.pattern.permute.xlu0 1
  %180 = vperm.xlu0 %179, %v38
  %v181 = vpop.permute.xlu0 %180
  %183 = vset.pattern.permute.xlu0 1
  %184 = vperm.xlu0 %183, %v39
  %v185 = vpop.permute.xlu0 %184
  %187 = vset.pattern.permute.xlu0 1
  %188 = vperm.xlu0 %187, %v40
  %v189 = vpop.permute.xlu0 %188
  %191 = vset.pattern.permute.xlu0 1
  %192 = vperm.xlu0 %191, %v41
  %v193 = vpop.permute.xlu0 %192
  %195 = vset.pattern.permute.xlu0 1
  %196 = vperm.xlu0 %195, %v42
  %v197 = vpop.permute.xlu0 %196
  %199 = vset.pattern.permute.xlu0 1
  %200 = vperm.xlu0 %199, %v43
  %v201 = vpop.permute.xlu0 %200
  %203 = vset.pattern.permute.xlu0 1
  %204 = vperm.xlu0 %203, %v44
  %v205 = vpop.permute.xlu0 %204
  %207 = vset.pattern.permute.xlu0 1
  %208 = vperm.xlu0 %207, %v45
  %v209 = vpop.permute.xlu0 %208
  %v211 = vlaneseq
  %v212 = vshrl.u32 %v211, 7
  %v213 = vsub.s32 1, %v212
  %v214 = vrot.slane %v46, %v213
  %v215 = vmul.f32 %v149, %v214
  %v216 = vmul.f32 %v153, %v214
  %v217 = vmul.f32 %v157, %v214
  %v218 = vmul.f32 %v161, %v214
  %v219 = vmul.f32 %v165, %v214
  %v220 = vmul.f32 %v169, %v214
  %v221 = vmul.f32 %v173, %v214
  %v222 = vmul.f32 %v177, %v214
  %v223 = vmul.f32 %v181, %v214
  %v224 = vmul.f32 %v185, %v214
  %v225 = vmul.f32 %v189, %v214
  %v226 = vmul.f32 %v193, %v214
  %v227 = vmul.f32 %v197, %v214
  %v228 = vmul.f32 %v201, %v214
  %v229 = vmul.f32 %v205, %v214
  %v230 = vmul.f32 %v209, %v214
  %v231 = vadd.f32 %v131, %v215
  %v232 = vadd.f32 %v132, %v216
  %v233 = vadd.f32 %v133, %v217
  %v234 = vadd.f32 %v134, %v218
  %v235 = vadd.f32 %v135, %v219
  %v236 = vadd.f32 %v136, %v220
  %v237 = vadd.f32 %v137, %v221
  %v238 = vadd.f32 %v138, %v222
  %v239 = vadd.f32 %v139, %v223
  %v240 = vadd.f32 %v140, %v224
  %v241 = vadd.f32 %v141, %v225
  %v242 = vadd.f32 %v142, %v226
  %v243 = vadd.f32 %v143, %v227
  %v244 = vadd.f32 %v144, %v228
  %v245 = vadd.f32 %v145, %v229
  %v246 = vadd.f32 %v146, %v230
  %247 = vset.pattern.permute.xlu0 2
  %248 = vperm.xlu0 %247, %v30
  %v249 = vpop.permute.xlu0 %248
  %251 = vset.pattern.permute.xlu0 2
  %252 = vperm.xlu0 %251, %v31
  %v253 = vpop.permute.xlu0 %252
  %255 = vset.pattern.permute.xlu0 2
  %256 = vperm.xlu0 %255, %v32
  %v257 = vpop.permute.xlu0 %256
  %259 = vset.pattern.permute.xlu0 2
  %260 = vperm.xlu0 %259, %v33
  %v261 = vpop.permute.xlu0 %260
  %263 = vset.pattern.permute.xlu0 2
  %264 = vperm.xlu0 %263, %v34
  %v265 = vpop.permute.xlu0 %264
  %267 = vset.pattern.permute.xlu0 2
  %268 = vperm.xlu0 %267, %v35
  %v269 = vpop.permute.xlu0 %268
  %271 = vset.pattern.permute.xlu0 2
  %272 = vperm.xlu0 %271, %v36
  %v273 = vpop.permute.xlu0 %272
  %275 = vset.pattern.permute.xlu0 2
  %276 = vperm.xlu0 %275, %v37
  %v277 = vpop.permute.xlu0 %276
  %279 = vset.pattern.permute.xlu0 2
  %280 = vperm.xlu0 %279, %v38
  %v281 = vpop.permute.xlu0 %280
  %283 = vset.pattern.permute.xlu0 2
  %284 = vperm.xlu0 %283, %v39
  %v285 = vpop.permute.xlu0 %284
  %287 = vset.pattern.permute.xlu0 2
  %288 = vperm.xlu0 %287, %v40
  %v289 = vpop.permute.xlu0 %288
  %291 = vset.pattern.permute.xlu0 2
  %292 = vperm.xlu0 %291, %v41
  %v293 = vpop.permute.xlu0 %292
  %295 = vset.pattern.permute.xlu0 2
  %296 = vperm.xlu0 %295, %v42
  %v297 = vpop.permute.xlu0 %296
  %299 = vset.pattern.permute.xlu0 2
  %300 = vperm.xlu0 %299, %v43
  %v301 = vpop.permute.xlu0 %300
  %303 = vset.pattern.permute.xlu0 2
  %304 = vperm.xlu0 %303, %v44
  %v305 = vpop.permute.xlu0 %304
  %307 = vset.pattern.permute.xlu0 2
  %308 = vperm.xlu0 %307, %v45
  %v309 = vpop.permute.xlu0 %308
  %v311 = vlaneseq
  %v312 = vshrl.u32 %v311, 7
  %v313 = vsub.s32 2, %v312
  %v314 = vrot.slane %v46, %v313
  %v315 = vmul.f32 %v249, %v314
  %v316 = vmul.f32 %v253, %v314
  %v317 = vmul.f32 %v257, %v314
  %v318 = vmul.f32 %v261, %v314
  %v319 = vmul.f32 %v265, %v314
  %v320 = vmul.f32 %v269, %v314
  %v321 = vmul.f32 %v273, %v314
  %v322 = vmul.f32 %v277, %v314
  %v323 = vmul.f32 %v281, %v314
  %v324 = vmul.f32 %v285, %v314
  %v325 = vmul.f32 %v289, %v314
  %v326 = vmul.f32 %v293, %v314
  %v327 = vmul.f32 %v297, %v314
  %v328 = vmul.f32 %v301, %v314
  %v329 = vmul.f32 %v305, %v314
  %v330 = vmul.f32 %v309, %v314
  %v331 = vadd.f32 %v231, %v315
  %v332 = vadd.f32 %v232, %v316
  %v333 = vadd.f32 %v233, %v317
  %v334 = vadd.f32 %v234, %v318
  %v335 = vadd.f32 %v235, %v319
  %v336 = vadd.f32 %v236, %v320
  %v337 = vadd.f32 %v237, %v321
  %v338 = vadd.f32 %v238, %v322
  %v339 = vadd.f32 %v239, %v323
  %v340 = vadd.f32 %v240, %v324
  %v341 = vadd.f32 %v241, %v325
  %v342 = vadd.f32 %v242, %v326
  %v343 = vadd.f32 %v243, %v327
  %v344 = vadd.f32 %v244, %v328
  %v345 = vadd.f32 %v245, %v329
  %v346 = vadd.f32 %v246, %v330
  %v347 = vld [vmem:[%s3] sm:$0x1]
  %v349 = vlaneseq
  %v350 = vshrl.u32 %v349, 7
  %v351 = vsub.s32 0, %v350
  %v352 = vrot.slane %v347, %v351
  %v354 = vadd.f32 %v331, %v352
  %v355 = vadd.f32 %v332, %v352
  %v356 = vadd.f32 %v333, %v352
  %v357 = vadd.f32 %v334, %v352
  %v358 = vadd.f32 %v335, %v352
  %v359 = vadd.f32 %v336, %v352
  %v360 = vadd.f32 %v337, %v352
  %v361 = vadd.f32 %v338, %v352
  %v362 = vadd.f32 %v339, %v352
  %v363 = vadd.f32 %v340, %v352
  %v364 = vadd.f32 %v341, %v352
  %v365 = vadd.f32 %v342, %v352
  %v366 = vadd.f32 %v343, %v352
  %v367 = vadd.f32 %v344, %v352
  %v368 = vadd.f32 %v345, %v352
  %v369 = vadd.f32 %v346, %v352
  %v370 = vmax.f32 %v354, 0.0
  %v371 = vmax.f32 %v355, 0.0
  %v372 = vmax.f32 %v356, 0.0
  %v373 = vmax.f32 %v357, 0.0
  %v374 = vmax.f32 %v358, 0.0
  %v375 = vmax.f32 %v359, 0.0
  %v376 = vmax.f32 %v360, 0.0
  %v377 = vmax.f32 %v361, 0.0
  %v378 = vmax.f32 %v362, 0.0
  %v379 = vmax.f32 %v363, 0.0
  %v380 = vmax.f32 %v364, 0.0
  %v381 = vmax.f32 %v365, 0.0
  %v382 = vmax.f32 %v366, 0.0
  %v383 = vmax.f32 %v367, 0.0
  %v384 = vmax.f32 %v368, 0.0
  %v385 = vmax.f32 %v369, 0.0
  %v386 = vld [vmem:[%s4] sm:$0xf]
  %v387 = vld [vmem:[%s4 + $0x4] sm:$0xf]
  %v388 = vpack.c.bf16 %v371, %v370
  %v389 = vpack.c.bf16 %v373, %v372
  %v390 = vpack.c.bf16 %v375, %v374
  %v391 = vpack.c.bf16 %v377, %v376
  %v392 = vpack.c.bf16 %v379, %v378
  %v393 = vpack.c.bf16 %v381, %v380
  %v394 = vpack.c.bf16 %v383, %v382
  %v395 = vpack.c.bf16 %v385, %v384
  %v396 = vld [vmem:[%s5] sm:$0x1]
  %v398 = vlaneseq
  %v399 = vshrl.u32 %v398, 7
  %v400 = vsub.s32 0, %v399
  %v401 = vrot.slane %v396, %v400
  %v405 = vunpack.c.l.b16 %v386
  %v406 = vunpack.c.l.b16 %v387
  %v407 = vpack.c.b16 %v406, %v405
  %vm409 = vcmask 130048
  %v411 = vsel %vm409, %v388, 0
  %v414 = vsel %vm409, %v389, 0
  %v417 = vsel %vm409, %v390, 0
  %v420 = vsel %vm409, %v391, 0
  %v423 = vsel %vm409, %v392, 0
  %v426 = vsel %vm409, %v393, 0
  %v429 = vsel %vm409, %v394, 0
  %v432 = vsel %vm409, %v395, 0
  %434 = vmatprep.subr.bf16.mxu0 0
  %435 = vmatpush1.bf16.msra.mxu0 %v407
  %436 = vmatprep.subr.bf16.mxu0 0
  %437 = vmatpush1.bf16.msra.mxu0 0
  %438 = vmatprep.subr.bf16.mxu0 0
  %439 = vmatpush1.bf16.msra.mxu0 0
  %440 = vmatprep.subr.bf16.mxu0 0
  %441 = vmatpush1.bf16.msra.mxu0 0
  %442 = vmatprep.subr.bf16.mxu0 0
  %443 = vmatpush1.bf16.msra.mxu0 0
  %444 = vmatprep.subr.bf16.mxu0 0
  %445 = vmatpush1.bf16.msra.mxu0 0
  %446 = vmatprep.subr.bf16.mxu0 0
  %447 = vmatpush1.bf16.msra.mxu0 0
  %448 = vmatprep.subr.bf16.mxu0 0
  %449 = vmatpush1.bf16.msra.mxu0 0
  %450 = vmatprep.subr.bf16.mxu0 0
  %451 = vmatpush1.bf16.msra.mxu0 0
  %452 = vmatprep.subr.bf16.mxu0 0
  %453 = vmatpush1.bf16.msra.mxu0 0
  %454 = vmatprep.subr.bf16.mxu0 0
  %455 = vmatpush1.bf16.msra.mxu0 0
  %456 = vmatprep.subr.bf16.mxu0 0
  %457 = vmatpush1.bf16.msra.mxu0 0
  %458 = vmatprep.subr.bf16.mxu0 0
  %459 = vmatpush1.bf16.msra.mxu0 0
  %460 = vmatprep.subr.bf16.mxu0 0
  %461 = vmatpush1.bf16.msra.mxu0 0
  %462 = vmatprep.subr.bf16.mxu0 0
  %463 = vmatpush1.bf16.msra.mxu0 0
  %464 = vmatprep.subr.bf16.mxu0 0
  %465 = vmatpush1.bf16.msra.mxu0 0
  %466 = vmatprep.mubr.bf16.mxu0 0
  %467 = vmatmul.mubr.bf16.gmra.mrb[0].mxu0 %v411
  %v468 = vpop.f32.mrb[0].mxu0
  %v469 = vadd.f32 %v401, %v468
  %v470 = vpop.f32.mrb[0].mxu0
  %v471 = vpop.f32.mrb[0].mxu0
  %v472 = vadd.f32 %v401, %v471
  %v473 = vpop.f32.mrb[0].mxu0
  %474 = vmatprep.mubr.bf16.mxu0 0
  %475 = vmatmul.mubr.bf16.gmra.mrb[0].mxu0 %v414
  %v476 = vpop.f32.mrb[0].mxu0
  %v477 = vadd.f32 %v401, %v476
  %v478 = vpop.f32.mrb[0].mxu0
  %v479 = vpop.f32.mrb[0].mxu0
  %v480 = vadd.f32 %v401, %v479
  %v481 = vpop.f32.mrb[0].mxu0
  %482 = vmatprep.mubr.bf16.mxu0 0
  %483 = vmatmul.mubr.bf16.gmra.mrb[0].mxu0 %v417
  %v484 = vpop.f32.mrb[0].mxu0
  %v485 = vadd.f32 %v401, %v484
  %v486 = vpop.f32.mrb[0].mxu0
  %v487 = vpop.f32.mrb[0].mxu0
  %v488 = vadd.f32 %v401, %v487
  %v489 = vpop.f32.mrb[0].mxu0
  %490 = vmatprep.mubr.bf16.mxu0 0
  %491 = vmatmul.mubr.bf16.gmra.mrb[0].mxu0 %v420
  %v492 = vpop.f32.mrb[0].mxu0
  %v493 = vadd.f32 %v401, %v492
  %v494 = vpop.f32.mrb[0].mxu0
  %v495 = vpop.f32.mrb[0].mxu0
  %v496 = vadd.f32 %v401, %v495
  %v497 = vpop.f32.mrb[0].mxu0
  %498 = vmatprep.mubr.bf16.mxu0 0
  %499 = vmatmul.mubr.bf16.gmra.mrb[0].mxu0 %v423
  %v500 = vpop.f32.mrb[0].mxu0
  %v501 = vadd.f32 %v401, %v500
  %v502 = vpop.f32.mrb[0].mxu0
  %v503 = vpop.f32.mrb[0].mxu0
  %v504 = vadd.f32 %v401, %v503
  %v505 = vpop.f32.mrb[0].mxu0
  %506 = vmatprep.mubr.bf16.mxu0 0
  %507 = vmatmul.mubr.bf16.gmra.mrb[0].mxu0 %v426
  %v508 = vpop.f32.mrb[0].mxu0
  %v509 = vadd.f32 %v401, %v508
  %v510 = vpop.f32.mrb[0].mxu0
  %v511 = vpop.f32.mrb[0].mxu0
  %v512 = vadd.f32 %v401, %v511
  %v513 = vpop.f32.mrb[0].mxu0
  %514 = vmatprep.mubr.bf16.mxu0 0
  %515 = vmatmul.mubr.bf16.gmra.mrb[0].mxu0 %v429
  %v516 = vpop.f32.mrb[0].mxu0
  %v517 = vadd.f32 %v401, %v516
  %v518 = vpop.f32.mrb[0].mxu0
  %v519 = vpop.f32.mrb[0].mxu0
  %v520 = vadd.f32 %v401, %v519
  %v521 = vpop.f32.mrb[0].mxu0
  %522 = vmatprep.mubr.bf16.mxu0 0
  %523 = vmatmul.mubr.bf16.gmra.mrb[0].mxu0 %v432
  %v524 = vpop.f32.mrb[0].mxu0
  %v525 = vadd.f32 %v401, %v524
  %v526 = vpop.f32.mrb[0].mxu0
  %v527 = vpop.f32.mrb[0].mxu0
  %v528 = vadd.f32 %v401, %v527
  %v529 = vpop.f32.mrb[0].mxu0
  %530 = vdwg.mxu0
  %v531 = vmax.f32 %v469, 0.0
  %v532 = vmax.f32 %v472, 0.0
  %v533 = vmax.f32 %v477, 0.0
  %v534 = vmax.f32 %v480, 0.0
  %v535 = vmax.f32 %v485, 0.0
  %v536 = vmax.f32 %v488, 0.0
  %v537 = vmax.f32 %v493, 0.0
  %v538 = vmax.f32 %v496, 0.0
  %v539 = vmax.f32 %v501, 0.0
  %v540 = vmax.f32 %v504, 0.0
  %v541 = vmax.f32 %v509, 0.0
  %v542 = vmax.f32 %v512, 0.0
  %v543 = vmax.f32 %v517, 0.0
  %v544 = vmax.f32 %v520, 0.0
  %v545 = vmax.f32 %v525, 0.0
  %v546 = vmax.f32 %v528, 0.0
  %v547 = vld [vmem:[%s6] sm:$0xf]
  %v548 = vld [vmem:[%s6 + $0x4] sm:$0xf]
  %v549 = vpack.c.bf16 %v532, %v531
  %v550 = vpack.c.bf16 %v534, %v533
  %v551 = vpack.c.bf16 %v536, %v535
  %v552 = vpack.c.bf16 %v538, %v537
  %v553 = vpack.c.bf16 %v540, %v539
  %v554 = vpack.c.bf16 %v542, %v541
  %v555 = vpack.c.bf16 %v544, %v543
  %v556 = vpack.c.bf16 %v546, %v545
  %v557 = vld [vmem:[%s7] sm:$0x1]
  %v559 = vlaneseq
  %v560 = vshrl.u32 %v559, 7
  %v561 = vsub.s32 0, %v560
  %v562 = vrot.slane %v557, %v561
  %v566 = vunpack.c.l.b16 %v547
  %v567 = vunpack.c.l.b16 %v548
  %v568 = vpack.c.b16 %v567, %v566
  %v571 = vsel %vm409, %v549, 0
  %v574 = vsel %vm409, %v550, 0
  %v577 = vsel %vm409, %v551, 0
  %v580 = vsel %vm409, %v552, 0
  %v583 = vsel %vm409, %v553, 0
  %v586 = vsel %vm409, %v554, 0
  %v589 = vsel %vm409, %v555, 0
  %v592 = vsel %vm409, %v556, 0
  %594 = vmatprep.subr.bf16.mxu0 0
  %595 = vmatpush1.bf16.msra.mxu0 %v568
  %596 = vmatprep.subr.bf16.mxu0 0
  %597 = vmatpush1.bf16.msra.mxu0 0
  %598 = vmatprep.subr.bf16.mxu0 0
  %599 = vmatpush1.bf16.msra.mxu0 0
  %600 = vmatprep.subr.bf16.mxu0 0
  %601 = vmatpush1.bf16.msra.mxu0 0
  %602 = vmatprep.subr.bf16.mxu0 0
  %603 = vmatpush1.bf16.msra.mxu0 0
  %604 = vmatprep.subr.bf16.mxu0 0
  %605 = vmatpush1.bf16.msra.mxu0 0
  %606 = vmatprep.subr.bf16.mxu0 0
  %607 = vmatpush1.bf16.msra.mxu0 0
  %608 = vmatprep.subr.bf16.mxu0 0
  %609 = vmatpush1.bf16.msra.mxu0 0
  %610 = vmatprep.subr.bf16.mxu0 0
  %611 = vmatpush1.bf16.msra.mxu0 0
  %612 = vmatprep.subr.bf16.mxu0 0
  %613 = vmatpush1.bf16.msra.mxu0 0
  %614 = vmatprep.subr.bf16.mxu0 0
  %615 = vmatpush1.bf16.msra.mxu0 0
  %616 = vmatprep.subr.bf16.mxu0 0
  %617 = vmatpush1.bf16.msra.mxu0 0
  %618 = vmatprep.subr.bf16.mxu0 0
  %619 = vmatpush1.bf16.msra.mxu0 0
  %620 = vmatprep.subr.bf16.mxu0 0
  %621 = vmatpush1.bf16.msra.mxu0 0
  %622 = vmatprep.subr.bf16.mxu0 0
  %623 = vmatpush1.bf16.msra.mxu0 0
  %624 = vmatprep.subr.bf16.mxu0 0
  %625 = vmatpush1.bf16.msra.mxu0 0
  %626 = vmatprep.mubr.bf16.mxu0 0
  %627 = vmatmul.mubr.bf16.gmra.mrb[0].mxu0 %v571
  %v628 = vpop.f32.mrb[0].mxu0
  %v629 = vadd.f32 %v562, %v628
  %v630 = vpop.f32.mrb[0].mxu0
  %v631 = vpop.f32.mrb[0].mxu0
  %v632 = vadd.f32 %v562, %v631
  %v633 = vpop.f32.mrb[0].mxu0
  %634 = vmatprep.mubr.bf16.mxu0 0
  %635 = vmatmul.mubr.bf16.gmra.mrb[0].mxu0 %v574
  %v636 = vpop.f32.mrb[0].mxu0
  %v637 = vadd.f32 %v562, %v636
  %v638 = vpop.f32.mrb[0].mxu0
  %v639 = vpop.f32.mrb[0].mxu0
  %v640 = vadd.f32 %v562, %v639
  %v641 = vpop.f32.mrb[0].mxu0
  %642 = vmatprep.mubr.bf16.mxu0 0
  %643 = vmatmul.mubr.bf16.gmra.mrb[0].mxu0 %v577
  %v644 = vpop.f32.mrb[0].mxu0
  %v645 = vadd.f32 %v562, %v644
  %v646 = vpop.f32.mrb[0].mxu0
  %v647 = vpop.f32.mrb[0].mxu0
  %v648 = vadd.f32 %v562, %v647
  %v649 = vpop.f32.mrb[0].mxu0
  %650 = vmatprep.mubr.bf16.mxu0 0
  %651 = vmatmul.mubr.bf16.gmra.mrb[0].mxu0 %v580
  %v652 = vpop.f32.mrb[0].mxu0
  %v653 = vadd.f32 %v562, %v652
  %v654 = vpop.f32.mrb[0].mxu0
  %v655 = vpop.f32.mrb[0].mxu0
  %v656 = vadd.f32 %v562, %v655
  %v657 = vpop.f32.mrb[0].mxu0
  %658 = vmatprep.mubr.bf16.mxu0 0
  %659 = vmatmul.mubr.bf16.gmra.mrb[0].mxu0 %v583
  %v660 = vpop.f32.mrb[0].mxu0
  %v661 = vadd.f32 %v562, %v660
  %v662 = vpop.f32.mrb[0].mxu0
  %v663 = vpop.f32.mrb[0].mxu0
  %v664 = vadd.f32 %v562, %v663
  %v665 = vpop.f32.mrb[0].mxu0
  %666 = vmatprep.mubr.bf16.mxu0 0
  %667 = vmatmul.mubr.bf16.gmra.mrb[0].mxu0 %v586
  %v668 = vpop.f32.mrb[0].mxu0
  %v669 = vadd.f32 %v562, %v668
  %v670 = vpop.f32.mrb[0].mxu0
  %v671 = vpop.f32.mrb[0].mxu0
  %v672 = vadd.f32 %v562, %v671
  %v673 = vpop.f32.mrb[0].mxu0
  %674 = vmatprep.mubr.bf16.mxu0 0
  %675 = vmatmul.mubr.bf16.gmra.mrb[0].mxu0 %v589
  %v676 = vpop.f32.mrb[0].mxu0
  %v677 = vadd.f32 %v562, %v676
  %v678 = vpop.f32.mrb[0].mxu0
  %v679 = vpop.f32.mrb[0].mxu0
  %v680 = vadd.f32 %v562, %v679
  %v681 = vpop.f32.mrb[0].mxu0
  %682 = vmatprep.mubr.bf16.mxu0 0
  %683 = vmatmul.mubr.bf16.gmra.mrb[0].mxu0 %v592
  %v684 = vpop.f32.mrb[0].mxu0
  %v685 = vadd.f32 %v562, %v684
  %v686 = vpop.f32.mrb[0].mxu0
  %v687 = vpop.f32.mrb[0].mxu0
  %v688 = vadd.f32 %v562, %v687
  %v689 = vpop.f32.mrb[0].mxu0
  %690 = vdwg.mxu0
  %v691 = vmax.f32 %v629, 0.0
  %v692 = vmax.f32 %v632, 0.0
  %v693 = vmax.f32 %v637, 0.0
  %v694 = vmax.f32 %v640, 0.0
  %v695 = vmax.f32 %v645, 0.0
  %v696 = vmax.f32 %v648, 0.0
  %v697 = vmax.f32 %v653, 0.0
  %v698 = vmax.f32 %v656, 0.0
  %v699 = vmax.f32 %v661, 0.0
  %v700 = vmax.f32 %v664, 0.0
  %v701 = vmax.f32 %v669, 0.0
  %v702 = vmax.f32 %v672, 0.0
  %v703 = vmax.f32 %v677, 0.0
  %v704 = vmax.f32 %v680, 0.0
  %v705 = vmax.f32 %v685, 0.0
  %v706 = vmax.f32 %v688, 0.0
  %v707 = vld [vmem:[%s1] sm:$0xff]
  %v708 = vld [vmem:[%s1 + $0x8] sm:$0xff]
  %v709 = vlaneseq
  %v710 = vshrl.u32 %v709, 7
  %v711 = vsub.s32 0, %v710
  %v712 = vrot.slane %v707, %v711
  %714 = vbcast.lane.b32.xlu0 %v712, 256
  %v715 = vpop.permute.xlu0 %714
  %v716 = vlaneseq
  %v717 = vshrl.u32 %v716, 7
  %v718 = vsub.s32 1, %v717
  %v719 = vrot.slane %v707, %v718
  %721 = vbcast.lane.b32.xlu0 %v719, 256
  %v722 = vpop.permute.xlu0 %721
  %v723 = vlaneseq
  %v724 = vshrl.u32 %v723, 7
  %v725 = vsub.s32 2, %v724
  %v726 = vrot.slane %v707, %v725
  %728 = vbcast.lane.b32.xlu0 %v726, 256
  %v729 = vpop.permute.xlu0 %728
  %v730 = vlaneseq
  %v731 = vshrl.u32 %v730, 7
  %v732 = vsub.s32 3, %v731
  %v733 = vrot.slane %v707, %v732
  %735 = vbcast.lane.b32.xlu0 %v733, 256
  %v736 = vpop.permute.xlu0 %735
  %v737 = vlaneseq
  %v738 = vshrl.u32 %v737, 7
  %v739 = vsub.s32 4, %v738
  %v740 = vrot.slane %v707, %v739
  %742 = vbcast.lane.b32.xlu0 %v740, 256
  %v743 = vpop.permute.xlu0 %742
  %v744 = vlaneseq
  %v745 = vshrl.u32 %v744, 7
  %v746 = vsub.s32 5, %v745
  %v747 = vrot.slane %v707, %v746
  %749 = vbcast.lane.b32.xlu0 %v747, 256
  %v750 = vpop.permute.xlu0 %749
  %v751 = vlaneseq
  %v752 = vshrl.u32 %v751, 7
  %v753 = vsub.s32 6, %v752
  %v754 = vrot.slane %v707, %v753
  %756 = vbcast.lane.b32.xlu0 %v754, 256
  %v757 = vpop.permute.xlu0 %756
  %v758 = vlaneseq
  %v759 = vshrl.u32 %v758, 7
  %v760 = vsub.s32 7, %v759
  %v761 = vrot.slane %v707, %v760
  %763 = vbcast.lane.b32.xlu0 %v761, 256
  %v764 = vpop.permute.xlu0 %763
  %v765 = vlaneseq
  %v766 = vshrl.u32 %v765, 7
  %v767 = vsub.s32 0, %v766
  %v768 = vrot.slane %v708, %v767
  %770 = vbcast.lane.b32.xlu0 %v768, 256
  %v771 = vpop.permute.xlu0 %770
  %v772 = vlaneseq
  %v773 = vshrl.u32 %v772, 7
  %v774 = vsub.s32 1, %v773
  %v775 = vrot.slane %v708, %v774
  %777 = vbcast.lane.b32.xlu0 %v775, 256
  %v778 = vpop.permute.xlu0 %777
  %v779 = vlaneseq
  %v780 = vshrl.u32 %v779, 7
  %v781 = vsub.s32 2, %v780
  %v782 = vrot.slane %v708, %v781
  %784 = vbcast.lane.b32.xlu0 %v782, 256
  %v785 = vpop.permute.xlu0 %784
  %v786 = vlaneseq
  %v787 = vshrl.u32 %v786, 7
  %v788 = vsub.s32 3, %v787
  %v789 = vrot.slane %v708, %v788
  %791 = vbcast.lane.b32.xlu0 %v789, 256
  %v792 = vpop.permute.xlu0 %791
  %v793 = vlaneseq
  %v794 = vshrl.u32 %v793, 7
  %v795 = vsub.s32 4, %v794
  %v796 = vrot.slane %v708, %v795
  %798 = vbcast.lane.b32.xlu0 %v796, 256
  %v799 = vpop.permute.xlu0 %798
  %v800 = vlaneseq
  %v801 = vshrl.u32 %v800, 7
  %v802 = vsub.s32 5, %v801
  %v803 = vrot.slane %v708, %v802
  %805 = vbcast.lane.b32.xlu0 %v803, 256
  %v806 = vpop.permute.xlu0 %805
  %v807 = vlaneseq
  %v808 = vshrl.u32 %v807, 7
  %v809 = vsub.s32 6, %v808
  %v810 = vrot.slane %v708, %v809
  %812 = vbcast.lane.b32.xlu0 %v810, 256
  %v813 = vpop.permute.xlu0 %812
  %v814 = vlaneseq
  %v815 = vshrl.u32 %v814, 7
  %v816 = vsub.s32 7, %v815
  %v817 = vrot.slane %v708, %v816
  %819 = vbcast.lane.b32.xlu0 %v817, 256
  %v820 = vpop.permute.xlu0 %819
  %v821 = vadd.f32 %v691, %v715
  %v822 = vadd.f32 %v692, %v722
  %v823 = vadd.f32 %v693, %v729
  %v824 = vadd.f32 %v694, %v736
  %v825 = vadd.f32 %v695, %v743
  %v826 = vadd.f32 %v696, %v750
  %v827 = vadd.f32 %v697, %v757
  %v828 = vadd.f32 %v698, %v764
  %v829 = vadd.f32 %v699, %v771
  %v830 = vadd.f32 %v700, %v778
  %v831 = vadd.f32 %v701, %v785
  %v832 = vadd.f32 %v702, %v792
  %v833 = vadd.f32 %v703, %v799
  %v834 = vadd.f32 %v704, %v806
  %v835 = vadd.f32 %v705, %v813
  %v836 = vadd.f32 %v706, %v820
  %vm837 = vcmask 261120
  %v838 = vsel %vm837, %v821, -inf
  %v839 = vrot.slane %v838, 4
  %v840 = vmax.f32 %v838, %v839
  %v841 = vrot.slane %v840, 2
  %v842 = vmax.f32 %v840, %v841
  %v843 = vrot.slane %v842, 1
  %v844 = vmax.f32 %v842, %v843
  %v845 = vsel %vm837, %v822, -inf
  %v846 = vrot.slane %v845, 4
  %v847 = vmax.f32 %v845, %v846
  %v848 = vrot.slane %v847, 2
  %v849 = vmax.f32 %v847, %v848
  %v850 = vrot.slane %v849, 1
  %v851 = vmax.f32 %v849, %v850
  %v852 = vsel %vm837, %v823, -inf
  %v853 = vrot.slane %v852, 4
  %v854 = vmax.f32 %v852, %v853
  %v855 = vrot.slane %v854, 2
  %v856 = vmax.f32 %v854, %v855
  %v857 = vrot.slane %v856, 1
  %v858 = vmax.f32 %v856, %v857
  %v859 = vsel %vm837, %v824, -inf
  %v860 = vrot.slane %v859, 4
  %v861 = vmax.f32 %v859, %v860
  %v862 = vrot.slane %v861, 2
  %v863 = vmax.f32 %v861, %v862
  %v864 = vrot.slane %v863, 1
  %v865 = vmax.f32 %v863, %v864
  %v866 = vsel %vm837, %v825, -inf
  %v867 = vrot.slane %v866, 4
  %v868 = vmax.f32 %v866, %v867
  %v869 = vrot.slane %v868, 2
  %v870 = vmax.f32 %v868, %v869
  %v871 = vrot.slane %v870, 1
  %v872 = vmax.f32 %v870, %v871
  %v873 = vsel %vm837, %v826, -inf
  %v874 = vrot.slane %v873, 4
  %v875 = vmax.f32 %v873, %v874
  %v876 = vrot.slane %v875, 2
  %v877 = vmax.f32 %v875, %v876
  %v878 = vrot.slane %v877, 1
  %v879 = vmax.f32 %v877, %v878
  %v880 = vsel %vm837, %v827, -inf
  %v881 = vrot.slane %v880, 4
  %v882 = vmax.f32 %v880, %v881
  %v883 = vrot.slane %v882, 2
  %v884 = vmax.f32 %v882, %v883
  %v885 = vrot.slane %v884, 1
  %v886 = vmax.f32 %v884, %v885
  %v887 = vsel %vm837, %v828, -inf
  %v888 = vrot.slane %v887, 4
  %v889 = vmax.f32 %v887, %v888
  %v890 = vrot.slane %v889, 2
  %v891 = vmax.f32 %v889, %v890
  %v892 = vrot.slane %v891, 1
  %v893 = vmax.f32 %v891, %v892
  %v894 = vsel %vm837, %v829, -inf
  %v895 = vrot.slane %v894, 4
  %v896 = vmax.f32 %v894, %v895
  %v897 = vrot.slane %v896, 2
  %v898 = vmax.f32 %v896, %v897
  %v899 = vrot.slane %v898, 1
  %v900 = vmax.f32 %v898, %v899
  %v901 = vsel %vm837, %v830, -inf
  %v902 = vrot.slane %v901, 4
  %v903 = vmax.f32 %v901, %v902
  %v904 = vrot.slane %v903, 2
  %v905 = vmax.f32 %v903, %v904
  %v906 = vrot.slane %v905, 1
  %v907 = vmax.f32 %v905, %v906
  %v908 = vsel %vm837, %v831, -inf
  %v909 = vrot.slane %v908, 4
  %v910 = vmax.f32 %v908, %v909
  %v911 = vrot.slane %v910, 2
  %v912 = vmax.f32 %v910, %v911
  %v913 = vrot.slane %v912, 1
  %v914 = vmax.f32 %v912, %v913
  %v915 = vsel %vm837, %v832, -inf
  %v916 = vrot.slane %v915, 4
  %v917 = vmax.f32 %v915, %v916
  %v918 = vrot.slane %v917, 2
  %v919 = vmax.f32 %v917, %v918
  %v920 = vrot.slane %v919, 1
  %v921 = vmax.f32 %v919, %v920
  %v922 = vsel %vm837, %v833, -inf
  %v923 = vrot.slane %v922, 4
  %v924 = vmax.f32 %v922, %v923
  %v925 = vrot.slane %v924, 2
  %v926 = vmax.f32 %v924, %v925
  %v927 = vrot.slane %v926, 1
  %v928 = vmax.f32 %v926, %v927
  %v929 = vsel %vm837, %v834, -inf
  %v930 = vrot.slane %v929, 4
  %v931 = vmax.f32 %v929, %v930
  %v932 = vrot.slane %v931, 2
  %v933 = vmax.f32 %v931, %v932
  %v934 = vrot.slane %v933, 1
  %v935 = vmax.f32 %v933, %v934
  %v936 = vsel %vm837, %v835, -inf
  %v937 = vrot.slane %v936, 4
  %v938 = vmax.f32 %v936, %v937
  %v939 = vrot.slane %v938, 2
  %v940 = vmax.f32 %v938, %v939
  %v941 = vrot.slane %v940, 1
  %v942 = vmax.f32 %v940, %v941
  %v943 = vsel %vm837, %v836, -inf
  %v944 = vrot.slane %v943, 4
  %v945 = vmax.f32 %v943, %v944
  %v946 = vrot.slane %v945, 2
  %v947 = vmax.f32 %v945, %v946
  %v948 = vrot.slane %v947, 1
  %v949 = vmax.f32 %v947, %v948
  %vm950 = vcmask 64512
  %v951 = vsel %vm950, %v707, -inf
  %952 = vmax.xlane.f32.xlu0 %v951
  %v953 = vpop.xlane.xlu0 %952
  %v954 = vsel %vm950, %v708, -inf
  %955 = vmax.xlane.f32.xlu0 %v954
  %v956 = vpop.xlane.xlu0 %955
  %vm957 = vcmp.gt.f32.partialorder %v953, -0.5
  %vm958 = vcmp.gt.f32.partialorder %v956, -0.5
  %v959 = vsel %vm957, 1, 0
  %v960 = vsel %vm958, 1, 0
  %vm961 = vcmp.eq.s32.totalorder %v959, 1
  %vm962 = vcmp.eq.s32.totalorder %v960, 1
  %vm979 = vcmask 1041409
  %v980 = vsel %vm979, %v851, %v844
  %vm981 = vcmask 1042434
  %v982 = vsel %vm981, %v858, %v980
  %vm983 = vcmask 1043459
  %v984 = vsel %vm983, %v865, %v982
  %vm985 = vcmask 1044484
  %v986 = vsel %vm985, %v872, %v984
  %vm987 = vcmask 1045509
  %v988 = vsel %vm987, %v879, %v986
  %vm989 = vcmask 1046534
  %v990 = vsel %vm989, %v886, %v988
  %vm991 = vcmask 1047559
  %v992 = vsel %vm991, %v893, %v990
  %v993 = vsel %vm979, %v907, %v900
  %v994 = vsel %vm981, %v914, %v993
  %v995 = vsel %vm983, %v921, %v994
  %v996 = vsel %vm985, %v928, %v995
  %v997 = vsel %vm987, %v935, %v996
  %v998 = vsel %vm989, %v942, %v997
  %v999 = vsel %vm991, %v949, %v998
  %v1002 = vsel %vm961, %v992, 0.0
  %v1003 = vsel %vm962, %v999, 0.0
  %1004 = vst.msk [vmem:[%s8] sm:$0xff] %vm837, %v1002
  %1005 = vst.msk [vmem:[%s8 + $0x8] sm:$0xff] %vm837, %v1003
  // Predicated region
  $region34: #{model_apply.8} parent=0 // pred_check
    _
  $region35: #{model_apply.8} parent=0 // pred_check_branch
    %1007 = sbr.rel (0) target = $region37
  $region36: #{model_apply.8} parent=0 // pred_region
    _
  $region37: #{model_apply.8} parent=0 // pred_fallthru
    _
  // Predicated region
  $region38: #{model_apply.8} parent=0 // pred_check
    _
  $region39: #{model_apply.8} parent=0 // pred_check_branch
    %1009 = sbr.rel (0) target = $region41
  $region40: #{model_apply.8} parent=0 // pred_region
    _
  $region41: #{model_apply.8} parent=0 // pred_fallthru
    _

// kernel: model_apply.7
$region0: #{model_apply.7}
  #allocation0 [shape = 'u32[]', space=smem, size = 0x4, offset = 0x4, fixed_abs, tag = 'smem constant byte address 0x4 - core index']
  #allocation1 [shape = 'u32[144,128]{1,0:T(1,128)}', space=vmem, size = 0x12000, scoped, tag = 'internal scratch']
  %s0 = inlined_call_operand.vmem [shape: f32[16,8], index: 0, kind: input, shape index: {}]
  %s1 = inlined_call_operand.vmem [shape: bf16[8,256], index: 1, kind: input, shape index: {}]
  %s2 = inlined_call_operand.vmem [shape: f32[1,256], index: 2, kind: input, shape index: {}]
  %s3 = inlined_call_operand.vmem [shape: f32[16,256], index: 3, kind: output, shape index: {}]
  %s4 = sld [smem:[#allocation0]]
  $region22: #{model_apply.7} parent=0
    _
  %s6 = ssub.s32 1, %s4
  %s7 = scalar_select 0, %s6, %s4
  // Predicated region
  $region2: #{model_apply.7} parent=0 // pred_check
    _
  $region3: #{model_apply.7} parent=0 // pred_check_branch
    %9 = sbr.rel (0) target = $region5
  $region4: #{model_apply.7} parent=0 // pred_region
    _
  $region5: #{model_apply.7} parent=0 // pred_fallthru
    _
  // Predicated region
  $region6: #{model_apply.7} parent=0 // pred_check
    _
  $region7: #{model_apply.7} parent=0 // pred_check_branch
    %11 = sbr.rel (0) target = $region9
  $region8: #{model_apply.7} parent=0 // pred_region
    _
  $region9: #{model_apply.7} parent=0 // pred_fallthru
    _
  // Predicated region
  $region10: #{model_apply.7} parent=0 // pred_check
    _
  $region11: #{model_apply.7} parent=0 // pred_check_branch
    %13 = sbr.rel (0) target = $region13
  $region12: #{model_apply.7} parent=0 // pred_region
    _
  $region13: #{model_apply.7} parent=0 // pred_fallthru
    _
  %v15 = vld [vmem:[%s0] sm:$0xff]
  %v16 = vld [vmem:[%s0 + $0x8] sm:$0xff]
  %v17 = vld [vmem:[%s1] sm:$0xff]
  %v18 = vpack.c.bf16 %v16, %v15
  %v19 = vld [vmem:[%s2] sm:$0x3]
  %v21 = vlaneseq
  %v22 = vshrl.u32 %v21, 7
  %v23 = vsub.s32 0, %v22
  %v24 = vrot.slane %v19, %v23
  %v25 = vlaneseq
  %v26 = vshrl.u32 %v25, 7
  %v27 = vsub.s32 1, %v26
  %v28 = vrot.slane %v19, %v27
  %v32 = vunpack.c.l.b16 %v17
  %v33 = vunpack.c.h.b16 %v17
  %v34 = vpack.c.b16 %v32, %v32
  %v35 = vpack.c.b16 %v33, %v33
  %vm36 = vcmask 64512
  %v38 = vsel %vm36, %v18, 0
  %vm40 = vcmask 1043456
  %v42 = vsel %vm40, %v34, 0
  %v45 = vsel %vm40, %v35, 0
  %47 = vmatprep.subr.bf16.mxu0 %v45
  %48 = vmatpush1.bf16.msra.mxu0 %v42
  %49 = vmatprep.subr.bf16.mxu0 0
  %50 = vmatpush1.bf16.msra.mxu0 0
  %51 = vmatprep.subr.bf16.mxu0 0
  %52 = vmatpush1.bf16.msra.mxu0 0
  %53 = vmatprep.subr.bf16.mxu0 0
  %54 = vmatpush1.bf16.msra.mxu0 0
  %55 = vmatprep.subr.bf16.mxu0 0
  %56 = vmatpush1.bf16.msra.mxu0 0
  %57 = vmatprep.subr.bf16.mxu0 0
  %58 = vmatpush1.bf16.msra.mxu0 0
  %59 = vmatprep.subr.bf16.mxu0 0
  %60 = vmatpush1.bf16.msra.mxu0 0
  %61 = vmatprep.subr.bf16.mxu0 0
  %62 = vmatpush1.bf16.msra.mxu0 0
  %63 = vmatprep.subr.bf16.mxu0 0
  %64 = vmatpush1.bf16.msra.mxu0 0
  %65 = vmatprep.subr.bf16.mxu0 0
  %66 = vmatpush1.bf16.msra.mxu0 0
  %67 = vmatprep.subr.bf16.mxu0 0
  %68 = vmatpush1.bf16.msra.mxu0 0
  %69 = vmatprep.subr.bf16.mxu0 0
  %70 = vmatpush1.bf16.msra.mxu0 0
  %71 = vmatprep.subr.bf16.mxu0 0
  %72 = vmatpush1.bf16.msra.mxu0 0
  %73 = vmatprep.subr.bf16.mxu0 0
  %74 = vmatpush1.bf16.msra.mxu0 0
  %75 = vmatprep.subr.bf16.mxu0 0
  %76 = vmatpush1.bf16.msra.mxu0 0
  %77 = vmatprep.subr.bf16.mxu0 0
  %78 = vmatpush1.bf16.msra.mxu0 0
  %79 = vmatprep.mubr.bf16.mxu0 0
  %80 = vmatmul.mubr.bf16.gmra.mrb[0].mxu0 %v38
  %v81 = vpop.f32.mrb[0].mxu0
  %v82 = vadd.f32 %v24, %v81
  %v83 = vpop.f32.mrb[0].mxu0
  %v84 = vadd.f32 %v28, %v83
  %v85 = vpop.f32.mrb[0].mxu0
  %v86 = vadd.f32 %v24, %v85
  %v87 = vpop.f32.mrb[0].mxu0
  %v88 = vadd.f32 %v28, %v87
  %89 = vdwg.mxu0
  %90 = vst [vmem:[%s3] sm:$0xff] %v82
  %91 = vst [vmem:[%s3 + $0x8] sm:$0xff] %v84
  %92 = vst [vmem:[%s3 + $0x10] sm:$0xff] %v86
  %93 = vst [vmem:[%s3 + $0x18] sm:$0xff] %v88
  // Predicated region
  $region14: #{model_apply.7} parent=0 // pred_check
    _
  $region15: #{model_apply.7} parent=0 // pred_check_branch
    %95 = sbr.rel (0) target = $region17
  $region16: #{model_apply.7} parent=0 // pred_region
    _
  $region17: #{model_apply.7} parent=0 // pred_fallthru
    _
  // Predicated region
  $region18: #{model_apply.7} parent=0 // pred_check
    _
  $region19: #{model_apply.7} parent=0 // pred_check_branch
    %97 = sbr.rel (0) target = $region21
  $region20: #{model_apply.7} parent=0 // pred_region
    _
  $region21: #{model_apply.7} parent=0 // pred_fallthru
    _

// kernel: model_apply.9
$region0: #{model_apply.9}
  #allocation0 [shape = 'u32[]', space=smem, size = 0x4, offset = 0x4, fixed_abs, tag = 'smem constant byte address 0x4 - core index']
  #allocation1 [shape = 'u32[144,128]{1,0:T(1,128)}', space=vmem, size = 0x12000, scoped, tag = 'internal scratch']
  %s0 = inlined_call_operand.vmem [shape: f32[64,35], index: 0, kind: input, shape index: {}]
  %s1 = inlined_call_operand.vmem [shape: f32[8,8], index: 1, kind: input, shape index: {}]
  %s2 = inlined_call_operand.vmem [shape: bf16[35,32], index: 2, kind: input, shape index: {}]
  %s3 = inlined_call_operand.vmem [shape: f32[1,32], index: 3, kind: input, shape index: {}]
  %s4 = inlined_call_operand.vmem [shape: bf16[32,32], index: 4, kind: input, shape index: {}]
  %s5 = inlined_call_operand.vmem [shape: f32[1,32], index: 5, kind: input, shape index: {}]
  %s6 = inlined_call_operand.vmem [shape: bf16[32,64], index: 6, kind: input, shape index: {}]
  %s7 = inlined_call_operand.vmem [shape: f32[1,64], index: 7, kind: input, shape index: {}]
  %s8 = inlined_call_operand.vmem [shape: f32[8,64], index: 8, kind: output, shape index: {}]
  %s9 = sld [smem:[#allocation0]]
  $region42: #{model_apply.9} parent=0
    _
  %s11 = ssub.s32 1, %s9
  %s12 = scalar_select 0, %s11, %s9
  // Predicated region
  $region2: #{model_apply.9} parent=0 // pred_check
    _
  $region3: #{model_apply.9} parent=0 // pred_check_branch
    %14 = sbr.rel (0) target = $region5
  $region4: #{model_apply.9} parent=0 // pred_region
    _
  $region5: #{model_apply.9} parent=0 // pred_fallthru
    _
  // Predicated region
  $region6: #{model_apply.9} parent=0 // pred_check
    _
  $region7: #{model_apply.9} parent=0 // pred_check_branch
    %16 = sbr.rel (0) target = $region9
  $region8: #{model_apply.9} parent=0 // pred_region
    _
  $region9: #{model_apply.9} parent=0 // pred_fallthru
    _
  // Predicated region
  $region10: #{model_apply.9} parent=0 // pred_check
    _
  $region11: #{model_apply.9} parent=0 // pred_check_branch
    %18 = sbr.rel (0) target = $region13
  $region12: #{model_apply.9} parent=0 // pred_region
    _
  $region13: #{model_apply.9} parent=0 // pred_fallthru
    _
  // Predicated region
  $region14: #{model_apply.9} parent=0 // pred_check
    _
  $region15: #{model_apply.9} parent=0 // pred_check_branch
    %20 = sbr.rel (0) target = $region17
  $region16: #{model_apply.9} parent=0 // pred_region
    _
  $region17: #{model_apply.9} parent=0 // pred_fallthru
    _
  // Predicated region
  $region18: #{model_apply.9} parent=0 // pred_check
    _
  $region19: #{model_apply.9} parent=0 // pred_check_branch
    %22 = sbr.rel (0) target = $region21
  $region20: #{model_apply.9} parent=0 // pred_region
    _
  $region21: #{model_apply.9} parent=0 // pred_fallthru
    _
  // Predicated region
  $region22: #{model_apply.9} parent=0 // pred_check
    _
  $region23: #{model_apply.9} parent=0 // pred_check_branch
    %24 = sbr.rel (0) target = $region25
  $region24: #{model_apply.9} parent=0 // pred_region
    _
  $region25: #{model_apply.9} parent=0 // pred_fallthru
    _
  // Predicated region
  $region26: #{model_apply.9} parent=0 // pred_check
    _
  $region27: #{model_apply.9} parent=0 // pred_check_branch
    %26 = sbr.rel (0) target = $region29
  $region28: #{model_apply.9} parent=0 // pred_region
    _
  $region29: #{model_apply.9} parent=0 // pred_fallthru
    _
  // Predicated region
  $region30: #{model_apply.9} parent=0 // pred_check
    _
  $region31: #{model_apply.9} parent=0 // pred_check_branch
    %28 = sbr.rel (0) target = $region33
  $region32: #{model_apply.9} parent=0 // pred_region
    _
  $region33: #{model_apply.9} parent=0 // pred_fallthru
    _
  %v30 = vld [vmem:[%s0] sm:$0xff]
  %v31 = vld [vmem:[%s0 + $0x8] sm:$0xff]
  %v32 = vld [vmem:[%s0 + $0x10] sm:$0xff]
  %v33 = vld [vmem:[%s0 + $0x18] sm:$0xff]
  %v34 = vld [vmem:[%s0 + $0x20] sm:$0xff]
  %v35 = vld [vmem:[%s0 + $0x28] sm:$0xff]
  %v36 = vld [vmem:[%s0 + $0x30] sm:$0xff]
  %v37 = vld [vmem:[%s0 + $0x38] sm:$0xff]
  %v38 = vld [vmem:[%s2] sm:$0xf]
  %v39 = vld [vmem:[%s2 + $0x4] sm:$0xf]
  %v40 = vld [vmem:[%s2 + $0x8] sm:$0xf]
  %v41 = vld [vmem:[%s2 + $0xc] sm:$0xf]
  %v42 = vld [vmem:[%s2 + $0x10] sm:$0x3]
  %v43 = vpack.c.bf16 %v31, %v30
  %v44 = vpack.c.bf16 %v33, %v32
  %v45 = vpack.c.bf16 %v35, %v34
  %v46 = vpack.c.bf16 %v37, %v36
  %v47 = vld [vmem:[%s3] sm:$0x1]
  %v49 = vlaneseq
  %v50 = vshrl.u32 %v49, 7
  %v51 = vsub.s32 0, %v50
  %v52 = vrot.slane %v47, %v51
  %v59 = vunpack.c.l.b16 %v38
  %v60 = vunpack.c.l.b16 %v39
  %v61 = vunpack.c.l.b16 %v40
  %v62 = vunpack.c.l.b16 %v41
  %v63 = vunpack.c.l.b16 %v42
  %v64 = vpack.c.b16 %v60, %v59
  %v65 = vpack.c.b16 %v62, %v61
  %v66 = vpack.c.b16 %v63, %v63
  %vm69 = vcmask 285696
  %v71 = vsel %vm69, %v43, 0
  %v74 = vsel %vm69, %v44, 0
  %v77 = vsel %vm69, %v45, 0
  %v80 = vsel %vm69, %v46, 0
  %vm82 = vcmask 1040384
  %vm83 = vcmask 1041408
  %v84 = vsel %vm82, 4294967295, 65535
  %v85 = vsel %vm83, %v84, 0
  %v87 = vand.u32 %v66, %v85
  %89 = vmatprep.subr.bf16.mxu0 0
  %90 = vmatpush1.bf16.msra.mxu0 %v64
  %91 = vmatprep.subr.bf16.mxu0 0
  %92 = vmatpush1.bf16.msra.mxu0 %v65
  %93 = vmatprep.subr.bf16.mxu0 0
  %94 = vmatpush1.bf16.msra.mxu0 %v87
  %95 = vmatprep.subr.bf16.mxu0 0
  %96 = vmatpush1.bf16.msra.mxu0 0
  %97 = vmatprep.subr.bf16.mxu0 0
  %98 = vmatpush1.bf16.msra.mxu0 0
  %99 = vmatprep.subr.bf16.mxu0 0
  %100 = vmatpush1.bf16.msra.mxu0 0
  %101 = vmatprep.subr.bf16.mxu0 0
  %102 = vmatpush1.bf16.msra.mxu0 0
  %103 = vmatprep.subr.bf16.mxu0 0
  %104 = vmatpush1.bf16.msra.mxu0 0
  %105 = vmatprep.subr.bf16.mxu0 0
  %106 = vmatpush1.bf16.msra.mxu0 0
  %107 = vmatprep.subr.bf16.mxu0 0
  %108 = vmatpush1.bf16.msra.mxu0 0
  %109 = vmatprep.subr.bf16.mxu0 0
  %110 = vmatpush1.bf16.msra.mxu0 0
  %111 = vmatprep.subr.bf16.mxu0 0
  %112 = vmatpush1.bf16.msra.mxu0 0
  %113 = vmatprep.subr.bf16.mxu0 0
  %114 = vmatpush1.bf16.msra.mxu0 0
  %115 = vmatprep.subr.bf16.mxu0 0
  %116 = vmatpush1.bf16.msra.mxu0 0
  %117 = vmatprep.subr.bf16.mxu0 0
  %118 = vmatpush1.bf16.msra.mxu0 0
  %119 = vmatprep.subr.bf16.mxu0 0
  %120 = vmatpush1.bf16.msra.mxu0 0
  %121 = vmatprep.mubr.bf16.mxu0 0
  %122 = vmatmul.mubr.bf16.gmra.mrb[0].mxu0 %v71
  %v123 = vpop.f32.mrb[0].mxu0
  %v124 = vadd.f32 %v52, %v123
  %v125 = vpop.f32.mrb[0].mxu0
  %v126 = vpop.f32.mrb[0].mxu0
  %v127 = vadd.f32 %v52, %v126
  %v128 = vpop.f32.mrb[0].mxu0
  %129 = vmatprep.mubr.bf16.mxu0 0
  %130 = vmatmul.mubr.bf16.gmra.mrb[0].mxu0 %v74
  %v131 = vpop.f32.mrb[0].mxu0
  %v132 = vadd.f32 %v52, %v131
  %v133 = vpop.f32.mrb[0].mxu0
  %v134 = vpop.f32.mrb[0].mxu0
  %v135 = vadd.f32 %v52, %v134
  %v136 = vpop.f32.mrb[0].mxu0
  %137 = vmatprep.mubr.bf16.mxu0 0
  %138 = vmatmul.mubr.bf16.gmra.mrb[0].mxu0 %v77
  %v139 = vpop.f32.mrb[0].mxu0
  %v140 = vadd.f32 %v52, %v139
  %v141 = vpop.f32.mrb[0].mxu0
  %v142 = vpop.f32.mrb[0].mxu0
  %v143 = vadd.f32 %v52, %v142
  %v144 = vpop.f32.mrb[0].mxu0
  %145 = vmatprep.mubr.bf16.mxu0 0
  %146 = vmatmul.mubr.bf16.gmra.mrb[0].mxu0 %v80
  %v147 = vpop.f32.mrb[0].mxu0
  %v148 = vadd.f32 %v52, %v147
  %v149 = vpop.f32.mrb[0].mxu0
  %v150 = vpop.f32.mrb[0].mxu0
  %v151 = vadd.f32 %v52, %v150
  %v152 = vpop.f32.mrb[0].mxu0
  %153 = vdwg.mxu0
  %v154 = vmax.f32 %v124, 0.0
  %v155 = vmax.f32 %v127, 0.0
  %v156 = vmax.f32 %v132, 0.0
  %v157 = vmax.f32 %v135, 0.0
  %v158 = vmax.f32 %v140, 0.0
  %v159 = vmax.f32 %v143, 0.0
  %v160 = vmax.f32 %v148, 0.0
  %v161 = vmax.f32 %v151, 0.0
  %v162 = vld [vmem:[%s4] sm:$0xf]
  %v163 = vld [vmem:[%s4 + $0x4] sm:$0xf]
  %v164 = vld [vmem:[%s4 + $0x8] sm:$0xf]
  %v165 = vld [vmem:[%s4 + $0xc] sm:$0xf]
  %v166 = vpack.c.bf16 %v155, %v154
  %v167 = vpack.c.bf16 %v157, %v156
  %v168 = vpack.c.bf16 %v159, %v158
  %v169 = vpack.c.bf16 %v161, %v160
  %v170 = vld [vmem:[%s5] sm:$0x1]
  %v172 = vlaneseq
  %v173 = vshrl.u32 %v172, 7
  %v174 = vsub.s32 0, %v173
  %v175 = vrot.slane %v170, %v174
  %v181 = vunpack.c.l.b16 %v162
  %v182 = vunpack.c.l.b16 %v163
  %v183 = vunpack.c.l.b16 %v164
  %v184 = vunpack.c.l.b16 %v165
  %v185 = vpack.c.b16 %v182, %v181
  %v186 = vpack.c.b16 %v184, %v183
  %vm189 = vcmask 261120
  %v191 = vsel %vm189, %v166, 0
  %v194 = vsel %vm189, %v167, 0
  %v197 = vsel %vm189, %v168, 0
  %v200 = vsel %vm189, %v169, 0
  %202 = vmatprep.subr.bf16.mxu0 0
  %203 = vmatpush1.bf16.msra.mxu0 %v185
  %204 = vmatprep.subr.bf16.mxu0 0
  %205 = vmatpush1.bf16.msra.mxu0 %v186
  %206 = vmatprep.subr.bf16.mxu0 0
  %207 = vmatpush1.bf16.msra.mxu0 0
  %208 = vmatprep.subr.bf16.mxu0 0
  %209 = vmatpush1.bf16.msra.mxu0 0
  %210 = vmatprep.subr.bf16.mxu0 0
  %211 = vmatpush1.bf16.msra.mxu0 0
  %212 = vmatprep.subr.bf16.mxu0 0
  %213 = vmatpush1.bf16.msra.mxu0 0
  %214 = vmatprep.subr.bf16.mxu0 0
  %215 = vmatpush1.bf16.msra.mxu0 0
  %216 = vmatprep.subr.bf16.mxu0 0
  %217 = vmatpush1.bf16.msra.mxu0 0
  %218 = vmatprep.subr.bf16.mxu0 0
  %219 = vmatpush1.bf16.msra.mxu0 0
  %220 = vmatprep.subr.bf16.mxu0 0
  %221 = vmatpush1.bf16.msra.mxu0 0
  %222 = vmatprep.subr.bf16.mxu0 0
  %223 = vmatpush1.bf16.msra.mxu0 0
  %224 = vmatprep.subr.bf16.mxu0 0
  %225 = vmatpush1.bf16.msra.mxu0 0
  %226 = vmatprep.subr.bf16.mxu0 0
  %227 = vmatpush1.bf16.msra.mxu0 0
  %228 = vmatprep.subr.bf16.mxu0 0
  %229 = vmatpush1.bf16.msra.mxu0 0
  %230 = vmatprep.subr.bf16.mxu0 0
  %231 = vmatpush1.bf16.msra.mxu0 0
  %232 = vmatprep.subr.bf16.mxu0 0
  %233 = vmatpush1.bf16.msra.mxu0 0
  %234 = vmatprep.mubr.bf16.mxu0 0
  %235 = vmatmul.mubr.bf16.gmra.mrb[0].mxu0 %v191
  %v236 = vpop.f32.mrb[0].mxu0
  %v237 = vadd.f32 %v175, %v236
  %v238 = vpop.f32.mrb[0].mxu0
  %v239 = vpop.f32.mrb[0].mxu0
  %v240 = vadd.f32 %v175, %v239
  %v241 = vpop.f32.mrb[0].mxu0
  %242 = vmatprep.mubr.bf16.mxu0 0
  %243 = vmatmul.mubr.bf16.gmra.mrb[0].mxu0 %v194
  %v244 = vpop.f32.mrb[0].mxu0
  %v245 = vadd.f32 %v175, %v244
  %v246 = vpop.f32.mrb[0].mxu0
  %v247 = vpop.f32.mrb[0].mxu0
  %v248 = vadd.f32 %v175, %v247
  %v249 = vpop.f32.mrb[0].mxu0
  %250 = vmatprep.mubr.bf16.mxu0 0
  %251 = vmatmul.mubr.bf16.gmra.mrb[0].mxu0 %v197
  %v252 = vpop.f32.mrb[0].mxu0
  %v253 = vadd.f32 %v175, %v252
  %v254 = vpop.f32.mrb[0].mxu0
  %v255 = vpop.f32.mrb[0].mxu0
  %v256 = vadd.f32 %v175, %v255
  %v257 = vpop.f32.mrb[0].mxu0
  %258 = vmatprep.mubr.bf16.mxu0 0
  %259 = vmatmul.mubr.bf16.gmra.mrb[0].mxu0 %v200
  %v260 = vpop.f32.mrb[0].mxu0
  %v261 = vadd.f32 %v175, %v260
  %v262 = vpop.f32.mrb[0].mxu0
  %v263 = vpop.f32.mrb[0].mxu0
  %v264 = vadd.f32 %v175, %v263
  %v265 = vpop.f32.mrb[0].mxu0
  %266 = vdwg.mxu0
  %v267 = vmax.f32 %v237, 0.0
  %v268 = vmax.f32 %v240, 0.0
  %v269 = vmax.f32 %v245, 0.0
  %v270 = vmax.f32 %v248, 0.0
  %v271 = vmax.f32 %v253, 0.0
  %v272 = vmax.f32 %v256, 0.0
  %v273 = vmax.f32 %v261, 0.0
  %v274 = vmax.f32 %v264, 0.0
  %v275 = vld [vmem:[%s6] sm:$0xf]
  %v276 = vld [vmem:[%s6 + $0x4] sm:$0xf]
  %v277 = vld [vmem:[%s6 + $0x8] sm:$0xf]
  %v278 = vld [vmem:[%s6 + $0xc] sm:$0xf]
  %v279 = vpack.c.bf16 %v268, %v267
  %v280 = vpack.c.bf16 %v270, %v269
  %v281 = vpack.c.bf16 %v272, %v271
  %v282 = vpack.c.bf16 %v274, %v273
  %v283 = vld [vmem:[%s7] sm:$0x1]
  %v285 = vlaneseq
  %v286 = vshrl.u32 %v285, 7
  %v287 = vsub.s32 0, %v286
  %v288 = vrot.slane %v283, %v287
  %v294 = vunpack.c.l.b16 %v275
  %v295 = vunpack.c.l.b16 %v276
  %v296 = vunpack.c.l.b16 %v277
  %v297 = vunpack.c.l.b16 %v278
  %v298 = vpack.c.b16 %v295, %v294
  %v299 = vpack.c.b16 %v297, %v296
  %v303 = vsel %vm189, %v279, 0
  %v306 = vsel %vm189, %v280, 0
  %v309 = vsel %vm189, %v281, 0
  %v312 = vsel %vm189, %v282, 0
  %314 = vmatprep.subr.bf16.mxu0 0
  %315 = vmatpush1.bf16.msra.mxu0 %v298
  %316 = vmatprep.subr.bf16.mxu0 0
  %317 = vmatpush1.bf16.msra.mxu0 %v299
  %318 = vmatprep.subr.bf16.mxu0 0
  %319 = vmatpush1.bf16.msra.mxu0 0
  %320 = vmatprep.subr.bf16.mxu0 0
  %321 = vmatpush1.bf16.msra.mxu0 0
  %322 = vmatprep.subr.bf16.mxu0 0
  %323 = vmatpush1.bf16.msra.mxu0 0
  %324 = vmatprep.subr.bf16.mxu0 0
  %325 = vmatpush1.bf16.msra.mxu0 0
  %326 = vmatprep.subr.bf16.mxu0 0
  %327 = vmatpush1.bf16.msra.mxu0 0
  %328 = vmatprep.subr.bf16.mxu0 0
  %329 = vmatpush1.bf16.msra.mxu0 0
  %330 = vmatprep.subr.bf16.mxu0 0
  %331 = vmatpush1.bf16.msra.mxu0 0
  %332 = vmatprep.subr.bf16.mxu0 0
  %333 = vmatpush1.bf16.msra.mxu0 0
  %334 = vmatprep.subr.bf16.mxu0 0
  %335 = vmatpush1.bf16.msra.mxu0 0
  %336 = vmatprep.subr.bf16.mxu0 0
  %337 = vmatpush1.bf16.msra.mxu0 0
  %338 = vmatprep.subr.bf16.mxu0 0
  %339 = vmatpush1.bf16.msra.mxu0 0
  %340 = vmatprep.subr.bf16.mxu0 0
  %341 = vmatpush1.bf16.msra.mxu0 0
  %342 = vmatprep.subr.bf16.mxu0 0
  %343 = vmatpush1.bf16.msra.mxu0 0
  %344 = vmatprep.subr.bf16.mxu0 0
  %345 = vmatpush1.bf16.msra.mxu0 0
  %346 = vmatprep.mubr.bf16.mxu0 0
  %347 = vmatmul.mubr.bf16.gmra.mrb[0].mxu0 %v303
  %v348 = vpop.f32.mrb[0].mxu0
  %v349 = vadd.f32 %v288, %v348
  %v350 = vpop.f32.mrb[0].mxu0
  %v351 = vpop.f32.mrb[0].mxu0
  %v352 = vadd.f32 %v288, %v351
  %v353 = vpop.f32.mrb[0].mxu0
  %354 = vmatprep.mubr.bf16.mxu0 0
  %355 = vmatmul.mubr.bf16.gmra.mrb[0].mxu0 %v306
  %v356 = vpop.f32.mrb[0].mxu0
  %v357 = vadd.f32 %v288, %v356
  %v358 = vpop.f32.mrb[0].mxu0
  %v359 = vpop.f32.mrb[0].mxu0
  %v360 = vadd.f32 %v288, %v359
  %v361 = vpop.f32.mrb[0].mxu0
  %362 = vmatprep.mubr.bf16.mxu0 0
  %363 = vmatmul.mubr.bf16.gmra.mrb[0].mxu0 %v309
  %v364 = vpop.f32.mrb[0].mxu0
  %v365 = vadd.f32 %v288, %v364
  %v366 = vpop.f32.mrb[0].mxu0
  %v367 = vpop.f32.mrb[0].mxu0
  %v368 = vadd.f32 %v288, %v367
  %v369 = vpop.f32.mrb[0].mxu0
  %370 = vmatprep.mubr.bf16.mxu0 0
  %371 = vmatmul.mubr.bf16.gmra.mrb[0].mxu0 %v312
  %v372 = vpop.f32.mrb[0].mxu0
  %v373 = vadd.f32 %v288, %v372
  %v374 = vpop.f32.mrb[0].mxu0
  %v375 = vpop.f32.mrb[0].mxu0
  %v376 = vadd.f32 %v288, %v375
  %v377 = vpop.f32.mrb[0].mxu0
  %378 = vdwg.mxu0
  %v379 = vmax.f32 %v349, 0.0
  %v380 = vmax.f32 %v352, 0.0
  %v381 = vmax.f32 %v357, 0.0
  %v382 = vmax.f32 %v360, 0.0
  %v383 = vmax.f32 %v365, 0.0
  %v384 = vmax.f32 %v368, 0.0
  %v385 = vmax.f32 %v373, 0.0
  %v386 = vmax.f32 %v376, 0.0
  %v387 = vld [vmem:[%s1] sm:$0xff]
  %v388 = vlaneseq
  %v389 = vshrl.u32 %v388, 7
  %v390 = vsub.s32 0, %v389
  %v391 = vrot.slane %v387, %v390
  %393 = vbcast.lane.b32.xlu0 %v391, 256
  %v394 = vpop.permute.xlu0 %393
  %v395 = vlaneseq
  %v396 = vshrl.u32 %v395, 7
  %v397 = vsub.s32 1, %v396
  %v398 = vrot.slane %v387, %v397
  %400 = vbcast.lane.b32.xlu0 %v398, 256
  %v401 = vpop.permute.xlu0 %400
  %v402 = vlaneseq
  %v403 = vshrl.u32 %v402, 7
  %v404 = vsub.s32 2, %v403
  %v405 = vrot.slane %v387, %v404
  %407 = vbcast.lane.b32.xlu0 %v405, 256
  %v408 = vpop.permute.xlu0 %407
  %v409 = vlaneseq
  %v410 = vshrl.u32 %v409, 7
  %v411 = vsub.s32 3, %v410
  %v412 = vrot.slane %v387, %v411
  %414 = vbcast.lane.b32.xlu0 %v412, 256
  %v415 = vpop.permute.xlu0 %414
  %v416 = vlaneseq
  %v417 = vshrl.u32 %v416, 7
  %v418 = vsub.s32 4, %v417
  %v419 = vrot.slane %v387, %v418
  %421 = vbcast.lane.b32.xlu0 %v419, 256
  %v422 = vpop.permute.xlu0 %421
  %v423 = vlaneseq
  %v424 = vshrl.u32 %v423, 7
  %v425 = vsub.s32 5, %v424
  %v426 = vrot.slane %v387, %v425
  %428 = vbcast.lane.b32.xlu0 %v426, 256
  %v429 = vpop.permute.xlu0 %428
  %v430 = vlaneseq
  %v431 = vshrl.u32 %v430, 7
  %v432 = vsub.s32 6, %v431
  %v433 = vrot.slane %v387, %v432
  %435 = vbcast.lane.b32.xlu0 %v433, 256
  %v436 = vpop.permute.xlu0 %435
  %v437 = vlaneseq
  %v438 = vshrl.u32 %v437, 7
  %v439 = vsub.s32 7, %v438
  %v440 = vrot.slane %v387, %v439
  %442 = vbcast.lane.b32.xlu0 %v440, 256
  %v443 = vpop.permute.xlu0 %442
  %v444 = vadd.f32 %v379, %v394
  %v445 = vadd.f32 %v380, %v401
  %v446 = vadd.f32 %v381, %v408
  %v447 = vadd.f32 %v382, %v415
  %v448 = vadd.f32 %v383, %v422
  %v449 = vadd.f32 %v384, %v429
  %v450 = vadd.f32 %v385, %v436
  %v451 = vadd.f32 %v386, %v443
  %vm452 = vcmask 523264
  %v453 = vsel %vm452, %v444, -inf
  %v454 = vrot.slane %v453, 4
  %v455 = vmax.f32 %v453, %v454
  %v456 = vrot.slane %v455, 2
  %v457 = vmax.f32 %v455, %v456
  %v458 = vrot.slane %v457, 1
  %v459 = vmax.f32 %v457, %v458
  %v460 = vsel %vm452, %v445, -inf
  %v461 = vrot.slane %v460, 4
  %v462 = vmax.f32 %v460, %v461
  %v463 = vrot.slane %v462, 2
  %v464 = vmax.f32 %v462, %v463
  %v465 = vrot.slane %v464, 1
  %v466 = vmax.f32 %v464, %v465
  %v467 = vsel %vm452, %v446, -inf
  %v468 = vrot.slane %v467, 4
  %v469 = vmax.f32 %v467, %v468
  %v470 = vrot.slane %v469, 2
  %v471 = vmax.f32 %v469, %v470
  %v472 = vrot.slane %v471, 1
  %v473 = vmax.f32 %v471, %v472
  %v474 = vsel %vm452, %v447, -inf
  %v475 = vrot.slane %v474, 4
  %v476 = vmax.f32 %v474, %v475
  %v477 = vrot.slane %v476, 2
  %v478 = vmax.f32 %v476, %v477
  %v479 = vrot.slane %v478, 1
  %v480 = vmax.f32 %v478, %v479
  %v481 = vsel %vm452, %v448, -inf
  %v482 = vrot.slane %v481, 4
  %v483 = vmax.f32 %v481, %v482
  %v484 = vrot.slane %v483, 2
  %v485 = vmax.f32 %v483, %v484
  %v486 = vrot.slane %v485, 1
  %v487 = vmax.f32 %v485, %v486
  %v488 = vsel %vm452, %v449, -inf
  %v489 = vrot.slane %v488, 4
  %v490 = vmax.f32 %v488, %v489
  %v491 = vrot.slane %v490, 2
  %v492 = vmax.f32 %v490, %v491
  %v493 = vrot.slane %v492, 1
  %v494 = vmax.f32 %v492, %v493
  %v495 = vsel %vm452, %v450, -inf
  %v496 = vrot.slane %v495, 4
  %v497 = vmax.f32 %v495, %v496
  %v498 = vrot.slane %v497, 2
  %v499 = vmax.f32 %v497, %v498
  %v500 = vrot.slane %v499, 1
  %v501 = vmax.f32 %v499, %v500
  %v502 = vsel %vm452, %v451, -inf
  %v503 = vrot.slane %v502, 4
  %v504 = vmax.f32 %v502, %v503
  %v505 = vrot.slane %v504, 2
  %v506 = vmax.f32 %v504, %v505
  %v507 = vrot.slane %v506, 1
  %v508 = vmax.f32 %v506, %v507
  %vm509 = vcmask 64512
  %v510 = vsel %vm509, %v387, -inf
  %511 = vmax.xlane.f32.xlu0 %v510
  %v512 = vpop.xlane.xlu0 %511
  %vm513 = vcmp.gt.f32.partialorder %v512, -0.5
  %v514 = vsel %vm513, 1, 0
  %vm515 = vcmp.eq.s32.totalorder %v514, 1
  %vm524 = vcmask 1041409
  %v525 = vsel %vm524, %v466, %v459
  %vm526 = vcmask 1042434
  %v527 = vsel %vm526, %v473, %v525
  %vm528 = vcmask 1043459
  %v529 = vsel %vm528, %v480, %v527
  %vm530 = vcmask 1044484
  %v531 = vsel %vm530, %v487, %v529
  %vm532 = vcmask 1045509
  %v533 = vsel %vm532, %v494, %v531
  %vm534 = vcmask 1046534
  %v535 = vsel %vm534, %v501, %v533
  %vm536 = vcmask 1047559
  %v537 = vsel %vm536, %v508, %v535
  %v539 = vsel %vm515, %v537, 0.0
  %540 = vst.msk [vmem:[%s8] sm:$0xff] %vm452, %v539
  // Predicated region
  $region34: #{model_apply.9} parent=0 // pred_check
    _
  $region35: #{model_apply.9} parent=0 // pred_check_branch
    %542 = sbr.rel (0) target = $region37
  $region36: #{model_apply.9} parent=0 // pred_region
    _
  $region37: #{model_apply.9} parent=0 // pred_fallthru
    _
  // Predicated region
  $region38: #{model_apply.9} parent=0 // pred_check
    _
  $region39: #{model_apply.9} parent=0 // pred_check_branch
    %544 = sbr.rel (0) target = $region41
  $region40: #{model_apply.9} parent=0 // pred_region
    _
  $region41: #{model_apply.9} parent=0 // pred_fallthru
    _

// kernel: neg.8
$region0: #{neg.8}
  #allocation0 [shape = 's32[1]{0}', space=sflag, size = 0x4, scoped, tag = 'scoped memory for neg.8']
  %s0 = inlined_call_operand.vmem [shape: f32[2,8,4], index: 0, kind: input, shape index: {}]
  %s1 = inlined_call_operand.vmem [shape: f32[2,8,4], index: 1, kind: output, shape index: {}]
  %v2 = vld [vmem:[%s0] sm:$0xf]
  %3 = xla_tuple %v2
  %4 = xla_tuple %3
  %v5 = vxor.u32 %v2, 2147483648
  %6 = xla_tuple %v5
  %7 = vst [vmem:[%s1] sm:$0xf] %v5
  %s8 = scalar_lea.vmem %s0, 4
  %v9 = vld [vmem:[%s8] sm:$0xf]
  %10 = xla_tuple %v9
  %11 = xla_tuple %10
  %v12 = vxor.u32 %v9, 2147483648
  %13 = xla_tuple %v12
  %s14 = scalar_lea.vmem %s1, 4
  %15 = vst [vmem:[%s14] sm:$0xf] %v12

// kernel: model_apply.10
$region0: #{model_apply.10}
  #allocation0 [shape = 'u32[]', space=smem, size = 0x4, offset = 0x4, fixed_abs, tag = 'smem constant byte address 0x4 - core index']
  #allocation1 [shape = 'u32[144,128]{1,0:T(1,128)}', space=vmem, size = 0x12000, scoped, tag = 'internal scratch']
  %s0 = inlined_call_operand.vmem [shape: f32[64,67], index: 0, kind: input, shape index: {}]
  %s1 = inlined_call_operand.vmem [shape: f32[8,8], index: 1, kind: input, shape index: {}]
  %s2 = inlined_call_operand.vmem [shape: f32[8,128], index: 2, kind: input, shape index: {}]
  %s3 = inlined_call_operand.vmem [shape: bf16[67,64], index: 3, kind: input, shape index: {}]
  %s4 = inlined_call_operand.vmem [shape: f32[1,64], index: 4, kind: input, shape index: {}]
  %s5 = inlined_call_operand.vmem [shape: bf16[64,128], index: 5, kind: input, shape index: {}]
  %s6 = inlined_call_operand.vmem [shape: f32[1,128], index: 6, kind: input, shape index: {}]
  %s7 = inlined_call_operand.vmem [shape: f32[8,128], index: 7, kind: output, shape index: {}]
  %s8 = sld [smem:[#allocation0]]
  $region38: #{model_apply.10} parent=0
    _
  %s10 = ssub.s32 1, %s8
  %s11 = scalar_select 0, %s10, %s8
  // Predicated region
  $region2: #{model_apply.10} parent=0 // pred_check
    _
  $region3: #{model_apply.10} parent=0 // pred_check_branch
    %13 = sbr.rel (0) target = $region5
  $region4: #{model_apply.10} parent=0 // pred_region
    _
  $region5: #{model_apply.10} parent=0 // pred_fallthru
    _
  // Predicated region
  $region6: #{model_apply.10} parent=0 // pred_check
    _
  $region7: #{model_apply.10} parent=0 // pred_check_branch
    %15 = sbr.rel (0) target = $region9
  $region8: #{model_apply.10} parent=0 // pred_region
    _
  $region9: #{model_apply.10} parent=0 // pred_fallthru
    _
  // Predicated region
  $region10: #{model_apply.10} parent=0 // pred_check
    _
  $region11: #{model_apply.10} parent=0 // pred_check_branch
    %17 = sbr.rel (0) target = $region13
  $region12: #{model_apply.10} parent=0 // pred_region
    _
  $region13: #{model_apply.10} parent=0 // pred_fallthru
    _
  // Predicated region
  $region14: #{model_apply.10} parent=0 // pred_check
    _
  $region15: #{model_apply.10} parent=0 // pred_check_branch
    %19 = sbr.rel (0) target = $region17
  $region16: #{model_apply.10} parent=0 // pred_region
    _
  $region17: #{model_apply.10} parent=0 // pred_fallthru
    _
  // Predicated region
  $region18: #{model_apply.10} parent=0 // pred_check
    _
  $region19: #{model_apply.10} parent=0 // pred_check_branch
    %21 = sbr.rel (0) target = $region21
  $region20: #{model_apply.10} parent=0 // pred_region
    _
  $region21: #{model_apply.10} parent=0 // pred_fallthru
    _
  // Predicated region
  $region22: #{model_apply.10} parent=0 // pred_check
    _
  $region23: #{model_apply.10} parent=0 // pred_check_branch
    %23 = sbr.rel (0) target = $region25
  $region24: #{model_apply.10} parent=0 // pred_region
    _
  $region25: #{model_apply.10} parent=0 // pred_fallthru
    _
  // Predicated region
  $region26: #{model_apply.10} parent=0 // pred_check
    _
  $region27: #{model_apply.10} parent=0 // pred_check_branch
    %25 = sbr.rel (0) target = $region29
  $region28: #{model_apply.10} parent=0 // pred_region
    _
  $region29: #{model_apply.10} parent=0 // pred_fallthru
    _
  %v27 = vld [vmem:[%s0] sm:$0xff]
  %v28 = vld [vmem:[%s0 + $0x8] sm:$0xff]
  %v29 = vld [vmem:[%s0 + $0x10] sm:$0xff]
  %v30 = vld [vmem:[%s0 + $0x18] sm:$0xff]
  %v31 = vld [vmem:[%s0 + $0x20] sm:$0xff]
  %v32 = vld [vmem:[%s0 + $0x28] sm:$0xff]
  %v33 = vld [vmem:[%s0 + $0x30] sm:$0xff]
  %v34 = vld [vmem:[%s0 + $0x38] sm:$0xff]
  %v35 = vld [vmem:[%s3] sm:$0xf]
  %v36 = vld [vmem:[%s3 + $0x4] sm:$0xf]
  %v37 = vld [vmem:[%s3 + $0x8] sm:$0xf]
  %v38 = vld [vmem:[%s3 + $0xc] sm:$0xf]
  %v39 = vld [vmem:[%s3 + $0x10] sm:$0xf]
  %v40 = vld [vmem:[%s3 + $0x14] sm:$0xf]
  %v41 = vld [vmem:[%s3 + $0x18] sm:$0xf]
  %v42 = vld [vmem:[%s3 + $0x1c] sm:$0xf]
  %v43 = vld [vmem:[%s3 + $0x20] sm:$0x3]
  %v44 = vpack.c.bf16 %v28, %v27
  %v45 = vpack.c.bf16 %v30, %v29
  %v46 = vpack.c.bf16 %v32, %v31
  %v47 = vpack.c.bf16 %v34, %v33
  %v48 = vld [vmem:[%s4] sm:$0x1]
  %v50 = vlaneseq
  %v51 = vshrl.u32 %v50, 7
  %v52 = vsub.s32 0, %v51
  %v53 = vrot.slane %v48, %v52
  %v64 = vunpack.c.l.b16 %v35
  %v65 = vunpack.c.l.b16 %v36
  %v66 = vunpack.c.l.b16 %v37
  %v67 = vunpack.c.l.b16 %v38
  %v68 = vunpack.c.l.b16 %v39
  %v69 = vunpack.c.l.b16 %v40
  %v70 = vunpack.c.l.b16 %v41
  %v71 = vunpack.c.l.b16 %v42
  %v72 = vunpack.c.l.b16 %v43
  %v73 = vpack.c.b16 %v65, %v64
  %v74 = vpack.c.b16 %v67, %v66
  %v75 = vpack.c.b16 %v69, %v68
  %v76 = vpack.c.b16 %v71, %v70
  %v77 = vpack.c.b16 %v72, %v72
  %vm82 = vcmask 547840
  %v84 = vsel %vm82, %v44, 0
  %v87 = vsel %vm82, %v45, 0
  %v90 = vsel %vm82, %v46, 0
  %v93 = vsel %vm82, %v47, 0
  %vm95 = vcmask 1040384
  %vm96 = vcmask 1041408
  %v97 = vsel %vm95, 4294967295, 65535
  %v98 = vsel %vm96, %v97, 0
  %v100 = vand.u32 %v77, %v98
  %102 = vmatprep.subr.bf16.mxu0 0
  %103 = vmatpush1.bf16.msra.mxu0 %v73
  %104 = vmatprep.subr.bf16.mxu0 0
  %105 = vmatpush1.bf16.msra.mxu0 %v74
  %106 = vmatprep.subr.bf16.mxu0 0
  %107 = vmatpush1.bf16.msra.mxu0 %v75
  %108 = vmatprep.subr.bf16.mxu0 0
  %109 = vmatpush1.bf16.msra.mxu0 %v76
  %110 = vmatprep.subr.bf16.mxu0 0
  %111 = vmatpush1.bf16.msra.mxu0 %v100
  %112 = vmatprep.subr.bf16.mxu0 0
  %113 = vmatpush1.bf16.msra.mxu0 0
  %114 = vmatprep.subr.bf16.mxu0 0
  %115 = vmatpush1.bf16.msra.mxu0 0
  %116 = vmatprep.subr.bf16.mxu0 0
  %117 = vmatpush1.bf16.msra.mxu0 0
  %118 = vmatprep.subr.bf16.mxu0 0
  %119 = vmatpush1.bf16.msra.mxu0 0
  %120 = vmatprep.subr.bf16.mxu0 0
  %121 = vmatpush1.bf16.msra.mxu0 0
  %122 = vmatprep.subr.bf16.mxu0 0
  %123 = vmatpush1.bf16.msra.mxu0 0
  %124 = vmatprep.subr.bf16.mxu0 0
  %125 = vmatpush1.bf16.msra.mxu0 0
  %126 = vmatprep.subr.bf16.mxu0 0
  %127 = vmatpush1.bf16.msra.mxu0 0
  %128 = vmatprep.subr.bf16.mxu0 0
  %129 = vmatpush1.bf16.msra.mxu0 0
  %130 = vmatprep.subr.bf16.mxu0 0
  %131 = vmatpush1.bf16.msra.mxu0 0
  %132 = vmatprep.subr.bf16.mxu0 0
  %133 = vmatpush1.bf16.msra.mxu0 0
  %134 = vmatprep.mubr.bf16.mxu0 0
  %135 = vmatmul.mubr.bf16.gmra.mrb[0].mxu0 %v84
  %v136 = vpop.f32.mrb[0].mxu0
  %v137 = vadd.f32 %v53, %v136
  %v138 = vpop.f32.mrb[0].mxu0
  %v139 = vpop.f32.mrb[0].mxu0
  %v140 = vadd.f32 %v53, %v139
  %v141 = vpop.f32.mrb[0].mxu0
  %142 = vmatprep.mubr.bf16.mxu0 0
  %143 = vmatmul.mubr.bf16.gmra.mrb[0].mxu0 %v87
  %v144 = vpop.f32.mrb[0].mxu0
  %v145 = vadd.f32 %v53, %v144
  %v146 = vpop.f32.mrb[0].mxu0
  %v147 = vpop.f32.mrb[0].mxu0
  %v148 = vadd.f32 %v53, %v147
  %v149 = vpop.f32.mrb[0].mxu0
  %150 = vmatprep.mubr.bf16.mxu0 0
  %151 = vmatmul.mubr.bf16.gmra.mrb[0].mxu0 %v90
  %v152 = vpop.f32.mrb[0].mxu0
  %v153 = vadd.f32 %v53, %v152
  %v154 = vpop.f32.mrb[0].mxu0
  %v155 = vpop.f32.mrb[0].mxu0
  %v156 = vadd.f32 %v53, %v155
  %v157 = vpop.f32.mrb[0].mxu0
  %158 = vmatprep.mubr.bf16.mxu0 0
  %159 = vmatmul.mubr.bf16.gmra.mrb[0].mxu0 %v93
  %v160 = vpop.f32.mrb[0].mxu0
  %v161 = vadd.f32 %v53, %v160
  %v162 = vpop.f32.mrb[0].mxu0
  %v163 = vpop.f32.mrb[0].mxu0
  %v164 = vadd.f32 %v53, %v163
  %v165 = vpop.f32.mrb[0].mxu0
  %166 = vdwg.mxu0
  %v167 = vmax.f32 %v137, 0.0
  %v168 = vmax.f32 %v140, 0.0
  %v169 = vmax.f32 %v145, 0.0
  %v170 = vmax.f32 %v148, 0.0
  %v171 = vmax.f32 %v153, 0.0
  %v172 = vmax.f32 %v156, 0.0
  %v173 = vmax.f32 %v161, 0.0
  %v174 = vmax.f32 %v164, 0.0
  %v175 = vld [vmem:[%s5] sm:$0xf]
  %v176 = vld [vmem:[%s5 + $0x4] sm:$0xf]
  %v177 = vld [vmem:[%s5 + $0x8] sm:$0xf]
  %v178 = vld [vmem:[%s5 + $0xc] sm:$0xf]
  %v179 = vld [vmem:[%s5 + $0x10] sm:$0xf]
  %v180 = vld [vmem:[%s5 + $0x14] sm:$0xf]
  %v181 = vld [vmem:[%s5 + $0x18] sm:$0xf]
  %v182 = vld [vmem:[%s5 + $0x1c] sm:$0xf]
  %v183 = vpack.c.bf16 %v168, %v167
  %v184 = vpack.c.bf16 %v170, %v169
  %v185 = vpack.c.bf16 %v172, %v171
  %v186 = vpack.c.bf16 %v174, %v173
  %v187 = vld [vmem:[%s6] sm:$0x1]
  %v189 = vlaneseq
  %v190 = vshrl.u32 %v189, 7
  %v191 = vsub.s32 0, %v190
  %v192 = vrot.slane %v187, %v191
  %v202 = vunpack.c.l.b16 %v175
  %v203 = vunpack.c.l.b16 %v176
  %v204 = vunpack.c.l.b16 %v177
  %v205 = vunpack.c.l.b16 %v178
  %v206 = vunpack.c.l.b16 %v179
  %v207 = vunpack.c.l.b16 %v180
  %v208 = vunpack.c.l.b16 %v181
  %v209 = vunpack.c.l.b16 %v182
  %v210 = vpack.c.b16 %v203, %v202
  %v211 = vpack.c.b16 %v205, %v204
  %v212 = vpack.c.b16 %v207, %v206
  %v213 = vpack.c.b16 %v209, %v208
  %vm218 = vcmask 523264
  %v220 = vsel %vm218, %v183, 0
  %v223 = vsel %vm218, %v184, 0
  %v226 = vsel %vm218, %v185, 0
  %v229 = vsel %vm218, %v186, 0
  %231 = vmatprep.subr.bf16.mxu0 0
  %232 = vmatpush1.bf16.msra.mxu0 %v210
  %233 = vmatprep.subr.bf16.mxu0 0
  %234 = vmatpush1.bf16.msra.mxu0 %v211
  %235 = vmatprep.subr.bf16.mxu0 0
  %236 = vmatpush1.bf16.msra.mxu0 %v212
  %237 = vmatprep.subr.bf16.mxu0 0
  %238 = vmatpush1.bf16.msra.mxu0 %v213
  %239 = vmatprep.subr.bf16.mxu0 0
  %240 = vmatpush1.bf16.msra.mxu0 0
  %241 = vmatprep.subr.bf16.mxu0 0
  %242 = vmatpush1.bf16.msra.mxu0 0
  %243 = vmatprep.subr.bf16.mxu0 0
  %244 = vmatpush1.bf16.msra.mxu0 0
  %245 = vmatprep.subr.bf16.mxu0 0
  %246 = vmatpush1.bf16.msra.mxu0 0
  %247 = vmatprep.subr.bf16.mxu0 0
  %248 = vmatpush1.bf16.msra.mxu0 0
  %249 = vmatprep.subr.bf16.mxu0 0
  %250 = vmatpush1.bf16.msra.mxu0 0
  %251 = vmatprep.subr.bf16.mxu0 0
  %252 = vmatpush1.bf16.msra.mxu0 0
  %253 = vmatprep.subr.bf16.mxu0 0
  %254 = vmatpush1.bf16.msra.mxu0 0
  %255 = vmatprep.subr.bf16.mxu0 0
  %256 = vmatpush1.bf16.msra.mxu0 0
  %257 = vmatprep.subr.bf16.mxu0 0
  %258 = vmatpush1.bf16.msra.mxu0 0
  %259 = vmatprep.subr.bf16.mxu0 0
  %260 = vmatpush1.bf16.msra.mxu0 0
  %261 = vmatprep.subr.bf16.mxu0 0
  %262 = vmatpush1.bf16.msra.mxu0 0
  %263 = vmatprep.mubr.bf16.mxu0 0
  %264 = vmatmul.mubr.bf16.gmra.mrb[0].mxu0 %v220
  %v265 = vpop.f32.mrb[0].mxu0
  %v266 = vadd.f32 %v192, %v265
  %v267 = vpop.f32.mrb[0].mxu0
  %v268 = vpop.f32.mrb[0].mxu0
  %v269 = vadd.f32 %v192, %v268
  %v270 = vpop.f32.mrb[0].mxu0
  %271 = vmatprep.mubr.bf16.mxu0 0
  %272 = vmatmul.mubr.bf16.gmra.mrb[0].mxu0 %v223
  %v273 = vpop.f32.mrb[0].mxu0
  %v274 = vadd.f32 %v192, %v273
  %v275 = vpop.f32.mrb[0].mxu0
  %v276 = vpop.f32.mrb[0].mxu0
  %v277 = vadd.f32 %v192, %v276
  %v278 = vpop.f32.mrb[0].mxu0
  %279 = vmatprep.mubr.bf16.mxu0 0
  %280 = vmatmul.mubr.bf16.gmra.mrb[0].mxu0 %v226
  %v281 = vpop.f32.mrb[0].mxu0
  %v282 = vadd.f32 %v192, %v281
  %v283 = vpop.f32.mrb[0].mxu0
  %v284 = vpop.f32.mrb[0].mxu0
  %v285 = vadd.f32 %v192, %v284
  %v286 = vpop.f32.mrb[0].mxu0
  %287 = vmatprep.mubr.bf16.mxu0 0
  %288 = vmatmul.mubr.bf16.gmra.mrb[0].mxu0 %v229
  %v289 = vpop.f32.mrb[0].mxu0
  %v290 = vadd.f32 %v192, %v289
  %v291 = vpop.f32.mrb[0].mxu0
  %v292 = vpop.f32.mrb[0].mxu0
  %v293 = vadd.f32 %v192, %v292
  %v294 = vpop.f32.mrb[0].mxu0
  %295 = vdwg.mxu0
  %v296 = vmax.f32 %v266, 0.0
  %v297 = vmax.f32 %v269, 0.0
  %v298 = vmax.f32 %v274, 0.0
  %v299 = vmax.f32 %v277, 0.0
  %v300 = vmax.f32 %v282, 0.0
  %v301 = vmax.f32 %v285, 0.0
  %v302 = vmax.f32 %v290, 0.0
  %v303 = vmax.f32 %v293, 0.0
  %v304 = vld [vmem:[%s1] sm:$0xff]
  %v305 = vlaneseq
  %v306 = vshrl.u32 %v305, 7
  %v307 = vsub.s32 0, %v306
  %v308 = vrot.slane %v304, %v307
  %310 = vbcast.lane.b32.xlu0 %v308, 256
  %v311 = vpop.permute.xlu0 %310
  %v312 = vlaneseq
  %v313 = vshrl.u32 %v312, 7
  %v314 = vsub.s32 1, %v313
  %v315 = vrot.slane %v304, %v314
  %317 = vbcast.lane.b32.xlu0 %v315, 256
  %v318 = vpop.permute.xlu0 %317
  %v319 = vlaneseq
  %v320 = vshrl.u32 %v319, 7
  %v321 = vsub.s32 2, %v320
  %v322 = vrot.slane %v304, %v321
  %324 = vbcast.lane.b32.xlu0 %v322, 256
  %v325 = vpop.permute.xlu0 %324
  %v326 = vlaneseq
  %v327 = vshrl.u32 %v326, 7
  %v328 = vsub.s32 3, %v327
  %v329 = vrot.slane %v304, %v328
  %331 = vbcast.lane.b32.xlu0 %v329, 256
  %v332 = vpop.permute.xlu0 %331
  %v333 = vlaneseq
  %v334 = vshrl.u32 %v333, 7
  %v335 = vsub.s32 4, %v334
  %v336 = vrot.slane %v304, %v335
  %338 = vbcast.lane.b32.xlu0 %v336, 256
  %v339 = vpop.permute.xlu0 %338
  %v340 = vlaneseq
  %v341 = vshrl.u32 %v340, 7
  %v342 = vsub.s32 5, %v341
  %v343 = vrot.slane %v304, %v342
  %345 = vbcast.lane.b32.xlu0 %v343, 256
  %v346 = vpop.permute.xlu0 %345
  %v347 = vlaneseq
  %v348 = vshrl.u32 %v347, 7
  %v349 = vsub.s32 6, %v348
  %v350 = vrot.slane %v304, %v349
  %352 = vbcast.lane.b32.xlu0 %v350, 256
  %v353 = vpop.permute.xlu0 %352
  %v354 = vlaneseq
  %v355 = vshrl.u32 %v354, 7
  %v356 = vsub.s32 7, %v355
  %v357 = vrot.slane %v304, %v356
  %359 = vbcast.lane.b32.xlu0 %v357, 256
  %v360 = vpop.permute.xlu0 %359
  %v361 = vadd.f32 %v296, %v311
  %v362 = vadd.f32 %v297, %v318
  %v363 = vadd.f32 %v298, %v325
  %v364 = vadd.f32 %v299, %v332
  %v365 = vadd.f32 %v300, %v339
  %v366 = vadd.f32 %v301, %v346
  %v367 = vadd.f32 %v302, %v353
  %v368 = vadd.f32 %v303, %v360
  %v369 = vrot.slane %v361, 4
  %v370 = vmax.f32 %v361, %v369
  %v371 = vrot.slane %v370, 2
  %v372 = vmax.f32 %v370, %v371
  %v373 = vrot.slane %v372, 1
  %v374 = vmax.f32 %v372, %v373
  %v375 = vrot.slane %v362, 4
  %v376 = vmax.f32 %v362, %v375
  %v377 = vrot.slane %v376, 2
  %v378 = vmax.f32 %v376, %v377
  %v379 = vrot.slane %v378, 1
  %v380 = vmax.f32 %v378, %v379
  %v381 = vrot.slane %v363, 4
  %v382 = vmax.f32 %v363, %v381
  %v383 = vrot.slane %v382, 2
  %v384 = vmax.f32 %v382, %v383
  %v385 = vrot.slane %v384, 1
  %v386 = vmax.f32 %v384, %v385
  %v387 = vrot.slane %v364, 4
  %v388 = vmax.f32 %v364, %v387
  %v389 = vrot.slane %v388, 2
  %v390 = vmax.f32 %v388, %v389
  %v391 = vrot.slane %v390, 1
  %v392 = vmax.f32 %v390, %v391
  %v393 = vrot.slane %v365, 4
  %v394 = vmax.f32 %v365, %v393
  %v395 = vrot.slane %v394, 2
  %v396 = vmax.f32 %v394, %v395
  %v397 = vrot.slane %v396, 1
  %v398 = vmax.f32 %v396, %v397
  %v399 = vrot.slane %v366, 4
  %v400 = vmax.f32 %v366, %v399
  %v401 = vrot.slane %v400, 2
  %v402 = vmax.f32 %v400, %v401
  %v403 = vrot.slane %v402, 1
  %v404 = vmax.f32 %v402, %v403
  %v405 = vrot.slane %v367, 4
  %v406 = vmax.f32 %v367, %v405
  %v407 = vrot.slane %v406, 2
  %v408 = vmax.f32 %v406, %v407
  %v409 = vrot.slane %v408, 1
  %v410 = vmax.f32 %v408, %v409
  %v411 = vrot.slane %v368, 4
  %v412 = vmax.f32 %v368, %v411
  %v413 = vrot.slane %v412, 2
  %v414 = vmax.f32 %v412, %v413
  %v415 = vrot.slane %v414, 1
  %v416 = vmax.f32 %v414, %v415
  %vm417 = vcmask 64512
  %v418 = vsel %vm417, %v304, -inf
  %419 = vmax.xlane.f32.xlu0 %v418
  %v420 = vpop.xlane.xlu0 %419
  %vm421 = vcmp.gt.f32.partialorder %v420, -0.5
  %v422 = vsel %vm421, 1, 0
  %vm423 = vcmp.eq.s32.totalorder %v422, 1
  %vm432 = vcmask 1041409
  %v433 = vsel %vm432, %v380, %v374
  %vm434 = vcmask 1042434
  %v435 = vsel %vm434, %v386, %v433
  %vm436 = vcmask 1043459
  %v437 = vsel %vm436, %v392, %v435
  %vm438 = vcmask 1044484
  %v439 = vsel %vm438, %v398, %v437
  %vm440 = vcmask 1045509
  %v441 = vsel %vm440, %v404, %v439
  %vm442 = vcmask 1046534
  %v443 = vsel %vm442, %v410, %v441
  %vm444 = vcmask 1047559
  %v445 = vsel %vm444, %v416, %v443
  %v447 = vsel %vm423, %v445, 0.0
  %v448 = vld [vmem:[%s2] sm:$0xff]
  %v449 = vmul.f32 %v447, %v448
  %450 = vst [vmem:[%s7] sm:$0xff] %v449
  // Predicated region
  $region30: #{model_apply.10} parent=0 // pred_check
    _
  $region31: #{model_apply.10} parent=0 // pred_check_branch
    %452 = sbr.rel (0) target = $region33
  $region32: #{model_apply.10} parent=0 // pred_region
    _
  $region33: #{model_apply.10} parent=0 // pred_fallthru
    _
  // Predicated region
  $region34: #{model_apply.10} parent=0 // pred_check
    _
  $region35: #{model_apply.10} parent=0 // pred_check_branch
    %454 = sbr.rel (0) target = $region37
  $region36: #{model_apply.10} parent=0 // pred_region
    _
  $region37: #{model_apply.10} parent=0 // pred_fallthru
    _

// kernel: model_apply.11
$region0: #{model_apply.11}
  #allocation0 [shape = 'u32[]', space=smem, size = 0x4, offset = 0x4, fixed_abs, tag = 'smem constant byte address 0x4 - core index']
  #allocation1 [shape = 'u32[144,128]{1,0:T(1,128)}', space=vmem, size = 0x12000, scoped, tag = 'internal scratch']
  %s0 = inlined_call_operand.vmem [shape: f32[16,128], index: 0, kind: input, shape index: {}]
  %s1 = inlined_call_operand.vmem [shape: f32[16,64], index: 1, kind: input, shape index: {}]
  %s2 = inlined_call_operand.vmem [shape: f32[2,64], index: 2, kind: input, shape index: {}]
  %s3 = inlined_call_operand.vmem [shape: bf16[128,64], index: 3, kind: input, shape index: {}]
  %s4 = inlined_call_operand.vmem [shape: bf16[64,64], index: 4, kind: input, shape index: {}]
  %s5 = inlined_call_operand.vmem [shape: f32[1,64], index: 5, kind: input, shape index: {}]
  %s6 = inlined_call_operand.vmem [shape: f32[16,64], index: 6, kind: output, shape index: {}]
  %s7 = sld [smem:[#allocation0]]
  $region34: #{model_apply.11} parent=0
    _
  %s9 = ssub.s32 1, %s7
  %s10 = scalar_select 0, %s9, %s7
  // Predicated region
  $region2: #{model_apply.11} parent=0 // pred_check
    _
  $region3: #{model_apply.11} parent=0 // pred_check_branch
    %12 = sbr.rel (0) target = $region5
  $region4: #{model_apply.11} parent=0 // pred_region
    _
  $region5: #{model_apply.11} parent=0 // pred_fallthru
    _
  // Predicated region
  $region6: #{model_apply.11} parent=0 // pred_check
    _
  $region7: #{model_apply.11} parent=0 // pred_check_branch
    %14 = sbr.rel (0) target = $region9
  $region8: #{model_apply.11} parent=0 // pred_region
    _
  $region9: #{model_apply.11} parent=0 // pred_fallthru
    _
  // Predicated region
  $region10: #{model_apply.11} parent=0 // pred_check
    _
  $region11: #{model_apply.11} parent=0 // pred_check_branch
    %16 = sbr.rel (0) target = $region13
  $region12: #{model_apply.11} parent=0 // pred_region
    _
  $region13: #{model_apply.11} parent=0 // pred_fallthru
    _
  // Predicated region
  $region14: #{model_apply.11} parent=0 // pred_check
    _
  $region15: #{model_apply.11} parent=0 // pred_check_branch
    %18 = sbr.rel (0) target = $region17
  $region16: #{model_apply.11} parent=0 // pred_region
    _
  $region17: #{model_apply.11} parent=0 // pred_fallthru
    _
  // Predicated region
  $region18: #{model_apply.11} parent=0 // pred_check
    _
  $region19: #{model_apply.11} parent=0 // pred_check_branch
    %20 = sbr.rel (0) target = $region21
  $region20: #{model_apply.11} parent=0 // pred_region
    _
  $region21: #{model_apply.11} parent=0 // pred_fallthru
    _
  // Predicated region
  $region22: #{model_apply.11} parent=0 // pred_check
    _
  $region23: #{model_apply.11} parent=0 // pred_check_branch
    %22 = sbr.rel (0) target = $region25
  $region24: #{model_apply.11} parent=0 // pred_region
    _
  $region25: #{model_apply.11} parent=0 // pred_fallthru
    _
  %v24 = vld [vmem:[%s0] sm:$0xff]
  %v25 = vld [vmem:[%s0 + $0x8] sm:$0xff]
  %v26 = vld [vmem:[%s3] sm:$0xf]
  %v27 = vld [vmem:[%s3 + $0x4] sm:$0xf]
  %v28 = vld [vmem:[%s3 + $0x8] sm:$0xf]
  %v29 = vld [vmem:[%s3 + $0xc] sm:$0xf]
  %v30 = vld [vmem:[%s3 + $0x10] sm:$0xf]
  %v31 = vld [vmem:[%s3 + $0x14] sm:$0xf]
  %v32 = vld [vmem:[%s3 + $0x18] sm:$0xf]
  %v33 = vld [vmem:[%s3 + $0x1c] sm:$0xf]
  %v34 = vld [vmem:[%s3 + $0x20] sm:$0xf]
  %v35 = vld [vmem:[%s3 + $0x24] sm:$0xf]
  %v36 = vld [vmem:[%s3 + $0x28] sm:$0xf]
  %v37 = vld [vmem:[%s3 + $0x2c] sm:$0xf]
  %v38 = vld [vmem:[%s3 + $0x30] sm:$0xf]
  %v39 = vld [vmem:[%s3 + $0x34] sm:$0xf]
  %v40 = vld [vmem:[%s3 + $0x38] sm:$0xf]
  %v41 = vld [vmem:[%s3 + $0x3c] sm:$0xf]
  %v42 = vpack.c.bf16 %v25, %v24
  %v43 = vld [vmem:[%s1] sm:$0xff]
  %v44 = vld [vmem:[%s1 + $0x8] sm:$0xff]
  %v45 = vld [vmem:[%s4] sm:$0xf]
  %v46 = vld [vmem:[%s4 + $0x4] sm:$0xf]
  %v47 = vld [vmem:[%s4 + $0x8] sm:$0xf]
  %v48 = vld [vmem:[%s4 + $0xc] sm:$0xf]
  %v49 = vld [vmem:[%s4 + $0x10] sm:$0xf]
  %v50 = vld [vmem:[%s4 + $0x14] sm:$0xf]
  %v51 = vld [vmem:[%s4 + $0x18] sm:$0xf]
  %v52 = vld [vmem:[%s4 + $0x1c] sm:$0xf]
  %v53 = vpack.c.bf16 %v44, %v43
  %v62 = vunpack.c.l.b16 %v45
  %v63 = vunpack.c.l.b16 %v46
  %v64 = vunpack.c.l.b16 %v47
  %v65 = vunpack.c.l.b16 %v48
  %v66 = vunpack.c.l.b16 %v49
  %v67 = vunpack.c.l.b16 %v50
  %v68 = vunpack.c.l.b16 %v51
  %v69 = vunpack.c.l.b16 %v52
  %v70 = vpack.c.b16 %v63, %v62
  %v71 = vpack.c.b16 %v65, %v64
  %v72 = vpack.c.b16 %v67, %v66
  %v73 = vpack.c.b16 %v69, %v68
  %vm78 = vcmask 523264
  %v80 = vsel %vm78, %v53, 0
  %82 = vmatprep.subr.bf16.mxu0 0
  %83 = vmatpush1.bf16.msra.mxu0 %v70
  %84 = vmatprep.subr.bf16.mxu0 0
  %85 = vmatpush1.bf16.msra.mxu0 %v71
  %86 = vmatprep.subr.bf16.mxu0 0
  %87 = vmatpush1.bf16.msra.mxu0 %v72
  %88 = vmatprep.subr.bf16.mxu0 0
  %89 = vmatpush1.bf16.msra.mxu0 %v73
  %90 = vmatprep.subr.bf16.mxu0 0
  %91 = vmatpush1.bf16.msra.mxu0 0
  %92 = vmatprep.subr.bf16.mxu0 0
  %93 = vmatpush1.bf16.msra.mxu0 0
  %94 = vmatprep.subr.bf16.mxu0 0
  %95 = vmatpush1.bf16.msra.mxu0 0
  %96 = vmatprep.subr.bf16.mxu0 0
  %97 = vmatpush1.bf16.msra.mxu0 0
  %98 = vmatprep.subr.bf16.mxu0 0
  %99 = vmatpush1.bf16.msra.mxu0 0
  %100 = vmatprep.subr.bf16.mxu0 0
  %101 = vmatpush1.bf16.msra.mxu0 0
  %102 = vmatprep.subr.bf16.mxu0 0
  %103 = vmatpush1.bf16.msra.mxu0 0
  %104 = vmatprep.subr.bf16.mxu0 0
  %105 = vmatpush1.bf16.msra.mxu0 0
  %106 = vmatprep.subr.bf16.mxu0 0
  %107 = vmatpush1.bf16.msra.mxu0 0
  %108 = vmatprep.subr.bf16.mxu0 0
  %109 = vmatpush1.bf16.msra.mxu0 0
  %110 = vmatprep.subr.bf16.mxu0 0
  %111 = vmatpush1.bf16.msra.mxu0 0
  %112 = vmatprep.subr.bf16.mxu0 0
  %113 = vmatpush1.bf16.msra.mxu0 0
  %114 = vmatprep.mubr.bf16.mxu0 0
  %115 = vmatmul.mubr.bf16.gmra.mrb[0].mxu0 %v80
  %v116 = vpop.f32.mrb[0].mxu0
  %v117 = vadd.f32 0.0, %v116
  %v118 = vpop.f32.mrb[0].mxu0
  %v119 = vpop.f32.mrb[0].mxu0
  %v120 = vadd.f32 0.0, %v119
  %v121 = vpop.f32.mrb[0].mxu0
  %122 = vdwg.mxu0
  %v139 = vunpack.c.l.b16 %v26
  %v140 = vunpack.c.l.b16 %v27
  %v141 = vunpack.c.l.b16 %v28
  %v142 = vunpack.c.l.b16 %v29
  %v143 = vunpack.c.l.b16 %v30
  %v144 = vunpack.c.l.b16 %v31
  %v145 = vunpack.c.l.b16 %v32
  %v146 = vunpack.c.l.b16 %v33
  %v147 = vunpack.c.l.b16 %v34
  %v148 = vunpack.c.l.b16 %v35
  %v149 = vunpack.c.l.b16 %v36
  %v150 = vunpack.c.l.b16 %v37
  %v151 = vunpack.c.l.b16 %v38
  %v152 = vunpack.c.l.b16 %v39
  %v153 = vunpack.c.l.b16 %v40
  %v154 = vunpack.c.l.b16 %v41
  %v155 = vpack.c.b16 %v140, %v139
  %v156 = vpack.c.b16 %v142, %v141
  %v157 = vpack.c.b16 %v144, %v143
  %v158 = vpack.c.b16 %v146, %v145
  %v159 = vpack.c.b16 %v148, %v147
  %v160 = vpack.c.b16 %v150, %v149
  %v161 = vpack.c.b16 %v152, %v151
  %v162 = vpack.c.b16 %v154, %v153
  %171 = vmatprep.subr.bf16.mxu0 0
  %172 = vmatpush1.bf16.msra.mxu0 %v155
  %173 = vmatprep.subr.bf16.mxu0 0
  %174 = vmatpush1.bf16.msra.mxu0 %v156
  %175 = vmatprep.subr.bf16.mxu0 0
  %176 = vmatpush1.bf16.msra.mxu0 %v157
  %177 = vmatprep.subr.bf16.mxu0 0
  %178 = vmatpush1.bf16.msra.mxu0 %v158
  %179 = vmatprep.subr.bf16.mxu0 0
  %180 = vmatpush1.bf16.msra.mxu0 %v159
  %181 = vmatprep.subr.bf16.mxu0 0
  %182 = vmatpush1.bf16.msra.mxu0 %v160
  %183 = vmatprep.subr.bf16.mxu0 0
  %184 = vmatpush1.bf16.msra.mxu0 %v161
  %185 = vmatprep.subr.bf16.mxu0 0
  %186 = vmatpush1.bf16.msra.mxu0 %v162
  %187 = vmatprep.subr.bf16.mxu0 0
  %188 = vmatpush1.bf16.msra.mxu0 0
  %189 = vmatprep.subr.bf16.mxu0 0
  %190 = vmatpush1.bf16.msra.mxu0 0
  %191 = vmatprep.subr.bf16.mxu0 0
  %192 = vmatpush1.bf16.msra.mxu0 0
  %193 = vmatprep.subr.bf16.mxu0 0
  %194 = vmatpush1.bf16.msra.mxu0 0
  %195 = vmatprep.subr.bf16.mxu0 0
  %196 = vmatpush1.bf16.msra.mxu0 0
  %197 = vmatprep.subr.bf16.mxu0 0
  %198 = vmatpush1.bf16.msra.mxu0 0
  %199 = vmatprep.subr.bf16.mxu0 0
  %200 = vmatpush1.bf16.msra.mxu0 0
  %201 = vmatprep.subr.bf16.mxu0 0
  %202 = vmatpush1.bf16.msra.mxu0 0
  %203 = vmatprep.mubr.bf16.mxu0 0
  %204 = vmatmul.mubr.bf16.gmra.mrb[0].mxu0 %v42
  %v205 = vpop.f32.mrb[0].mxu0
  %v206 = vadd.f32 %v117, %v205
  %v207 = vpop.f32.mrb[0].mxu0
  %v208 = vpop.f32.mrb[0].mxu0
  %v209 = vadd.f32 %v120, %v208
  %v210 = vpop.f32.mrb[0].mxu0
  %211 = vdwg.mxu0
  %v212 = vld [vmem:[%s5] sm:$0x1]
  %v214 = vlaneseq
  %v215 = vshrl.u32 %v214, 7
  %v216 = vsub.s32 0, %v215
  %v217 = vrot.slane %v212, %v216
  %v219 = vadd.f32 %v206, %v217
  %v220 = vadd.f32 %v209, %v217
  %v221 = vmax.f32 %v219, 0.0
  %v222 = vmax.f32 %v220, 0.0
  %v223 = vld [vmem:[%s2] sm:$0x3]
  %v226 = vunpack.c.l.s4 1966171168
  %v227 = vunpack.c.0.s8 %v226
  %v228 = vlaneseq
  %v229 = vshrl.u32 %v228, 7
  %v230 = vsub.s32 %v227, %v229
  %v231 = vrot.slane %v223, %v230
  %v232 = vcombine.high %v231, %v231
  %v234 = vunpack.c.l.s4 1966171168
  %v235 = vunpack.c.0.s8 %v234
  %v236 = vlaneseq
  %v237 = vshrl.u32 %v236, 7
  %v238 = vsub.s32 %v235, %v237
  %v239 = vrot.slane %v231, %v238
  %v241 = vunpack.c.l.s4 1966171168
  %v242 = vunpack.c.0.s8 %v241
  %v243 = vlaneseq
  %v244 = vshrl.u32 %v243, 7
  %v245 = vsub.s32 %v242, %v244
  %v246 = vrot.slane %v232, %v245
  %v247 = vlaneseq
  %v248 = vshrl.u32 %v247, 7
  %v249 = vsub.s32 0, %v248
  %v250 = vrot.slane %v239, %v249
  %v251 = vlaneseq
  %v252 = vshrl.u32 %v251, 7
  %v253 = vsub.s32 0, %v252
  %v254 = vrot.slane %v246, %v253
  %v257 = vmul.f32 %v221, %v250
  %v258 = vmul.f32 %v222, %v254
  %259 = vst.msk [vmem:[%s6] sm:$0xff] %vm78, %v257
  %260 = vst.msk [vmem:[%s6 + $0x8] sm:$0xff] %vm78, %v258
  // Predicated region
  $region26: #{model_apply.11} parent=0 // pred_check
    _
  $region27: #{model_apply.11} parent=0 // pred_check_branch
    %262 = sbr.rel (0) target = $region29
  $region28: #{model_apply.11} parent=0 // pred_region
    _
  $region29: #{model_apply.11} parent=0 // pred_fallthru
    _
  // Predicated region
  $region30: #{model_apply.11} parent=0 // pred_check
    _
  $region31: #{model_apply.11} parent=0 // pred_check_branch
    %264 = sbr.rel (0) target = $region33
  $region32: #{model_apply.11} parent=0 // pred_region
    _
  $region33: #{model_apply.11} parent=0 // pred_fallthru
    _

// kernel: neg.10
$region0: #{neg.10}
  #allocation0 [shape = 's32[1]{0}', space=sflag, size = 0x4, scoped, tag = 'scoped memory for neg.10']
  %s0 = inlined_call_operand.vmem [shape: f32[2,16,8], index: 0, kind: input, shape index: {}]
  %s1 = inlined_call_operand.vmem [shape: f32[2,16,8], index: 1, kind: output, shape index: {}]
  %v2 = vld [vmem:[%s0] sm:$0xff]
  %3 = xla_tuple %v2
  %4 = xla_tuple %3
  %v5 = vxor.u32 %v2, 2147483648
  %6 = xla_tuple %v5
  %7 = vst [vmem:[%s1] sm:$0xff] %v5
  %s8 = scalar_lea.vmem %s0, 8
  %v9 = vld [vmem:[%s8] sm:$0xff]
  %10 = xla_tuple %v9
  %11 = xla_tuple %10
  %v12 = vxor.u32 %v9, 2147483648
  %13 = xla_tuple %v12
  %s14 = scalar_lea.vmem %s1, 8
  %15 = vst [vmem:[%s14] sm:$0xff] %v12

// kernel: model_apply.12
$region0: #{model_apply.12}
  #allocation0 [shape = 'u32[]', space=smem, size = 0x4, offset = 0x4, fixed_abs, tag = 'smem constant byte address 0x4 - core index']
  #allocation1 [shape = 'u32[144,128]{1,0:T(1,128)}', space=vmem, size = 0x12000, scoped, tag = 'internal scratch']
  %s0 = inlined_call_operand.vmem [shape: f32[16,64], index: 0, kind: input, shape index: {}]
  %s1 = inlined_call_operand.vmem [shape: f32[16,32], index: 1, kind: input, shape index: {}]
  %s2 = inlined_call_operand.vmem [shape: f32[2,32], index: 2, kind: input, shape index: {}]
  %s3 = inlined_call_operand.vmem [shape: bf16[64,32], index: 3, kind: input, shape index: {}]
  %s4 = inlined_call_operand.vmem [shape: bf16[32,32], index: 4, kind: input, shape index: {}]
  %s5 = inlined_call_operand.vmem [shape: f32[1,32], index: 5, kind: input, shape index: {}]
  %s6 = inlined_call_operand.vmem [shape: f32[16,32], index: 6, kind: output, shape index: {}]
  %s7 = sld [smem:[#allocation0]]
  $region34: #{model_apply.12} parent=0
    _
  %s9 = ssub.s32 1, %s7
  %s10 = scalar_select 0, %s9, %s7
  // Predicated region
  $region2: #{model_apply.12} parent=0 // pred_check
    _
  $region3: #{model_apply.12} parent=0 // pred_check_branch
    %12 = sbr.rel (0) target = $region5
  $region4: #{model_apply.12} parent=0 // pred_region
    _
  $region5: #{model_apply.12} parent=0 // pred_fallthru
    _
  // Predicated region
  $region6: #{model_apply.12} parent=0 // pred_check
    _
  $region7: #{model_apply.12} parent=0 // pred_check_branch
    %14 = sbr.rel (0) target = $region9
  $region8: #{model_apply.12} parent=0 // pred_region
    _
  $region9: #{model_apply.12} parent=0 // pred_fallthru
    _
  // Predicated region
  $region10: #{model_apply.12} parent=0 // pred_check
    _
  $region11: #{model_apply.12} parent=0 // pred_check_branch
    %16 = sbr.rel (0) target = $region13
  $region12: #{model_apply.12} parent=0 // pred_region
    _
  $region13: #{model_apply.12} parent=0 // pred_fallthru
    _
  // Predicated region
  $region14: #{model_apply.12} parent=0 // pred_check
    _
  $region15: #{model_apply.12} parent=0 // pred_check_branch
    %18 = sbr.rel (0) target = $region17
  $region16: #{model_apply.12} parent=0 // pred_region
    _
  $region17: #{model_apply.12} parent=0 // pred_fallthru
    _
  // Predicated region
  $region18: #{model_apply.12} parent=0 // pred_check
    _
  $region19: #{model_apply.12} parent=0 // pred_check_branch
    %20 = sbr.rel (0) target = $region21
  $region20: #{model_apply.12} parent=0 // pred_region
    _
  $region21: #{model_apply.12} parent=0 // pred_fallthru
    _
  // Predicated region
  $region22: #{model_apply.12} parent=0 // pred_check
    _
  $region23: #{model_apply.12} parent=0 // pred_check_branch
    %22 = sbr.rel (0) target = $region25
  $region24: #{model_apply.12} parent=0 // pred_region
    _
  $region25: #{model_apply.12} parent=0 // pred_fallthru
    _
  %v24 = vld [vmem:[%s0] sm:$0xff]
  %v25 = vld [vmem:[%s0 + $0x8] sm:$0xff]
  %v26 = vld [vmem:[%s3] sm:$0xf]
  %v27 = vld [vmem:[%s3 + $0x4] sm:$0xf]
  %v28 = vld [vmem:[%s3 + $0x8] sm:$0xf]
  %v29 = vld [vmem:[%s3 + $0xc] sm:$0xf]
  %v30 = vld [vmem:[%s3 + $0x10] sm:$0xf]
  %v31 = vld [vmem:[%s3 + $0x14] sm:$0xf]
  %v32 = vld [vmem:[%s3 + $0x18] sm:$0xf]
  %v33 = vld [vmem:[%s3 + $0x1c] sm:$0xf]
  %v34 = vpack.c.bf16 %v25, %v24
  %v35 = vld [vmem:[%s1] sm:$0xff]
  %v36 = vld [vmem:[%s1 + $0x8] sm:$0xff]
  %v37 = vld [vmem:[%s4] sm:$0xf]
  %v38 = vld [vmem:[%s4 + $0x4] sm:$0xf]
  %v39 = vld [vmem:[%s4 + $0x8] sm:$0xf]
  %v40 = vld [vmem:[%s4 + $0xc] sm:$0xf]
  %v41 = vpack.c.bf16 %v36, %v35
  %v46 = vunpack.c.l.b16 %v37
  %v47 = vunpack.c.l.b16 %v38
  %v48 = vunpack.c.l.b16 %v39
  %v49 = vunpack.c.l.b16 %v40
  %v50 = vpack.c.b16 %v47, %v46
  %v51 = vpack.c.b16 %v49, %v48
  %vm54 = vcmask 261120
  %v56 = vsel %vm54, %v41, 0
  %58 = vmatprep.subr.bf16.mxu0 0
  %59 = vmatpush1.bf16.msra.mxu0 %v50
  %60 = vmatprep.subr.bf16.mxu0 0
  %61 = vmatpush1.bf16.msra.mxu0 %v51
  %62 = vmatprep.subr.bf16.mxu0 0
  %63 = vmatpush1.bf16.msra.mxu0 0
  %64 = vmatprep.subr.bf16.mxu0 0
  %65 = vmatpush1.bf16.msra.mxu0 0
  %66 = vmatprep.subr.bf16.mxu0 0
  %67 = vmatpush1.bf16.msra.mxu0 0
  %68 = vmatprep.subr.bf16.mxu0 0
  %69 = vmatpush1.bf16.msra.mxu0 0
  %70 = vmatprep.subr.bf16.mxu0 0
  %71 = vmatpush1.bf16.msra.mxu0 0
  %72 = vmatprep.subr.bf16.mxu0 0
  %73 = vmatpush1.bf16.msra.mxu0 0
  %74 = vmatprep.subr.bf16.mxu0 0
  %75 = vmatpush1.bf16.msra.mxu0 0
  %76 = vmatprep.subr.bf16.mxu0 0
  %77 = vmatpush1.bf16.msra.mxu0 0
  %78 = vmatprep.subr.bf16.mxu0 0
  %79 = vmatpush1.bf16.msra.mxu0 0
  %80 = vmatprep.subr.bf16.mxu0 0
  %81 = vmatpush1.bf16.msra.mxu0 0
  %82 = vmatprep.subr.bf16.mxu0 0
  %83 = vmatpush1.bf16.msra.mxu0 0
  %84 = vmatprep.subr.bf16.mxu0 0
  %85 = vmatpush1.bf16.msra.mxu0 0
  %86 = vmatprep.subr.bf16.mxu0 0
  %87 = vmatpush1.bf16.msra.mxu0 0
  %88 = vmatprep.subr.bf16.mxu0 0
  %89 = vmatpush1.bf16.msra.mxu0 0
  %90 = vmatprep.mubr.bf16.mxu0 0
  %91 = vmatmul.mubr.bf16.gmra.mrb[0].mxu0 %v56
  %v92 = vpop.f32.mrb[0].mxu0
  %v93 = vadd.f32 0.0, %v92
  %v94 = vpop.f32.mrb[0].mxu0
  %v95 = vpop.f32.mrb[0].mxu0
  %v96 = vadd.f32 0.0, %v95
  %v97 = vpop.f32.mrb[0].mxu0
  %98 = vdwg.mxu0
  %v107 = vunpack.c.l.b16 %v26
  %v108 = vunpack.c.l.b16 %v27
  %v109 = vunpack.c.l.b16 %v28
  %v110 = vunpack.c.l.b16 %v29
  %v111 = vunpack.c.l.b16 %v30
  %v112 = vunpack.c.l.b16 %v31
  %v113 = vunpack.c.l.b16 %v32
  %v114 = vunpack.c.l.b16 %v33
  %v115 = vpack.c.b16 %v108, %v107
  %v116 = vpack.c.b16 %v110, %v109
  %v117 = vpack.c.b16 %v112, %v111
  %v118 = vpack.c.b16 %v114, %v113
  %vm123 = vcmask 523264
  %v125 = vsel %vm123, %v34, 0
  %127 = vmatprep.subr.bf16.mxu0 0
  %128 = vmatpush1.bf16.msra.mxu0 %v115
  %129 = vmatprep.subr.bf16.mxu0 0
  %130 = vmatpush1.bf16.msra.mxu0 %v116
  %131 = vmatprep.subr.bf16.mxu0 0
  %132 = vmatpush1.bf16.msra.mxu0 %v117
  %133 = vmatprep.subr.bf16.mxu0 0
  %134 = vmatpush1.bf16.msra.mxu0 %v118
  %135 = vmatprep.subr.bf16.mxu0 0
  %136 = vmatpush1.bf16.msra.mxu0 0
  %137 = vmatprep.subr.bf16.mxu0 0
  %138 = vmatpush1.bf16.msra.mxu0 0
  %139 = vmatprep.subr.bf16.mxu0 0
  %140 = vmatpush1.bf16.msra.mxu0 0
  %141 = vmatprep.subr.bf16.mxu0 0
  %142 = vmatpush1.bf16.msra.mxu0 0
  %143 = vmatprep.subr.bf16.mxu0 0
  %144 = vmatpush1.bf16.msra.mxu0 0
  %145 = vmatprep.subr.bf16.mxu0 0
  %146 = vmatpush1.bf16.msra.mxu0 0
  %147 = vmatprep.subr.bf16.mxu0 0
  %148 = vmatpush1.bf16.msra.mxu0 0
  %149 = vmatprep.subr.bf16.mxu0 0
  %150 = vmatpush1.bf16.msra.mxu0 0
  %151 = vmatprep.subr.bf16.mxu0 0
  %152 = vmatpush1.bf16.msra.mxu0 0
  %153 = vmatprep.subr.bf16.mxu0 0
  %154 = vmatpush1.bf16.msra.mxu0 0
  %155 = vmatprep.subr.bf16.mxu0 0
  %156 = vmatpush1.bf16.msra.mxu0 0
  %157 = vmatprep.subr.bf16.mxu0 0
  %158 = vmatpush1.bf16.msra.mxu0 0
  %159 = vmatprep.mubr.bf16.mxu0 0
  %160 = vmatmul.mubr.bf16.gmra.mrb[0].mxu0 %v125
  %v161 = vpop.f32.mrb[0].mxu0
  %v162 = vadd.f32 %v93, %v161
  %v163 = vpop.f32.mrb[0].mxu0
  %v164 = vpop.f32.mrb[0].mxu0
  %v165 = vadd.f32 %v96, %v164
  %v166 = vpop.f32.mrb[0].mxu0
  %167 = vdwg.mxu0
  %v168 = vld [vmem:[%s5] sm:$0x1]
  %v170 = vlaneseq
  %v171 = vshrl.u32 %v170, 7
  %v172 = vsub.s32 0, %v171
  %v173 = vrot.slane %v168, %v172
  %v175 = vadd.f32 %v162, %v173
  %v176 = vadd.f32 %v165, %v173
  %v177 = vmax.f32 %v175, 0.0
  %v178 = vmax.f32 %v176, 0.0
  %v179 = vld [vmem:[%s2] sm:$0x3]
  %v182 = vunpack.c.l.s4 1966171168
  %v183 = vunpack.c.0.s8 %v182
  %v184 = vlaneseq
  %v185 = vshrl.u32 %v184, 7
  %v186 = vsub.s32 %v183, %v185
  %v187 = vrot.slane %v179, %v186
  %v188 = vcombine.high %v187, %v187
  %v190 = vunpack.c.l.s4 1966171168
  %v191 = vunpack.c.0.s8 %v190
  %v192 = vlaneseq
  %v193 = vshrl.u32 %v192, 7
  %v194 = vsub.s32 %v191, %v193
  %v195 = vrot.slane %v187, %v194
  %v197 = vunpack.c.l.s4 1966171168
  %v198 = vunpack.c.0.s8 %v197
  %v199 = vlaneseq
  %v200 = vshrl.u32 %v199, 7
  %v201 = vsub.s32 %v198, %v200
  %v202 = vrot.slane %v188, %v201
  %v203 = vlaneseq
  %v204 = vshrl.u32 %v203, 7
  %v205 = vsub.s32 0, %v204
  %v206 = vrot.slane %v195, %v205
  %v207 = vlaneseq
  %v208 = vshrl.u32 %v207, 7
  %v209 = vsub.s32 0, %v208
  %v210 = vrot.slane %v202, %v209
  %v213 = vmul.f32 %v177, %v206
  %v214 = vmul.f32 %v178, %v210
  %215 = vst.msk [vmem:[%s6] sm:$0xff] %vm54, %v213
  %216 = vst.msk [vmem:[%s6 + $0x8] sm:$0xff] %vm54, %v214
  // Predicated region
  $region26: #{model_apply.12} parent=0 // pred_check
    _
  $region27: #{model_apply.12} parent=0 // pred_check_branch
    %218 = sbr.rel (0) target = $region29
  $region28: #{model_apply.12} parent=0 // pred_region
    _
  $region29: #{model_apply.12} parent=0 // pred_fallthru
    _
  // Predicated region
  $region30: #{model_apply.12} parent=0 // pred_check
    _
  $region31: #{model_apply.12} parent=0 // pred_check_branch
    %220 = sbr.rel (0) target = $region33
  $region32: #{model_apply.12} parent=0 // pred_region
    _
  $region33: #{model_apply.12} parent=0 // pred_fallthru
    _

// kernel: model_apply.13
$region0: #{model_apply.13}
  #allocation0 [shape = 'u32[]', space=smem, size = 0x4, offset = 0x4, fixed_abs, tag = 'smem constant byte address 0x4 - core index']
  #allocation1 [shape = 'u32[144,128]{1,0:T(1,128)}', space=vmem, size = 0x12000, scoped, tag = 'internal scratch']
  %s0 = inlined_call_operand.vmem [shape: f32[32,32], index: 0, kind: input, shape index: {}]
  %s1 = inlined_call_operand.vmem [shape: f32[2,32], index: 1, kind: input, shape index: {}]
  %s2 = inlined_call_operand.vmem [shape: bf16[32,32], index: 2, kind: input, shape index: {}]
  %s3 = inlined_call_operand.vmem [shape: f32[1,32], index: 3, kind: input, shape index: {}]
  %s4 = inlined_call_operand.vmem [shape: bf16[32,32], index: 4, kind: input, shape index: {}]
  %s5 = inlined_call_operand.vmem [shape: f32[1,32], index: 5, kind: input, shape index: {}]
  %s6 = inlined_call_operand.vmem [shape: bf16[32,32], index: 6, kind: input, shape index: {}]
  %s7 = inlined_call_operand.vmem [shape: f32[1,32], index: 7, kind: input, shape index: {}]
  %s8 = inlined_call_operand.vmem [shape: bf16[32,32], index: 8, kind: input, shape index: {}]
  %s9 = inlined_call_operand.vmem [shape: f32[1,32], index: 9, kind: input, shape index: {}]
  %s10 = inlined_call_operand.vmem [shape: bf16[32,128], index: 10, kind: input, shape index: {}]
  %s11 = inlined_call_operand.vmem [shape: f32[1,128], index: 11, kind: input, shape index: {}]
  %s12 = inlined_call_operand.vmem [shape: f32[32,128], index: 12, kind: output, shape index: {}]
  %s13 = sld [smem:[#allocation0]]
  $region58: #{model_apply.13} parent=0
    _
  %s15 = ssub.s32 1, %s13
  %s16 = scalar_select 0, %s15, %s13
  // Predicated region
  $region2: #{model_apply.13} parent=0 // pred_check
    _
  $region3: #{model_apply.13} parent=0 // pred_check_branch
    %18 = sbr.rel (0) target = $region5
  $region4: #{model_apply.13} parent=0 // pred_region
    _
  $region5: #{model_apply.13} parent=0 // pred_fallthru
    _
  // Predicated region
  $region6: #{model_apply.13} parent=0 // pred_check
    _
  $region7: #{model_apply.13} parent=0 // pred_check_branch
    %20 = sbr.rel (0) target = $region9
  $region8: #{model_apply.13} parent=0 // pred_region
    _
  $region9: #{model_apply.13} parent=0 // pred_fallthru
    _
  // Predicated region
  $region10: #{model_apply.13} parent=0 // pred_check
    _
  $region11: #{model_apply.13} parent=0 // pred_check_branch
    %22 = sbr.rel (0) target = $region13
  $region12: #{model_apply.13} parent=0 // pred_region
    _
  $region13: #{model_apply.13} parent=0 // pred_fallthru
    _
  // Predicated region
  $region14: #{model_apply.13} parent=0 // pred_check
    _
  $region15: #{model_apply.13} parent=0 // pred_check_branch
    %24 = sbr.rel (0) target = $region17
  $region16: #{model_apply.13} parent=0 // pred_region
    _
  $region17: #{model_apply.13} parent=0 // pred_fallthru
    _
  // Predicated region
  $region18: #{model_apply.13} parent=0 // pred_check
    _
  $region19: #{model_apply.13} parent=0 // pred_check_branch
    %26 = sbr.rel (0) target = $region21
  $region20: #{model_apply.13} parent=0 // pred_region
    _
  $region21: #{model_apply.13} parent=0 // pred_fallthru
    _
  // Predicated region
  $region22: #{model_apply.13} parent=0 // pred_check
    _
  $region23: #{model_apply.13} parent=0 // pred_check_branch
    %28 = sbr.rel (0) target = $region25
  $region24: #{model_apply.13} parent=0 // pred_region
    _
  $region25: #{model_apply.13} parent=0 // pred_fallthru
    _
  // Predicated region
  $region26: #{model_apply.13} parent=0 // pred_check
    _
  $region27: #{model_apply.13} parent=0 // pred_check_branch
    %30 = sbr.rel (0) target = $region29
  $region28: #{model_apply.13} parent=0 // pred_region
    _
  $region29: #{model_apply.13} parent=0 // pred_fallthru
    _
  // Predicated region
  $region30: #{model_apply.13} parent=0 // pred_check
    _
  $region31: #{model_apply.13} parent=0 // pred_check_branch
    %32 = sbr.rel (0) target = $region33
  $region32: #{model_apply.13} parent=0 // pred_region
    _
  $region33: #{model_apply.13} parent=0 // pred_fallthru
    _
  // Predicated region
  $region34: #{model_apply.13} parent=0 // pred_check
    _
  $region35: #{model_apply.13} parent=0 // pred_check_branch
    %34 = sbr.rel (0) target = $region37
  $region36: #{model_apply.13} parent=0 // pred_region
    _
  $region37: #{model_apply.13} parent=0 // pred_fallthru
    _
  // Predicated region
  $region38: #{model_apply.13} parent=0 // pred_check
    _
  $region39: #{model_apply.13} parent=0 // pred_check_branch
    %36 = sbr.rel (0) target = $region41
  $region40: #{model_apply.13} parent=0 // pred_region
    _
  $region41: #{model_apply.13} parent=0 // pred_fallthru
    _
  // Predicated region
  $region42: #{model_apply.13} parent=0 // pred_check
    _
  $region43: #{model_apply.13} parent=0 // pred_check_branch
    %38 = sbr.rel (0) target = $region45
  $region44: #{model_apply.13} parent=0 // pred_region
    _
  $region45: #{model_apply.13} parent=0 // pred_fallthru
    _
  // Predicated region
  $region46: #{model_apply.13} parent=0 // pred_check
    _
  $region47: #{model_apply.13} parent=0 // pred_check_branch
    %40 = sbr.rel (0) target = $region49
  $region48: #{model_apply.13} parent=0 // pred_region
    _
  $region49: #{model_apply.13} parent=0 // pred_fallthru
    _
  %v42 = vld [vmem:[%s0] sm:$0xff]
  %v43 = vld [vmem:[%s0 + $0x8] sm:$0xff]
  %v44 = vld [vmem:[%s0 + $0x10] sm:$0xff]
  %v45 = vld [vmem:[%s0 + $0x18] sm:$0xff]
  %v46 = vld [vmem:[%s2] sm:$0xf]
  %v47 = vld [vmem:[%s2 + $0x4] sm:$0xf]
  %v48 = vld [vmem:[%s2 + $0x8] sm:$0xf]
  %v49 = vld [vmem:[%s2 + $0xc] sm:$0xf]
  %v50 = vpack.c.bf16 %v43, %v42
  %v51 = vpack.c.bf16 %v45, %v44
  %v52 = vld [vmem:[%s3] sm:$0x1]
  %v54 = vlaneseq
  %v55 = vshrl.u32 %v54, 7
  %v56 = vsub.s32 0, %v55
  %v57 = vrot.slane %v52, %v56
  %v63 = vunpack.c.l.b16 %v46
  %v64 = vunpack.c.l.b16 %v47
  %v65 = vunpack.c.l.b16 %v48
  %v66 = vunpack.c.l.b16 %v49
  %v67 = vpack.c.b16 %v64, %v63
  %v68 = vpack.c.b16 %v66, %v65
  %vm71 = vcmask 261120
  %v73 = vsel %vm71, %v50, 0
  %v76 = vsel %vm71, %v51, 0
  %78 = vmatprep.subr.bf16.mxu0 0
  %79 = vmatpush1.bf16.msra.mxu0 %v67
  %80 = vmatprep.subr.bf16.mxu0 0
  %81 = vmatpush1.bf16.msra.mxu0 %v68
  %82 = vmatprep.subr.bf16.mxu0 0
  %83 = vmatpush1.bf16.msra.mxu0 0
  %84 = vmatprep.subr.bf16.mxu0 0
  %85 = vmatpush1.bf16.msra.mxu0 0
  %86 = vmatprep.subr.bf16.mxu0 0
  %87 = vmatpush1.bf16.msra.mxu0 0
  %88 = vmatprep.subr.bf16.mxu0 0
  %89 = vmatpush1.bf16.msra.mxu0 0
  %90 = vmatprep.subr.bf16.mxu0 0
  %91 = vmatpush1.bf16.msra.mxu0 0
  %92 = vmatprep.subr.bf16.mxu0 0
  %93 = vmatpush1.bf16.msra.mxu0 0
  %94 = vmatprep.subr.bf16.mxu0 0
  %95 = vmatpush1.bf16.msra.mxu0 0
  %96 = vmatprep.subr.bf16.mxu0 0
  %97 = vmatpush1.bf16.msra.mxu0 0
  %98 = vmatprep.subr.bf16.mxu0 0
  %99 = vmatpush1.bf16.msra.mxu0 0
  %100 = vmatprep.subr.bf16.mxu0 0
  %101 = vmatpush1.bf16.msra.mxu0 0
  %102 = vmatprep.subr.bf16.mxu0 0
  %103 = vmatpush1.bf16.msra.mxu0 0
  %104 = vmatprep.subr.bf16.mxu0 0
  %105 = vmatpush1.bf16.msra.mxu0 0
  %106 = vmatprep.subr.bf16.mxu0 0
  %107 = vmatpush1.bf16.msra.mxu0 0
  %108 = vmatprep.subr.bf16.mxu0 0
  %109 = vmatpush1.bf16.msra.mxu0 0
  %110 = vmatprep.mubr.bf16.mxu0 0
  %111 = vmatmul.mubr.bf16.gmra.mrb[0].mxu0 %v73
  %v112 = vpop.f32.mrb[0].mxu0
  %v113 = vadd.f32 %v57, %v112
  %v114 = vpop.f32.mrb[0].mxu0
  %v115 = vpop.f32.mrb[0].mxu0
  %v116 = vadd.f32 %v57, %v115
  %v117 = vpop.f32.mrb[0].mxu0
  %118 = vmatprep.mubr.bf16.mxu0 0
  %119 = vmatmul.mubr.bf16.gmra.mrb[0].mxu0 %v76
  %v120 = vpop.f32.mrb[0].mxu0
  %v121 = vadd.f32 %v57, %v120
  %v122 = vpop.f32.mrb[0].mxu0
  %v123 = vpop.f32.mrb[0].mxu0
  %v124 = vadd.f32 %v57, %v123
  %v125 = vpop.f32.mrb[0].mxu0
  %126 = vdwg.mxu0
  %v127 = vmax.f32 %v113, 0.0
  %v128 = vmax.f32 %v116, 0.0
  %v129 = vmax.f32 %v121, 0.0
  %v130 = vmax.f32 %v124, 0.0
  %v131 = vld [vmem:[%s4] sm:$0xf]
  %v132 = vld [vmem:[%s4 + $0x4] sm:$0xf]
  %v133 = vld [vmem:[%s4 + $0x8] sm:$0xf]
  %v134 = vld [vmem:[%s4 + $0xc] sm:$0xf]
  %v135 = vpack.c.bf16 %v128, %v127
  %v136 = vpack.c.bf16 %v130, %v129
  %v137 = vld [vmem:[%s5] sm:$0x1]
  %v139 = vlaneseq
  %v140 = vshrl.u32 %v139, 7
  %v141 = vsub.s32 0, %v140
  %v142 = vrot.slane %v137, %v141
  %v148 = vunpack.c.l.b16 %v131
  %v149 = vunpack.c.l.b16 %v132
  %v150 = vunpack.c.l.b16 %v133
  %v151 = vunpack.c.l.b16 %v134
  %v152 = vpack.c.b16 %v149, %v148
  %v153 = vpack.c.b16 %v151, %v150
  %v157 = vsel %vm71, %v135, 0
  %v160 = vsel %vm71, %v136, 0
  %162 = vmatprep.subr.bf16.mxu0 0
  %163 = vmatpush1.bf16.msra.mxu0 %v152
  %164 = vmatprep.subr.bf16.mxu0 0
  %165 = vmatpush1.bf16.msra.mxu0 %v153
  %166 = vmatprep.subr.bf16.mxu0 0
  %167 = vmatpush1.bf16.msra.mxu0 0
  %168 = vmatprep.subr.bf16.mxu0 0
  %169 = vmatpush1.bf16.msra.mxu0 0
  %170 = vmatprep.subr.bf16.mxu0 0
  %171 = vmatpush1.bf16.msra.mxu0 0
  %172 = vmatprep.subr.bf16.mxu0 0
  %173 = vmatpush1.bf16.msra.mxu0 0
  %174 = vmatprep.subr.bf16.mxu0 0
  %175 = vmatpush1.bf16.msra.mxu0 0
  %176 = vmatprep.subr.bf16.mxu0 0
  %177 = vmatpush1.bf16.msra.mxu0 0
  %178 = vmatprep.subr.bf16.mxu0 0
  %179 = vmatpush1.bf16.msra.mxu0 0
  %180 = vmatprep.subr.bf16.mxu0 0
  %181 = vmatpush1.bf16.msra.mxu0 0
  %182 = vmatprep.subr.bf16.mxu0 0
  %183 = vmatpush1.bf16.msra.mxu0 0
  %184 = vmatprep.subr.bf16.mxu0 0
  %185 = vmatpush1.bf16.msra.mxu0 0
  %186 = vmatprep.subr.bf16.mxu0 0
  %187 = vmatpush1.bf16.msra.mxu0 0
  %188 = vmatprep.subr.bf16.mxu0 0
  %189 = vmatpush1.bf16.msra.mxu0 0
  %190 = vmatprep.subr.bf16.mxu0 0
  %191 = vmatpush1.bf16.msra.mxu0 0
  %192 = vmatprep.subr.bf16.mxu0 0
  %193 = vmatpush1.bf16.msra.mxu0 0
  %194 = vmatprep.mubr.bf16.mxu0 0
  %195 = vmatmul.mubr.bf16.gmra.mrb[0].mxu0 %v157
  %v196 = vpop.f32.mrb[0].mxu0
  %v197 = vadd.f32 %v142, %v196
  %v198 = vpop.f32.mrb[0].mxu0
  %v199 = vpop.f32.mrb[0].mxu0
  %v200 = vadd.f32 %v142, %v199
  %v201 = vpop.f32.mrb[0].mxu0
  %202 = vmatprep.mubr.bf16.mxu0 0
  %203 = vmatmul.mubr.bf16.gmra.mrb[0].mxu0 %v160
  %v204 = vpop.f32.mrb[0].mxu0
  %v205 = vadd.f32 %v142, %v204
  %v206 = vpop.f32.mrb[0].mxu0
  %v207 = vpop.f32.mrb[0].mxu0
  %v208 = vadd.f32 %v142, %v207
  %v209 = vpop.f32.mrb[0].mxu0
  %210 = vdwg.mxu0
  %v211 = vmax.f32 %v197, 0.0
  %v212 = vmax.f32 %v200, 0.0
  %v213 = vmax.f32 %v205, 0.0
  %v214 = vmax.f32 %v208, 0.0
  %v215 = vld [vmem:[%s1] sm:$0x3]
  %v218 = vunpack.c.l.s4 1966171168
  %v219 = vunpack.c.0.s8 %v218
  %v220 = vlaneseq
  %v221 = vshrl.u32 %v220, 7
  %v222 = vsub.s32 %v219, %v221
  %v223 = vrot.slane %v215, %v222
  %v224 = vcombine.high %v223, %v223
  %v226 = vunpack.c.l.s4 1966171168
  %v227 = vunpack.c.0.s8 %v226
  %v228 = vlaneseq
  %v229 = vshrl.u32 %v228, 7
  %v230 = vsub.s32 %v227, %v229
  %v231 = vrot.slane %v223, %v230
  %v233 = vunpack.c.l.s4 1966171168
  %v234 = vunpack.c.0.s8 %v233
  %v235 = vlaneseq
  %v236 = vshrl.u32 %v235, 7
  %v237 = vsub.s32 %v234, %v236
  %v238 = vrot.slane %v224, %v237
  %v239 = vlaneseq
  %v240 = vshrl.u32 %v239, 7
  %v241 = vsub.s32 0, %v240
  %v242 = vrot.slane %v231, %v241
  %v243 = vlaneseq
  %v244 = vshrl.u32 %v243, 7
  %v245 = vsub.s32 0, %v244
  %v246 = vrot.slane %v238, %v245
  %v249 = vmul.f32 %v211, %v242
  %v250 = vmul.f32 %v212, %v242
  %v251 = vmul.f32 %v213, %v246
  %v252 = vmul.f32 %v214, %v246
  %v253 = vld [vmem:[%s6] sm:$0xf]
  %v254 = vld [vmem:[%s6 + $0x4] sm:$0xf]
  %v255 = vld [vmem:[%s6 + $0x8] sm:$0xf]
  %v256 = vld [vmem:[%s6 + $0xc] sm:$0xf]
  %v257 = vpack.c.bf16 %v250, %v249
  %v258 = vpack.c.bf16 %v252, %v251
  %v259 = vld [vmem:[%s7] sm:$0x1]
  %v261 = vlaneseq
  %v262 = vshrl.u32 %v261, 7
  %v263 = vsub.s32 0, %v262
  %v264 = vrot.slane %v259, %v263
  %v270 = vunpack.c.l.b16 %v253
  %v271 = vunpack.c.l.b16 %v254
  %v272 = vunpack.c.l.b16 %v255
  %v273 = vunpack.c.l.b16 %v256
  %v274 = vpack.c.b16 %v271, %v270
  %v275 = vpack.c.b16 %v273, %v272
  %v279 = vsel %vm71, %v257, 0
  %v282 = vsel %vm71, %v258, 0
  %284 = vmatprep.subr.bf16.mxu0 0
  %285 = vmatpush1.bf16.msra.mxu0 %v274
  %286 = vmatprep.subr.bf16.mxu0 0
  %287 = vmatpush1.bf16.msra.mxu0 %v275
  %288 = vmatprep.subr.bf16.mxu0 0
  %289 = vmatpush1.bf16.msra.mxu0 0
  %290 = vmatprep.subr.bf16.mxu0 0
  %291 = vmatpush1.bf16.msra.mxu0 0
  %292 = vmatprep.subr.bf16.mxu0 0
  %293 = vmatpush1.bf16.msra.mxu0 0
  %294 = vmatprep.subr.bf16.mxu0 0
  %295 = vmatpush1.bf16.msra.mxu0 0
  %296 = vmatprep.subr.bf16.mxu0 0
  %297 = vmatpush1.bf16.msra.mxu0 0
  %298 = vmatprep.subr.bf16.mxu0 0
  %299 = vmatpush1.bf16.msra.mxu0 0
  %300 = vmatprep.subr.bf16.mxu0 0
  %301 = vmatpush1.bf16.msra.mxu0 0
  %302 = vmatprep.subr.bf16.mxu0 0
  %303 = vmatpush1.bf16.msra.mxu0 0
  %304 = vmatprep.subr.bf16.mxu0 0
  %305 = vmatpush1.bf16.msra.mxu0 0
  %306 = vmatprep.subr.bf16.mxu0 0
  %307 = vmatpush1.bf16.msra.mxu0 0
  %308 = vmatprep.subr.bf16.mxu0 0
  %309 = vmatpush1.bf16.msra.mxu0 0
  %310 = vmatprep.subr.bf16.mxu0 0
  %311 = vmatpush1.bf16.msra.mxu0 0
  %312 = vmatprep.subr.bf16.mxu0 0
  %313 = vmatpush1.bf16.msra.mxu0 0
  %314 = vmatprep.subr.bf16.mxu0 0
  %315 = vmatpush1.bf16.msra.mxu0 0
  %316 = vmatprep.mubr.bf16.mxu0 0
  %317 = vmatmul.mubr.bf16.gmra.mrb[0].mxu0 %v279
  %v318 = vpop.f32.mrb[0].mxu0
  %v319 = vadd.f32 %v264, %v318
  %v320 = vpop.f32.mrb[0].mxu0
  %v321 = vpop.f32.mrb[0].mxu0
  %v322 = vadd.f32 %v264, %v321
  %v323 = vpop.f32.mrb[0].mxu0
  %324 = vmatprep.mubr.bf16.mxu0 0
  %325 = vmatmul.mubr.bf16.gmra.mrb[0].mxu0 %v282
  %v326 = vpop.f32.mrb[0].mxu0
  %v327 = vadd.f32 %v264, %v326
  %v328 = vpop.f32.mrb[0].mxu0
  %v329 = vpop.f32.mrb[0].mxu0
  %v330 = vadd.f32 %v264, %v329
  %v331 = vpop.f32.mrb[0].mxu0
  %332 = vdwg.mxu0
  %vm333 = vcmp.ge.f32.partialorder %v319, 0.0
  %vm334 = vcmp.ge.f32.partialorder %v322, 0.0
  %vm335 = vcmp.ge.f32.partialorder %v327, 0.0
  %vm336 = vcmp.ge.f32.partialorder %v330, 0.0
  %v337 = vmul.f32 %v319, 0.01
  %v338 = vmul.f32 %v322, 0.01
  %v339 = vmul.f32 %v327, 0.01
  %v340 = vmul.f32 %v330, 0.01
  %v341 = vsel %vm333, %v319, %v337
  %v342 = vsel %vm334, %v322, %v338
  %v343 = vsel %vm335, %v327, %v339
  %v344 = vsel %vm336, %v330, %v340
  %v345 = vld [vmem:[%s8] sm:$0xf]
  %v346 = vld [vmem:[%s8 + $0x4] sm:$0xf]
  %v347 = vld [vmem:[%s8 + $0x8] sm:$0xf]
  %v348 = vld [vmem:[%s8 + $0xc] sm:$0xf]
  %v349 = vpack.c.bf16 %v342, %v341
  %v350 = vpack.c.bf16 %v344, %v343
  %v351 = vld [vmem:[%s9] sm:$0x1]
  %v353 = vlaneseq
  %v354 = vshrl.u32 %v353, 7
  %v355 = vsub.s32 0, %v354
  %v356 = vrot.slane %v351, %v355
  %v362 = vunpack.c.l.b16 %v345
  %v363 = vunpack.c.l.b16 %v346
  %v364 = vunpack.c.l.b16 %v347
  %v365 = vunpack.c.l.b16 %v348
  %v366 = vpack.c.b16 %v363, %v362
  %v367 = vpack.c.b16 %v365, %v364
  %v371 = vsel %vm71, %v349, 0
  %v374 = vsel %vm71, %v350, 0
  %376 = vmatprep.subr.bf16.mxu0 0
  %377 = vmatpush1.bf16.msra.mxu0 %v366
  %378 = vmatprep.subr.bf16.mxu0 0
  %379 = vmatpush1.bf16.msra.mxu0 %v367
  %380 = vmatprep.subr.bf16.mxu0 0
  %381 = vmatpush1.bf16.msra.mxu0 0
  %382 = vmatprep.subr.bf16.mxu0 0
  %383 = vmatpush1.bf16.msra.mxu0 0
  %384 = vmatprep.subr.bf16.mxu0 0
  %385 = vmatpush1.bf16.msra.mxu0 0
  %386 = vmatprep.subr.bf16.mxu0 0
  %387 = vmatpush1.bf16.msra.mxu0 0
  %388 = vmatprep.subr.bf16.mxu0 0
  %389 = vmatpush1.bf16.msra.mxu0 0
  %390 = vmatprep.subr.bf16.mxu0 0
  %391 = vmatpush1.bf16.msra.mxu0 0
  %392 = vmatprep.subr.bf16.mxu0 0
  %393 = vmatpush1.bf16.msra.mxu0 0
  %394 = vmatprep.subr.bf16.mxu0 0
  %395 = vmatpush1.bf16.msra.mxu0 0
  %396 = vmatprep.subr.bf16.mxu0 0
  %397 = vmatpush1.bf16.msra.mxu0 0
  %398 = vmatprep.subr.bf16.mxu0 0
  %399 = vmatpush1.bf16.msra.mxu0 0
  %400 = vmatprep.subr.bf16.mxu0 0
  %401 = vmatpush1.bf16.msra.mxu0 0
  %402 = vmatprep.subr.bf16.mxu0 0
  %403 = vmatpush1.bf16.msra.mxu0 0
  %404 = vmatprep.subr.bf16.mxu0 0
  %405 = vmatpush1.bf16.msra.mxu0 0
  %406 = vmatprep.subr.bf16.mxu0 0
  %407 = vmatpush1.bf16.msra.mxu0 0
  %408 = vmatprep.mubr.bf16.mxu0 0
  %409 = vmatmul.mubr.bf16.gmra.mrb[0].mxu0 %v371
  %v410 = vpop.f32.mrb[0].mxu0
  %v411 = vadd.f32 %v356, %v410
  %v412 = vpop.f32.mrb[0].mxu0
  %v413 = vpop.f32.mrb[0].mxu0
  %v414 = vadd.f32 %v356, %v413
  %v415 = vpop.f32.mrb[0].mxu0
  %416 = vmatprep.mubr.bf16.mxu0 0
  %417 = vmatmul.mubr.bf16.gmra.mrb[0].mxu0 %v374
  %v418 = vpop.f32.mrb[0].mxu0
  %v419 = vadd.f32 %v356, %v418
  %v420 = vpop.f32.mrb[0].mxu0
  %v421 = vpop.f32.mrb[0].mxu0
  %v422 = vadd.f32 %v356, %v421
  %v423 = vpop.f32.mrb[0].mxu0
  %424 = vdwg.mxu0
  %vm425 = vcmp.ge.f32.partialorder %v411, 0.0
  %vm426 = vcmp.ge.f32.partialorder %v414, 0.0
  %vm427 = vcmp.ge.f32.partialorder %v419, 0.0
  %vm428 = vcmp.ge.f32.partialorder %v422, 0.0
  %v429 = vmul.f32 %v411, 0.01
  %v430 = vmul.f32 %v414, 0.01
  %v431 = vmul.f32 %v419, 0.01
  %v432 = vmul.f32 %v422, 0.01
  %v433 = vsel %vm425, %v411, %v429
  %v434 = vsel %vm426, %v414, %v430
  %v435 = vsel %vm427, %v419, %v431
  %v436 = vsel %vm428, %v422, %v432
  %v437 = vld [vmem:[%s10] sm:$0xf]
  %v438 = vld [vmem:[%s10 + $0x4] sm:$0xf]
  %v439 = vld [vmem:[%s10 + $0x8] sm:$0xf]
  %v440 = vld [vmem:[%s10 + $0xc] sm:$0xf]
  %v441 = vpack.c.bf16 %v434, %v433
  %v442 = vpack.c.bf16 %v436, %v435
  %v443 = vld [vmem:[%s11] sm:$0x1]
  %v445 = vlaneseq
  %v446 = vshrl.u32 %v445, 7
  %v447 = vsub.s32 0, %v446
  %v448 = vrot.slane %v443, %v447
  %v454 = vunpack.c.l.b16 %v437
  %v455 = vunpack.c.l.b16 %v438
  %v456 = vunpack.c.l.b16 %v439
  %v457 = vunpack.c.l.b16 %v440
  %v458 = vpack.c.b16 %v455, %v454
  %v459 = vpack.c.b16 %v457, %v456
  %v463 = vsel %vm71, %v441, 0
  %v466 = vsel %vm71, %v442, 0
  %468 = vmatprep.subr.bf16.mxu0 0
  %469 = vmatpush1.bf16.msra.mxu0 %v458
  %470 = vmatprep.subr.bf16.mxu0 0
  %471 = vmatpush1.bf16.msra.mxu0 %v459
  %472 = vmatprep.subr.bf16.mxu0 0
  %473 = vmatpush1.bf16.msra.mxu0 0
  %474 = vmatprep.subr.bf16.mxu0 0
  %475 = vmatpush1.bf16.msra.mxu0 0
  %476 = vmatprep.subr.bf16.mxu0 0
  %477 = vmatpush1.bf16.msra.mxu0 0
  %478 = vmatprep.subr.bf16.mxu0 0
  %479 = vmatpush1.bf16.msra.mxu0 0
  %480 = vmatprep.subr.bf16.mxu0 0
  %481 = vmatpush1.bf16.msra.mxu0 0
  %482 = vmatprep.subr.bf16.mxu0 0
  %483 = vmatpush1.bf16.msra.mxu0 0
  %484 = vmatprep.subr.bf16.mxu0 0
  %485 = vmatpush1.bf16.msra.mxu0 0
  %486 = vmatprep.subr.bf16.mxu0 0
  %487 = vmatpush1.bf16.msra.mxu0 0
  %488 = vmatprep.subr.bf16.mxu0 0
  %489 = vmatpush1.bf16.msra.mxu0 0
  %490 = vmatprep.subr.bf16.mxu0 0
  %491 = vmatpush1.bf16.msra.mxu0 0
  %492 = vmatprep.subr.bf16.mxu0 0
  %493 = vmatpush1.bf16.msra.mxu0 0
  %494 = vmatprep.subr.bf16.mxu0 0
  %495 = vmatpush1.bf16.msra.mxu0 0
  %496 = vmatprep.subr.bf16.mxu0 0
  %497 = vmatpush1.bf16.msra.mxu0 0
  %498 = vmatprep.subr.bf16.mxu0 0
  %499 = vmatpush1.bf16.msra.mxu0 0
  %500 = vmatprep.mubr.bf16.mxu0 0
  %501 = vmatmul.mubr.bf16.gmra.mrb[0].mxu0 %v463
  %v502 = vpop.f32.mrb[0].mxu0
  %v503 = vadd.f32 %v448, %v502
  %v504 = vpop.f32.mrb[0].mxu0
  %v505 = vpop.f32.mrb[0].mxu0
  %v506 = vadd.f32 %v448, %v505
  %v507 = vpop.f32.mrb[0].mxu0
  %508 = vmatprep.mubr.bf16.mxu0 0
  %509 = vmatmul.mubr.bf16.gmra.mrb[0].mxu0 %v466
  %v510 = vpop.f32.mrb[0].mxu0
  %v511 = vadd.f32 %v448, %v510
  %v512 = vpop.f32.mrb[0].mxu0
  %v513 = vpop.f32.mrb[0].mxu0
  %v514 = vadd.f32 %v448, %v513
  %v515 = vpop.f32.mrb[0].mxu0
  %516 = vdwg.mxu0
  %517 = vst [vmem:[%s12] sm:$0xff] %v503
  %518 = vst [vmem:[%s12 + $0x8] sm:$0xff] %v506
  %519 = vst [vmem:[%s12 + $0x10] sm:$0xff] %v511
  %520 = vst [vmem:[%s12 + $0x18] sm:$0xff] %v514
  // Predicated region
  $region50: #{model_apply.13} parent=0 // pred_check
    _
  $region51: #{model_apply.13} parent=0 // pred_check_branch
    %522 = sbr.rel (0) target = $region53
  $region52: #{model_apply.13} parent=0 // pred_region
    _
  $region53: #{model_apply.13} parent=0 // pred_fallthru
    _
  // Predicated region
  $region54: #{model_apply.13} parent=0 // pred_check
    _
  $region55: #{model_apply.13} parent=0 // pred_check_branch
    %524 = sbr.rel (0) target = $region57
  $region56: #{model_apply.13} parent=0 // pred_region
    _
  $region57: #{model_apply.13} parent=0 // pred_fallthru
    _

</llo_original>
